<compile_context>
chip_gen: v7x
topology: tpu7x:2x2x1
jax: 0.10.0
libtpu: 0.0.40
codegen_flags: <defaults>
</compile_context>

<pallas_src>
import functools

import numpy as np
import jax
import jax.numpy as jnp
from jax import lax
from jax.experimental import pallas as pl
from jax.experimental.pallas import tpu as pltpu

# ----------------------------- configuration --------------------------------
IN_CHANNELS = 4          # 3 image channels + 1 mask channel (torch.cat([x, mask]))
WIDTH = 8                # opt.width
C_PAD = 8                # padded channel count for input / final output lanes
ENC_BLK_NUMS = [1, 1]    # opt.enc_blk_nums
MIDDLE_BLK_NUM = 1       # opt.middle_blk_num
DEC_BLK_NUMS = [1, 1]    # opt.dec_blk_nums
N, H, W = 2, 16, 16      # batch / spatial size of the example


# ----------------------------- fused Pallas kernel ---------------------------
def _fused_kernel(inp_ref, mrep_ref, r3_ref, b3_ref, rd_ref, bd_ref, ru_ref,
                  f_out_ref, o_out_ref, *, nb, h0, enc_nums, mid_num, dec_nums):
    """Whole GeneratorSeparate3 forward for `nb` batch elements folded into rows.

    Activation layout: (nb * H_l, W_l * C_l) f32 with W_l*C_l == 128 at every level.
    """
    f32 = jnp.float32
    n_levels = len(enc_nums) + 1

    def dot(a, b):
        return jnp.dot(a, b, preferred_element_type=f32)

    def vshift_stack(act, hl):
        # (R, L) -> (R, 3L): lanes = [row h-1 | row h | row h+1], zero rows at
        # per-image boundaries (hl is a power of two, images are contiguous).
        r, l = act.shape
        rows = lax.broadcasted_iota(jnp.int32, (r, l), 0)
        zero = jnp.zeros((1, l), f32)
        up = jnp.concatenate([zero, act[:-1, :]], axis=0)          # act[row-1]
        up = jnp.where((rows & (hl - 1)) == 0, 0.0, up)
        dn = jnp.concatenate([act[1:, :], zero], axis=0)           # act[row+1]
        dn = jnp.where((rows & (hl - 1)) == hl - 1, 0.0, dn)
        return jnp.concatenate([up, act, dn], axis=-1)

    conv_idx = [0]

    def conv3x3(act, hl, relu=False, residual=None):
        i = conv_idx[0]
        conv_idx[0] += 1
        out = dot(vshift_stack(act, hl), r3_ref[i]) + b3_ref[i]    # one K=3*128 dot
        if relu:
            out = jnp.maximum(out, 0.0)
        if residual is not None:
            out = out + residual
        return out

    def conv_block(act, hl):
        # TODO(synk): ConvBlock is not defined in the provided source; assumed
        #             Conv3x3 -> ReLU -> Conv3x3 + residual.
        return conv3x3(conv3x3(act, hl, relu=True), hl, residual=act)

    def row_select(act, rn, ky):
        # rows 2*o + ky of act (valid globally because images are contiguous
        # blocks of an even number of rows).  Selection matrix built from iotas.
        rl = act.shape[0]
        o_i = lax.broadcasted_iota(jnp.int32, (rn, rl), 0)
        r_i = lax.broadcasted_iota(jnp.int32, (rn, rl), 1)
        return dot((r_i == 2 * o_i + ky).astype(f32), act)

    def row_interleave(t0, t1):
        # out[2*i + ry] = t_ry[i]
        rin = t0.shape[0]
        ro_i = lax.broadcasted_iota(jnp.int32, (2 * rin, rin), 0)
        ri_i = lax.broadcasted_iota(jnp.int32, (2 * rin, rin), 1)
        out = dot((ro_i == 2 * ri_i).astype(f32), t0)
        return out + dot((ro_i == 2 * ri_i + 1).astype(f32), t1)

    x_in = inp_ref[...].astype(f32)       # (nb*H, 128): [x0,x1,x2,mask,0,0,0,0]/pixel
    m_rep = mrep_ref[...].astype(f32)     # (nb*H, 128): mask broadcast per channel

    # ---- intro conv (mask packed as an input channel; pad channels have 0 weight) ----
    act = conv3x3(x_in, h0)

    # ---- encoder ----
    encs = []
    for lvl, num in enumerate(enc_nums):
        hl = h0 >> lvl
        for _ in range(num):
            act = conv_block(act, hl)
        encs.append(act)
        rn = nb * (hl >> 1)
        stacked = jnp.concatenate([row_select(act, rn, 0),
                                   row_select(act, rn, 1)], axis=-1)   # (rn, 256)
        act = dot(stacked, rd_ref[lvl]) + bd_ref[lvl]                  # 2x2/s2 conv

    # ---- middle ----
    for _ in range(mid_num):
        act = conv_block(act, h0 >> (n_levels - 1))

    # ---- decoder: 1x1 up-conv + PixelShuffle + skip-add ----
    f = act
    for i, num in enumerate(dec_nums):
        lvl = n_levels - 2 - i
        hl = h0 >> lvl
        t_all = dot(f, ru_ref[i])                                      # (Ri, 256)
        half = t_all.shape[1] // 2
        f = encs[len(encs) - 1 - i] + row_interleave(t_all[:, :half], t_all[:, half:])
        for _ in range(num):
            f = conv_block(f, hl)

    # ---- end conv (cout padded 3 -> 8 with zero weights: lanes stay dense) ----
    f_a = conv3x3(f, h0)

    # ---- mask blend: out = m*f + (1-m)*x (pad lanes are garbage; sliced off) ----
    o_a = m_rep * f_a + (1.0 - m_rep) * x_in

    f_out_ref[...] = f_a.astype(f_out_ref.dtype)
    o_out_ref[...] = o_a.astype(o_out_ref.dtype)


# ----------------------------- weight folding (host/XLA side) ----------------
def _eye_shift(n, k):
    return np.eye(n, n, k=k, dtype=np.float32)


def _pack_weights(params):
    """Fold every conv into lane-dense matmul operands and pack into 5 slabs."""
    n_levels = len(ENC_BLK_NUMS) + 1
    dims = []
    ww, cc = W, WIDTH
    for _ in range(n_levels):
        dims.append((ww, cc))
        ww, cc = ww // 2, cc * 2

    r3_list, b3_list = [], []

    def add_conv3(w_hwio, b, wl):
        # (3,3,cin,cout) -> (3*wl*cin, wl*cout): kx taps + channel mix folded,
        # ky taps stacked along K (matches [up|act|dn] lane stacking in-kernel).
        blocks = []
        for ky in range(3):
            r = None
            for kx in range(3):
                s = _eye_shift(wl, 1 - kx)            # s[w, w'] = [w == w' + kx - 1]
                term = jnp.kron(jnp.asarray(s), w_hwio[ky, kx])
                r = term if r is None else r + term
            blocks.append(r)
        r3_list.append(jnp.concatenate(blocks, axis=0))
        b3_list.append(jnp.tile(b, wl).reshape(1, -1))

    def add_block(p, wl):
        add_conv3(p['w1'], p['b1'], wl)
        add_conv3(p['w2'], p['b2'], wl)

    # intro: pad input channels IN_CHANNELS -> C_PAD (zero weights for pad channels)
    wi = params['intro']['w']
    wi_pad = jnp.zeros((3, 3, C_PAD, WIDTH), jnp.float32).at[:, :, :IN_CHANNELS, :].set(wi)
    add_conv3(wi_pad, params['intro']['b'], dims[0][0])

    rd_list, bd_list = [], []
    for i, num in enumerate(ENC_BLK_NUMS):
        wl, cl = dims[i]
        wn, cn = dims[i + 1]
        for j in range(num):
            add_block(params[f'enc_{i}_{j}'], wl)
        wd = params[f'enc_down_{i}']['w']             # (2,2,cl,2cl)
        blocks = []
        for ky in range(2):
            r = None
            for kx in range(2):
                s = np.zeros((wl, wn), np.float32)
                s[2 * np.arange(wn) + kx, np.arange(wn)] = 1.0   # s[w, j] = [w == 2j+kx]
                term = jnp.kron(jnp.asarray(s), wd[ky, kx])
                r = term if r is None else r + term
            blocks.append(r)
        rd_list.append(jnp.concatenate(blocks, axis=0))          # (2*wl*cl, wn*cn)
        bd_list.append(jnp.tile(params[f'enc_down_{i}']['b'], wn).reshape(1, -1))

    for i in range(MIDDLE_BLK_NUM):
        add_block(params[f'mid_{i}'], dims[-1][0])

    ru_list = []
    for i, num in enumerate(DEC_BLK_NUMS):
        lvl_in = n_levels - 1 - i
        lvl_out = lvl_in - 1
        wi_, ci_ = dims[lvl_in]
        wo_, co_ = dims[lvl_out]
        wu = params[f'dec_up_{i}']['w'].reshape(ci_, 2 * ci_)    # (ci, co*4+ry*2+rx)
        w4 = wu.reshape(ci_, ci_ // 2, 2, 2)                     # (ci, co, ry, rx)
        blocks = []
        for ry in range(2):
            r = None
            for rx in range(2):
                s = np.zeros((wi_, wo_), np.float32)
                s[np.arange(wi_), 2 * np.arange(wi_) + rx] = 1.0  # s[j, jo] = [jo == 2j+rx]
                term = jnp.kron(jnp.asarray(s), w4[:, :, ry, rx])
                r = term if r is None else r + term
            blocks.append(r)
        ru_list.append(jnp.concatenate(blocks, axis=1))          # (wi*ci, 2*wo*co)
        for j in range(num):
            add_block(params[f'dec_{i}_{j}'], wo_)

    # end conv: pad cout 3 -> C_PAD so the output slab is 128 lanes wide
    we = params['end']['w']
    we_pad = jnp.zeros((3, 3, WIDTH, C_PAD), jnp.float32).at[:, :, :, :3].set(we)
    be_pad = jnp.zeros((C_PAD,), jnp.float32).at[:3].set(params['end']['b'])
    add_conv3(we_pad, be_pad, dims[0][0])

    return (jnp.stack(r3_list), jnp.stack(b3_list),
            jnp.stack(rd_list), jnp.stack(bd_list), jnp.stack(ru_list))


def forward_pallas(params, x, mask, batch_tiles=1):
    n, h, w, _ = x.shape
    assert h == H and w == W and w * WIDTH == 128 and w * C_PAD == 128
    assert (h & (h - 1)) == 0 and n % batch_tiles == 0
    nb = n // batch_tiles                 # batch elements folded per grid step
    lane = w * C_PAD

    r3, b3, rd, bd, ru = _pack_weights(params)

    # Lane-dense kernel inputs: x|mask|zeros packed per pixel, mask broadcast/channel.
    pad = jnp.zeros((n, h, w, C_PAD - IN_CHANNELS), x.dtype)
    inp_a = jnp.concatenate([x, mask, pad], axis=-1).reshape(n * h, lane)
    m_rep = jnp.broadcast_to(mask, (n, h, w, C_PAD)).reshape(n * h, lane)

    kernel = functools.partial(
        _fused_kernel,
        nb=nb, h0=h,
        enc_nums=tuple(ENC_BLK_NUMS),
        mid_num=MIDDLE_BLK_NUM,
        dec_nums=tuple(DEC_BLK_NUMS),
    )

    act_spec = pl.BlockSpec((nb * h, lane), lambda i: (i, 0))
    w_specs = [pl.BlockSpec(a.shape, lambda i, _nd=a.ndim: (0,) * _nd)
               for a in (r3, b3, rd, bd, ru)]

    f_flat, o_flat = pl.pallas_call(
        kernel,
        out_shape=(jax.ShapeDtypeStruct((n * h, lane), x.dtype),
                   jax.ShapeDtypeStruct((n * h, lane), x.dtype)),
        grid=(batch_tiles,),
        in_specs=[act_spec, act_spec] + w_specs,
        out_specs=(act_spec, act_spec),
        compiler_params=pltpu.CompilerParams(
            dimension_semantics=("parallel",),
            vmem_limit_bytes=32 * 1024 * 1024),
    )(inp_a, m_rep, r3, b3, rd, bd, ru)

    f = f_flat.reshape(n, h, w, C_PAD)[..., :3]
    output = o_flat.reshape(n, h, w, C_PAD)[..., :3]
    return f, x, output


# ----------------------------- pure-JAX reference -----------------------------
def _ref_conv(x, wgt, stride, pad):
    return lax.conv_general_dilated(
        x, wgt, (stride, stride), ((pad, pad), (pad, pad)),
        dimension_numbers=('NHWC', 'HWIO', 'NHWC'),
        precision=lax.Precision.HIGHEST)


def pixel_shuffle_nhwc(x, r):
    n, h, wd, c = x.shape
    co = c // (r * r)
    x = x.reshape(n, h, wd, co, r, r).transpose(0, 1, 4, 2, 5, 3)
    return x.reshape(n, h * r, wd * r, co)


def ref_forward(params, x, mask):
    def conv3(x_, wgt, b, relu=False, residual=None):
        y = _ref_conv(x_, wgt, 1, 1) + b
        if relu:
            y = jnp.maximum(y, 0.0)
        if residual is not None:
            y = y + residual
        return y

    def block(x_, p):
        h1 = conv3(x_, p['w1'], p['b1'], relu=True)
        return conv3(h1, p['w2'], p['b2'], residual=x_)

    inp = jnp.concatenate([x, mask], axis=-1)
    h = _ref_conv(inp, params['intro']['w'], 1, 1) + params['intro']['b']
    encs = []
    for i, num in enumerate(ENC_BLK_NUMS):
        for j in range(num):
            h = block(h, params[f'enc_{i}_{j}'])
        encs.append(h)
        h = (_ref_conv(h, params[f'enc_down_{i}']['w'], 2, 0)
             + params[f'enc_down_{i}']['b'])
    for i in range(MIDDLE_BLK_NUM):
        h = block(h, params[f'mid_{i}'])
    f = h
    for i, enc in enumerate(encs[::-1]):
        f = _ref_conv(f, params[f'dec_up_{i}']['w'], 1, 0)
        f = pixel_shuffle_nhwc(f, 2)
        f = f + enc
        for j in range(DEC_BLK_NUMS[i]):
            f = block(f, params[f'dec_{i}_{j}'])
    f = _ref_conv(f, params['end']['w'], 1, 1) + params['end']['b']
    output = mask * f + (1.0 - mask) * x
    return f, x, output


# ----------------------------- params ------------------------------------------
def init_params(key):
    keys = iter(jax.random.split(key, 64))

    def conv_p(cin, cout, k):
        kw, kb = jax.random.split(next(keys))
        s = 1.0 / np.sqrt(k * k * cin)
        return {'w': jax.random.uniform(kw, (k, k, cin, cout), jnp.float32, -s, s),
                'b': jax.random.uniform(kb, (cout,), jnp.float32, -s, s)}

    def block_p(chan):
        p1, p2 = conv_p(chan, chan, 3), conv_p(chan, chan, 3)
        return {'w1': p1['w'], 'b1': p1['b'], 'w2': p2['w'], 'b2': p2['b']}

    params = {'intro': conv_p(IN_CHANNELS, WIDTH, 3)}
    chan = WIDTH
    for i, num in enumerate(ENC_BLK_NUMS):
        for j in range(num):
            params[f'enc_{i}_{j}'] = block_p(chan)
        params[f'enc_down_{i}'] = conv_p(chan, 2 * chan, 2)
        chan *= 2
    for i in range(MIDDLE_BLK_NUM):
        params[f'mid_{i}'] = block_p(chan)
    for i, num in enumerate(DEC_BLK_NUMS):
        params[f'dec_up_{i}'] = {'w': conv_p(chan, 2 * chan, 1)['w']}   # bias=False
        chan //= 2
        for j in range(num):
            params[f'dec_{i}_{j}'] = block_p(chan)
    params['end'] = conv_p(WIDTH, 3, 3)
    return params


# ----------------------------- main --------------------------------------------
if __name__ == "__main__":
    key = jax.random.PRNGKey(0)
    kp, kx, km = jax.random.split(key, 3)
    params = init_params(kp)
    x = jax.random.normal(kx, (N, H, W, 3), jnp.float32)
    mask = (jax.random.uniform(km, (N, H, W, 1)) > 0.5).astype(jnp.float32)

    fwd = jax.jit(forward_pallas)          # batch_tiles=1: whole batch in one step
    f_out, inp_out, blended = fwd(params, x, mask)
    jax.block_until_ready(blended)

    rf, _, rblended = ref_forward(params, x, mask)
    # Tolerance: exact in interpret mode; on hardware the kernel accumulates in f32
    # while the MXU/conv default precision leaves ~1e-3-level operand rounding.
    np.testing.assert_allclose(np.asarray(f_out), np.asarray(rf),
                               rtol=1e-3, atol=1e-3)
    np.testing.assert_allclose(np.asarray(blended), np.asarray(rblended),
                               rtol=1e-3, atol=1e-3)
    assert f_out.shape == (N, H, W, 3) and blended.shape == (N, H, W, 3)
    assert inp_out.shape == x.shape
    print("KERNEL_OK")
</pallas_src>

<mosaic_0001>
module attributes {stable_mosaic.version = 11 : i64} {
  func.func @_fused_kernel(%arg0: i32, %arg1: memref<32x128xf32, #tpu.memory_space<vmem>>, %arg2: memref<32x128xf32, #tpu.memory_space<vmem>>, %arg3: memref<12x384x128xf32, #tpu.memory_space<vmem>>, %arg4: memref<12x1x128xf32, #tpu.memory_space<vmem>>, %arg5: memref<2x256x128xf32, #tpu.memory_space<vmem>>, %arg6: memref<2x1x128xf32, #tpu.memory_space<vmem>>, %arg7: memref<2x128x256xf32, #tpu.memory_space<vmem>>, %arg8: memref<32x128xf32, #tpu.memory_space<vmem>>, %arg9: memref<32x128xf32, #tpu.memory_space<vmem>>) attributes {dimension_semantics = [#tpu.dimension_semantics<parallel>], iteration_bounds = array<i64: 1>, scalar_prefetch = 0 : i64, scratch_operands = 0 : i64, tpu.core_type = #tpu.core_type<tc>, window_params = [{transform_indices = @transform_0, window_bounds = array<i64: 32, 128>}, {transform_indices = @transform_1, window_bounds = array<i64: 32, 128>}, {pipeline_mode = #tpu.pipeline_mode<synchronous>, transform_indices = @transform_2, window_bounds = array<i64: 12, 384, 128>}, {pipeline_mode = #tpu.pipeline_mode<synchronous>, transform_indices = @transform_3, window_bounds = array<i64: 12, 1, 128>}, {pipeline_mode = #tpu.pipeline_mode<synchronous>, transform_indices = @transform_4, window_bounds = array<i64: 2, 256, 128>}, {pipeline_mode = #tpu.pipeline_mode<synchronous>, transform_indices = @transform_5, window_bounds = array<i64: 2, 1, 128>}, {pipeline_mode = #tpu.pipeline_mode<synchronous>, transform_indices = @transform_6, window_bounds = array<i64: 2, 128, 256>}, {transform_indices = @transform_7, window_bounds = array<i64: 32, 128>}, {transform_indices = @transform_8, window_bounds = array<i64: 32, 128>}]} {
    %c0 = arith.constant 0 : index
    %c0_0 = arith.constant 0 : index
    %0 = vector.load %arg1[%c0, %c0_0] : memref<32x128xf32, #tpu.memory_space<vmem>>, vector<32x128xf32>
    %c0_1 = arith.constant 0 : index
    %c0_2 = arith.constant 0 : index
    %1 = vector.load %arg2[%c0_1, %c0_2] : memref<32x128xf32, #tpu.memory_space<vmem>>, vector<32x128xf32>
    %2 = tpu.iota {dimensions = array<i32: 0>} : vector<32x128xi32>
    %cst = arith.constant 0.000000e+00 : f32
    %3 = vector.broadcast %cst : f32 to vector<1x128xf32>
    %4 = vector.extract_strided_slice %0 {offsets = [0, 0], sizes = [31, 128], strides = [1, 1]} : vector<32x128xf32> to vector<31x128xf32>
    %5 = tpu.concatenate %3, %4 in 0 : vector<1x128xf32>, vector<31x128xf32> -> vector<32x128xf32>
    %c15_i32 = arith.constant 15 : i32
    %6 = vector.broadcast %c15_i32 : i32 to vector<32x128xi32>
    %7 = arith.andi %2, %6 : vector<32x128xi32>
    %c0_i32 = arith.constant 0 : i32
    %8 = vector.broadcast %c0_i32 : i32 to vector<32x128xi32>
    %9 = arith.cmpi eq, %7, %8 : vector<32x128xi32>
    %cst_3 = arith.constant 0.000000e+00 : f32
    %10 = vector.broadcast %cst_3 : f32 to vector<32x128xf32>
    %11 = arith.select %9, %10, %5 : vector<32x128xi1>, vector<32x128xf32>
    %12 = vector.extract_strided_slice %0 {offsets = [1, 0], sizes = [31, 128], strides = [1, 1]} : vector<32x128xf32> to vector<31x128xf32>
    %13 = tpu.concatenate %12, %3 in 0 : vector<31x128xf32>, vector<1x128xf32> -> vector<32x128xf32>
    %c15_i32_4 = arith.constant 15 : i32
    %14 = vector.broadcast %c15_i32_4 : i32 to vector<32x128xi32>
    %15 = arith.andi %2, %14 : vector<32x128xi32>
    %c15_i32_5 = arith.constant 15 : i32
    %16 = vector.broadcast %c15_i32_5 : i32 to vector<32x128xi32>
    %17 = arith.cmpi eq, %15, %16 : vector<32x128xi32>
    %cst_6 = arith.constant 0.000000e+00 : f32
    %18 = vector.broadcast %cst_6 : f32 to vector<32x128xf32>
    %19 = arith.select %17, %18, %13 : vector<32x128xi1>, vector<32x128xf32>
    %20 = tpu.concatenate %11, %0, %19 in 1 : vector<32x128xf32>, vector<32x128xf32>, vector<32x128xf32> -> vector<32x384xf32>
    %c0_7 = arith.constant 0 : index
    %c0_8 = arith.constant 0 : index
    %c0_9 = arith.constant 0 : index
    %21 = vector.load %arg3[%c0_7, %c0_8, %c0_9] : memref<12x384x128xf32, #tpu.memory_space<vmem>>, vector<1x384x128xf32>
    %22 = vector.shape_cast %21 : vector<1x384x128xf32> to vector<384x128xf32>
    %cst_10 = arith.constant dense<0.000000e+00> : vector<32x128xf32>
    %23 = tpu.matmul %20, %22, %cst_10 {dimension_numbers = #tpu.dot_dimension_numbers<[1], [0], [0], [1], [0, 0, 1, 1], [], []>} : vector<32x384xf32>, vector<384x128xf32>, vector<32x128xf32> -> vector<32x128xf32>
    %c0_11 = arith.constant 0 : index
    %c0_12 = arith.constant 0 : index
    %c0_13 = arith.constant 0 : index
    %24 = vector.load %arg4[%c0_11, %c0_12, %c0_13] : memref<12x1x128xf32, #tpu.memory_space<vmem>>, vector<1x1x128xf32>
    %25 = vector.shape_cast %24 : vector<1x1x128xf32> to vector<1x128xf32>
    %26 = vector.broadcast %25 : vector<1x128xf32> to vector<32x128xf32>
    %27 = arith.addf %23, %26 : vector<32x128xf32>
    %28 = tpu.iota {dimensions = array<i32: 0>} : vector<32x128xi32>
    %cst_14 = arith.constant 0.000000e+00 : f32
    %29 = vector.broadcast %cst_14 : f32 to vector<1x128xf32>
    %30 = vector.extract_strided_slice %27 {offsets = [0, 0], sizes = [31, 128], strides = [1, 1]} : vector<32x128xf32> to vector<31x128xf32>
    %31 = tpu.concatenate %29, %30 in 0 : vector<1x128xf32>, vector<31x128xf32> -> vector<32x128xf32>
    %c15_i32_15 = arith.constant 15 : i32
    %32 = vector.broadcast %c15_i32_15 : i32 to vector<32x128xi32>
    %33 = arith.andi %28, %32 : vector<32x128xi32>
    %c0_i32_16 = arith.constant 0 : i32
    %34 = vector.broadcast %c0_i32_16 : i32 to vector<32x128xi32>
    %35 = arith.cmpi eq, %33, %34 : vector<32x128xi32>
    %cst_17 = arith.constant 0.000000e+00 : f32
    %36 = vector.broadcast %cst_17 : f32 to vector<32x128xf32>
    %37 = arith.select %35, %36, %31 : vector<32x128xi1>, vector<32x128xf32>
    %38 = vector.extract_strided_slice %27 {offsets = [1, 0], sizes = [31, 128], strides = [1, 1]} : vector<32x128xf32> to vector<31x128xf32>
    %39 = tpu.concatenate %38, %29 in 0 : vector<31x128xf32>, vector<1x128xf32> -> vector<32x128xf32>
    %c15_i32_18 = arith.constant 15 : i32
    %40 = vector.broadcast %c15_i32_18 : i32 to vector<32x128xi32>
    %41 = arith.andi %28, %40 : vector<32x128xi32>
    %c15_i32_19 = arith.constant 15 : i32
    %42 = vector.broadcast %c15_i32_19 : i32 to vector<32x128xi32>
    %43 = arith.cmpi eq, %41, %42 : vector<32x128xi32>
    %cst_20 = arith.constant 0.000000e+00 : f32
    %44 = vector.broadcast %cst_20 : f32 to vector<32x128xf32>
    %45 = arith.select %43, %44, %39 : vector<32x128xi1>, vector<32x128xf32>
    %46 = tpu.concatenate %37, %27, %45 in 1 : vector<32x128xf32>, vector<32x128xf32>, vector<32x128xf32> -> vector<32x384xf32>
    %c1 = arith.constant 1 : index
    %c0_21 = arith.constant 0 : index
    %c0_22 = arith.constant 0 : index
    %47 = vector.load %arg3[%c1, %c0_21, %c0_22] : memref<12x384x128xf32, #tpu.memory_space<vmem>>, vector<1x384x128xf32>
    %48 = vector.shape_cast %47 : vector<1x384x128xf32> to vector<384x128xf32>
    %cst_23 = arith.constant dense<0.000000e+00> : vector<32x128xf32>
    %49 = tpu.matmul %46, %48, %cst_23 {dimension_numbers = #tpu.dot_dimension_numbers<[1], [0], [0], [1], [0, 0, 1, 1], [], []>} : vector<32x384xf32>, vector<384x128xf32>, vector<32x128xf32> -> vector<32x128xf32>
    %c1_24 = arith.constant 1 : index
    %c0_25 = arith.constant 0 : index
    %c0_26 = arith.constant 0 : index
    %50 = vector.load %arg4[%c1_24, %c0_25, %c0_26] : memref<12x1x128xf32, #tpu.memory_space<vmem>>, vector<1x1x128xf32>
    %51 = vector.shape_cast %50 : vector<1x1x128xf32> to vector<1x128xf32>
    %52 = vector.broadcast %51 : vector<1x128xf32> to vector<32x128xf32>
    %53 = arith.addf %49, %52 : vector<32x128xf32>
    %cst_27 = arith.constant 0.000000e+00 : f32
    %54 = vector.broadcast %cst_27 : f32 to vector<32x128xf32>
    %55 = arith.maximumf %53, %54 : vector<32x128xf32>
    %56 = tpu.iota {dimensions = array<i32: 0>} : vector<32x128xi32>
    %cst_28 = arith.constant 0.000000e+00 : f32
    %57 = vector.broadcast %cst_28 : f32 to vector<1x128xf32>
    %58 = vector.extract_strided_slice %55 {offsets = [0, 0], sizes = [31, 128], strides = [1, 1]} : vector<32x128xf32> to vector<31x128xf32>
    %59 = tpu.concatenate %57, %58 in 0 : vector<1x128xf32>, vector<31x128xf32> -> vector<32x128xf32>
    %c15_i32_29 = arith.constant 15 : i32
    %60 = vector.broadcast %c15_i32_29 : i32 to vector<32x128xi32>
    %61 = arith.andi %56, %60 : vector<32x128xi32>
    %c0_i32_30 = arith.constant 0 : i32
    %62 = vector.broadcast %c0_i32_30 : i32 to vector<32x128xi32>
    %63 = arith.cmpi eq, %61, %62 : vector<32x128xi32>
    %cst_31 = arith.constant 0.000000e+00 : f32
    %64 = vector.broadcast %cst_31 : f32 to vector<32x128xf32>
    %65 = arith.select %63, %64, %59 : vector<32x128xi1>, vector<32x128xf32>
    %66 = vector.extract_strided_slice %55 {offsets = [1, 0], sizes = [31, 128], strides = [1, 1]} : vector<32x128xf32> to vector<31x128xf32>
    %67 = tpu.concatenate %66, %57 in 0 : vector<31x128xf32>, vector<1x128xf32> -> vector<32x128xf32>
    %c15_i32_32 = arith.constant 15 : i32
    %68 = vector.broadcast %c15_i32_32 : i32 to vector<32x128xi32>
    %69 = arith.andi %56, %68 : vector<32x128xi32>
    %c15_i32_33 = arith.constant 15 : i32
    %70 = vector.broadcast %c15_i32_33 : i32 to vector<32x128xi32>
    %71 = arith.cmpi eq, %69, %70 : vector<32x128xi32>
    %cst_34 = arith.constant 0.000000e+00 : f32
    %72 = vector.broadcast %cst_34 : f32 to vector<32x128xf32>
    %73 = arith.select %71, %72, %67 : vector<32x128xi1>, vector<32x128xf32>
    %74 = tpu.concatenate %65, %55, %73 in 1 : vector<32x128xf32>, vector<32x128xf32>, vector<32x128xf32> -> vector<32x384xf32>
    %c2 = arith.constant 2 : index
    %c0_35 = arith.constant 0 : index
    %c0_36 = arith.constant 0 : index
    %75 = vector.load %arg3[%c2, %c0_35, %c0_36] : memref<12x384x128xf32, #tpu.memory_space<vmem>>, vector<1x384x128xf32>
    %76 = vector.shape_cast %75 : vector<1x384x128xf32> to vector<384x128xf32>
    %cst_37 = arith.constant dense<0.000000e+00> : vector<32x128xf32>
    %77 = tpu.matmul %74, %76, %cst_37 {dimension_numbers = #tpu.dot_dimension_numbers<[1], [0], [0], [1], [0, 0, 1, 1], [], []>} : vector<32x384xf32>, vector<384x128xf32>, vector<32x128xf32> -> vector<32x128xf32>
    %c2_38 = arith.constant 2 : index
    %c0_39 = arith.constant 0 : index
    %c0_40 = arith.constant 0 : index
    %78 = vector.load %arg4[%c2_38, %c0_39, %c0_40] : memref<12x1x128xf32, #tpu.memory_space<vmem>>, vector<1x1x128xf32>
    %79 = vector.shape_cast %78 : vector<1x1x128xf32> to vector<1x128xf32>
    %80 = vector.broadcast %79 : vector<1x128xf32> to vector<32x128xf32>
    %81 = arith.addf %77, %80 : vector<32x128xf32>
    %82 = arith.addf %81, %27 : vector<32x128xf32>
    %83 = tpu.iota {dimensions = array<i32: 0>} : vector<16x32xi32>
    %84 = tpu.iota {dimensions = array<i32: 1>} : vector<16x32xi32>
    %c2_i32 = arith.constant 2 : i32
    %85 = vector.broadcast %c2_i32 : i32 to vector<16x32xi32>
    %86 = arith.muli %85, %83 : vector<16x32xi32>
    %c0_i32_41 = arith.constant 0 : i32
    %87 = vector.broadcast %c0_i32_41 : i32 to vector<16x32xi32>
    %88 = arith.addi %86, %87 : vector<16x32xi32>
    %89 = arith.cmpi eq, %84, %88 : vector<16x32xi32>
    %90 = arith.extui %89 : vector<16x32xi1> to vector<16x32xi32>
    %91 = arith.sitofp %90 : vector<16x32xi32> to vector<16x32xf32>
    %cst_42 = arith.constant dense<0.000000e+00> : vector<16x128xf32>
    %92 = tpu.matmul %91, %82, %cst_42 {dimension_numbers = #tpu.dot_dimension_numbers<[1], [0], [0], [1], [0, 0, 1, 1], [], []>} : vector<16x32xf32>, vector<32x128xf32>, vector<16x128xf32> -> vector<16x128xf32>
    %93 = tpu.iota {dimensions = array<i32: 0>} : vector<16x32xi32>
    %94 = tpu.iota {dimensions = array<i32: 1>} : vector<16x32xi32>
    %c2_i32_43 = arith.constant 2 : i32
    %95 = vector.broadcast %c2_i32_43 : i32 to vector<16x32xi32>
    %96 = arith.muli %95, %93 : vector<16x32xi32>
    %c1_i32 = arith.constant 1 : i32
    %97 = vector.broadcast %c1_i32 : i32 to vector<16x32xi32>
    %98 = arith.addi %96, %97 : vector<16x32xi32>
    %99 = arith.cmpi eq, %94, %98 : vector<16x32xi32>
    %100 = arith.extui %99 : vector<16x32xi1> to vector<16x32xi32>
    %101 = arith.sitofp %100 : vector<16x32xi32> to vector<16x32xf32>
    %cst_44 = arith.constant dense<0.000000e+00> : vector<16x128xf32>
    %102 = tpu.matmul %101, %82, %cst_44 {dimension_numbers = #tpu.dot_dimension_numbers<[1], [0], [0], [1], [0, 0, 1, 1], [], []>} : vector<16x32xf32>, vector<32x128xf32>, vector<16x128xf32> -> vector<16x128xf32>
    %103 = tpu.concatenate %92, %102 in 1 : vector<16x128xf32>, vector<16x128xf32> -> vector<16x256xf32>
    %c0_45 = arith.constant 0 : index
    %c0_46 = arith.constant 0 : index
    %c0_47 = arith.constant 0 : index
    %104 = vector.load %arg5[%c0_45, %c0_46, %c0_47] : memref<2x256x128xf32, #tpu.memory_space<vmem>>, vector<1x256x128xf32>
    %105 = vector.shape_cast %104 : vector<1x256x128xf32> to vector<256x128xf32>
    %cst_48 = arith.constant dense<0.000000e+00> : vector<16x128xf32>
    %106 = tpu.matmul %103, %105, %cst_48 {dimension_numbers = #tpu.dot_dimension_numbers<[1], [0], [0], [1], [0, 0, 1, 1], [], []>} : vector<16x256xf32>, vector<256x128xf32>, vector<16x128xf32> -> vector<16x128xf32>
    %c0_49 = arith.constant 0 : index
    %c0_50 = arith.constant 0 : index
    %c0_51 = arith.constant 0 : index
    %107 = vector.load %arg6[%c0_49, %c0_50, %c0_51] : memref<2x1x128xf32, #tpu.memory_space<vmem>>, vector<1x1x128xf32>
    %108 = vector.shape_cast %107 : vector<1x1x128xf32> to vector<1x128xf32>
    %109 = vector.broadcast %108 : vector<1x128xf32> to vector<16x128xf32>
    %110 = arith.addf %106, %109 : vector<16x128xf32>
    %111 = tpu.iota {dimensions = array<i32: 0>} : vector<16x128xi32>
    %cst_52 = arith.constant 0.000000e+00 : f32
    %112 = vector.broadcast %cst_52 : f32 to vector<1x128xf32>
    %113 = vector.extract_strided_slice %110 {offsets = [0, 0], sizes = [15, 128], strides = [1, 1]} : vector<16x128xf32> to vector<15x128xf32>
    %114 = tpu.concatenate %112, %113 in 0 : vector<1x128xf32>, vector<15x128xf32> -> vector<16x128xf32>
    %c7_i32 = arith.constant 7 : i32
    %115 = vector.broadcast %c7_i32 : i32 to vector<16x128xi32>
    %116 = arith.andi %111, %115 : vector<16x128xi32>
    %c0_i32_53 = arith.constant 0 : i32
    %117 = vector.broadcast %c0_i32_53 : i32 to vector<16x128xi32>
    %118 = arith.cmpi eq, %116, %117 : vector<16x128xi32>
    %cst_54 = arith.constant 0.000000e+00 : f32
    %119 = vector.broadcast %cst_54 : f32 to vector<16x128xf32>
    %120 = arith.select %118, %119, %114 : vector<16x128xi1>, vector<16x128xf32>
    %121 = vector.extract_strided_slice %110 {offsets = [1, 0], sizes = [15, 128], strides = [1, 1]} : vector<16x128xf32> to vector<15x128xf32>
    %122 = tpu.concatenate %121, %112 in 0 : vector<15x128xf32>, vector<1x128xf32> -> vector<16x128xf32>
    %c7_i32_55 = arith.constant 7 : i32
    %123 = vector.broadcast %c7_i32_55 : i32 to vector<16x128xi32>
    %124 = arith.andi %111, %123 : vector<16x128xi32>
    %c7_i32_56 = arith.constant 7 : i32
    %125 = vector.broadcast %c7_i32_56 : i32 to vector<16x128xi32>
    %126 = arith.cmpi eq, %124, %125 : vector<16x128xi32>
    %cst_57 = arith.constant 0.000000e+00 : f32
    %127 = vector.broadcast %cst_57 : f32 to vector<16x128xf32>
    %128 = arith.select %126, %127, %122 : vector<16x128xi1>, vector<16x128xf32>
    %129 = tpu.concatenate %120, %110, %128 in 1 : vector<16x128xf32>, vector<16x128xf32>, vector<16x128xf32> -> vector<16x384xf32>
    %c3 = arith.constant 3 : index
    %c0_58 = arith.constant 0 : index
    %c0_59 = arith.constant 0 : index
    %130 = vector.load %arg3[%c3, %c0_58, %c0_59] : memref<12x384x128xf32, #tpu.memory_space<vmem>>, vector<1x384x128xf32>
    %131 = vector.shape_cast %130 : vector<1x384x128xf32> to vector<384x128xf32>
    %cst_60 = arith.constant dense<0.000000e+00> : vector<16x128xf32>
    %132 = tpu.matmul %129, %131, %cst_60 {dimension_numbers = #tpu.dot_dimension_numbers<[1], [0], [0], [1], [0, 0, 1, 1], [], []>} : vector<16x384xf32>, vector<384x128xf32>, vector<16x128xf32> -> vector<16x128xf32>
    %c3_61 = arith.constant 3 : index
    %c0_62 = arith.constant 0 : index
    %c0_63 = arith.constant 0 : index
    %133 = vector.load %arg4[%c3_61, %c0_62, %c0_63] : memref<12x1x128xf32, #tpu.memory_space<vmem>>, vector<1x1x128xf32>
    %134 = vector.shape_cast %133 : vector<1x1x128xf32> to vector<1x128xf32>
    %135 = vector.broadcast %134 : vector<1x128xf32> to vector<16x128xf32>
    %136 = arith.addf %132, %135 : vector<16x128xf32>
    %cst_64 = arith.constant 0.000000e+00 : f32
    %137 = vector.broadcast %cst_64 : f32 to vector<16x128xf32>
    %138 = arith.maximumf %136, %137 : vector<16x128xf32>
    %139 = tpu.iota {dimensions = array<i32: 0>} : vector<16x128xi32>
    %cst_65 = arith.constant 0.000000e+00 : f32
    %140 = vector.broadcast %cst_65 : f32 to vector<1x128xf32>
    %141 = vector.extract_strided_slice %138 {offsets = [0, 0], sizes = [15, 128], strides = [1, 1]} : vector<16x128xf32> to vector<15x128xf32>
    %142 = tpu.concatenate %140, %141 in 0 : vector<1x128xf32>, vector<15x128xf32> -> vector<16x128xf32>
    %c7_i32_66 = arith.constant 7 : i32
    %143 = vector.broadcast %c7_i32_66 : i32 to vector<16x128xi32>
    %144 = arith.andi %139, %143 : vector<16x128xi32>
    %c0_i32_67 = arith.constant 0 : i32
    %145 = vector.broadcast %c0_i32_67 : i32 to vector<16x128xi32>
    %146 = arith.cmpi eq, %144, %145 : vector<16x128xi32>
    %cst_68 = arith.constant 0.000000e+00 : f32
    %147 = vector.broadcast %cst_68 : f32 to vector<16x128xf32>
    %148 = arith.select %146, %147, %142 : vector<16x128xi1>, vector<16x128xf32>
    %149 = vector.extract_strided_slice %138 {offsets = [1, 0], sizes = [15, 128], strides = [1, 1]} : vector<16x128xf32> to vector<15x128xf32>
    %150 = tpu.concatenate %149, %140 in 0 : vector<15x128xf32>, vector<1x128xf32> -> vector<16x128xf32>
    %c7_i32_69 = arith.constant 7 : i32
    %151 = vector.broadcast %c7_i32_69 : i32 to vector<16x128xi32>
    %152 = arith.andi %139, %151 : vector<16x128xi32>
    %c7_i32_70 = arith.constant 7 : i32
    %153 = vector.broadcast %c7_i32_70 : i32 to vector<16x128xi32>
    %154 = arith.cmpi eq, %152, %153 : vector<16x128xi32>
    %cst_71 = arith.constant 0.000000e+00 : f32
    %155 = vector.broadcast %cst_71 : f32 to vector<16x128xf32>
    %156 = arith.select %154, %155, %150 : vector<16x128xi1>, vector<16x128xf32>
    %157 = tpu.concatenate %148, %138, %156 in 1 : vector<16x128xf32>, vector<16x128xf32>, vector<16x128xf32> -> vector<16x384xf32>
    %c4 = arith.constant 4 : index
    %c0_72 = arith.constant 0 : index
    %c0_73 = arith.constant 0 : index
    %158 = vector.load %arg3[%c4, %c0_72, %c0_73] : memref<12x384x128xf32, #tpu.memory_space<vmem>>, vector<1x384x128xf32>
    %159 = vector.shape_cast %158 : vector<1x384x128xf32> to vector<384x128xf32>
    %cst_74 = arith.constant dense<0.000000e+00> : vector<16x128xf32>
    %160 = tpu.matmul %157, %159, %cst_74 {dimension_numbers = #tpu.dot_dimension_numbers<[1], [0], [0], [1], [0, 0, 1, 1], [], []>} : vector<16x384xf32>, vector<384x128xf32>, vector<16x128xf32> -> vector<16x128xf32>
    %c4_75 = arith.constant 4 : index
    %c0_76 = arith.constant 0 : index
    %c0_77 = arith.constant 0 : index
    %161 = vector.load %arg4[%c4_75, %c0_76, %c0_77] : memref<12x1x128xf32, #tpu.memory_space<vmem>>, vector<1x1x128xf32>
    %162 = vector.shape_cast %161 : vector<1x1x128xf32> to vector<1x128xf32>
    %163 = vector.broadcast %162 : vector<1x128xf32> to vector<16x128xf32>
    %164 = arith.addf %160, %163 : vector<16x128xf32>
    %165 = arith.addf %164, %110 : vector<16x128xf32>
    %166 = tpu.iota {dimensions = array<i32: 0>} : vector<8x16xi32>
    %167 = tpu.iota {dimensions = array<i32: 1>} : vector<8x16xi32>
    %c2_i32_78 = arith.constant 2 : i32
    %168 = vector.broadcast %c2_i32_78 : i32 to vector<8x16xi32>
    %169 = arith.muli %168, %166 : vector<8x16xi32>
    %c0_i32_79 = arith.constant 0 : i32
    %170 = vector.broadcast %c0_i32_79 : i32 to vector<8x16xi32>
    %171 = arith.addi %169, %170 : vector<8x16xi32>
    %172 = arith.cmpi eq, %167, %171 : vector<8x16xi32>
    %173 = arith.extui %172 : vector<8x16xi1> to vector<8x16xi32>
    %174 = arith.sitofp %173 : vector<8x16xi32> to vector<8x16xf32>
    %cst_80 = arith.constant dense<0.000000e+00> : vector<8x128xf32>
    %175 = tpu.matmul %174, %165, %cst_80 {dimension_numbers = #tpu.dot_dimension_numbers<[1], [0], [0], [1], [0, 0, 1, 1], [], []>} : vector<8x16xf32>, vector<16x128xf32>, vector<8x128xf32> -> vector<8x128xf32>
    %176 = tpu.iota {dimensions = array<i32: 0>} : vector<8x16xi32>
    %177 = tpu.iota {dimensions = array<i32: 1>} : vector<8x16xi32>
    %c2_i32_81 = arith.constant 2 : i32
    %178 = vector.broadcast %c2_i32_81 : i32 to vector<8x16xi32>
    %179 = arith.muli %178, %176 : vector<8x16xi32>
    %c1_i32_82 = arith.constant 1 : i32
    %180 = vector.broadcast %c1_i32_82 : i32 to vector<8x16xi32>
    %181 = arith.addi %179, %180 : vector<8x16xi32>
    %182 = arith.cmpi eq, %177, %181 : vector<8x16xi32>
    %183 = arith.extui %182 : vector<8x16xi1> to vector<8x16xi32>
    %184 = arith.sitofp %183 : vector<8x16xi32> to vector<8x16xf32>
    %cst_83 = arith.constant dense<0.000000e+00> : vector<8x128xf32>
    %185 = tpu.matmul %184, %165, %cst_83 {dimension_numbers = #tpu.dot_dimension_numbers<[1], [0], [0], [1], [0, 0, 1, 1], [], []>} : vector<8x16xf32>, vector<16x128xf32>, vector<8x128xf32> -> vector<8x128xf32>
    %186 = tpu.concatenate %175, %185 in 1 : vector<8x128xf32>, vector<8x128xf32> -> vector<8x256xf32>
    %c1_84 = arith.constant 1 : index
    %c0_85 = arith.constant 0 : index
    %c0_86 = arith.constant 0 : index
    %187 = vector.load %arg5[%c1_84, %c0_85, %c0_86] : memref<2x256x128xf32, #tpu.memory_space<vmem>>, vector<1x256x128xf32>
    %188 = vector.shape_cast %187 : vector<1x256x128xf32> to vector<256x128xf32>
    %cst_87 = arith.constant dense<0.000000e+00> : vector<8x128xf32>
    %189 = tpu.matmul %186, %188, %cst_87 {dimension_numbers = #tpu.dot_dimension_numbers<[1], [0], [0], [1], [0, 0, 1, 1], [], []>} : vector<8x256xf32>, vector<256x128xf32>, vector<8x128xf32> -> vector<8x128xf32>
    %c1_88 = arith.constant 1 : index
    %c0_89 = arith.constant 0 : index
    %c0_90 = arith.constant 0 : index
    %190 = vector.load %arg6[%c1_88, %c0_89, %c0_90] : memref<2x1x128xf32, #tpu.memory_space<vmem>>, vector<1x1x128xf32>
    %191 = vector.shape_cast %190 : vector<1x1x128xf32> to vector<1x128xf32>
    %192 = vector.broadcast %191 : vector<1x128xf32> to vector<8x128xf32>
    %193 = arith.addf %189, %192 : vector<8x128xf32>
    %194 = tpu.iota {dimensions = array<i32: 0>} : vector<8x128xi32>
    %cst_91 = arith.constant 0.000000e+00 : f32
    %195 = vector.broadcast %cst_91 : f32 to vector<1x128xf32>
    %196 = vector.extract_strided_slice %193 {offsets = [0, 0], sizes = [7, 128], strides = [1, 1]} : vector<8x128xf32> to vector<7x128xf32>
    %197 = tpu.concatenate %195, %196 in 0 : vector<1x128xf32>, vector<7x128xf32> -> vector<8x128xf32>
    %c3_i32 = arith.constant 3 : i32
    %198 = vector.broadcast %c3_i32 : i32 to vector<8x128xi32>
    %199 = arith.andi %194, %198 : vector<8x128xi32>
    %c0_i32_92 = arith.constant 0 : i32
    %200 = vector.broadcast %c0_i32_92 : i32 to vector<8x128xi32>
    %201 = arith.cmpi eq, %199, %200 : vector<8x128xi32>
    %cst_93 = arith.constant 0.000000e+00 : f32
    %202 = vector.broadcast %cst_93 : f32 to vector<8x128xf32>
    %203 = arith.select %201, %202, %197 : vector<8x128xi1>, vector<8x128xf32>
    %204 = vector.extract_strided_slice %193 {offsets = [1, 0], sizes = [7, 128], strides = [1, 1]} : vector<8x128xf32> to vector<7x128xf32>
    %205 = tpu.concatenate %204, %195 in 0 : vector<7x128xf32>, vector<1x128xf32> -> vector<8x128xf32>
    %c3_i32_94 = arith.constant 3 : i32
    %206 = vector.broadcast %c3_i32_94 : i32 to vector<8x128xi32>
    %207 = arith.andi %194, %206 : vector<8x128xi32>
    %c3_i32_95 = arith.constant 3 : i32
    %208 = vector.broadcast %c3_i32_95 : i32 to vector<8x128xi32>
    %209 = arith.cmpi eq, %207, %208 : vector<8x128xi32>
    %cst_96 = arith.constant 0.000000e+00 : f32
    %210 = vector.broadcast %cst_96 : f32 to vector<8x128xf32>
    %211 = arith.select %209, %210, %205 : vector<8x128xi1>, vector<8x128xf32>
    %212 = tpu.concatenate %203, %193, %211 in 1 : vector<8x128xf32>, vector<8x128xf32>, vector<8x128xf32> -> vector<8x384xf32>
    %c5 = arith.constant 5 : index
    %c0_97 = arith.constant 0 : index
    %c0_98 = arith.constant 0 : index
    %213 = vector.load %arg3[%c5, %c0_97, %c0_98] : memref<12x384x128xf32, #tpu.memory_space<vmem>>, vector<1x384x128xf32>
    %214 = vector.shape_cast %213 : vector<1x384x128xf32> to vector<384x128xf32>
    %cst_99 = arith.constant dense<0.000000e+00> : vector<8x128xf32>
    %215 = tpu.matmul %212, %214, %cst_99 {dimension_numbers = #tpu.dot_dimension_numbers<[1], [0], [0], [1], [0, 0, 1, 1], [], []>} : vector<8x384xf32>, vector<384x128xf32>, vector<8x128xf32> -> vector<8x128xf32>
    %c5_100 = arith.constant 5 : index
    %c0_101 = arith.constant 0 : index
    %c0_102 = arith.constant 0 : index
    %216 = vector.load %arg4[%c5_100, %c0_101, %c0_102] : memref<12x1x128xf32, #tpu.memory_space<vmem>>, vector<1x1x128xf32>
    %217 = vector.shape_cast %216 : vector<1x1x128xf32> to vector<1x128xf32>
    %218 = vector.broadcast %217 : vector<1x128xf32> to vector<8x128xf32>
    %219 = arith.addf %215, %218 : vector<8x128xf32>
    %cst_103 = arith.constant 0.000000e+00 : f32
    %220 = vector.broadcast %cst_103 : f32 to vector<8x128xf32>
    %221 = arith.maximumf %219, %220 : vector<8x128xf32>
    %222 = tpu.iota {dimensions = array<i32: 0>} : vector<8x128xi32>
    %cst_104 = arith.constant 0.000000e+00 : f32
    %223 = vector.broadcast %cst_104 : f32 to vector<1x128xf32>
    %224 = vector.extract_strided_slice %221 {offsets = [0, 0], sizes = [7, 128], strides = [1, 1]} : vector<8x128xf32> to vector<7x128xf32>
    %225 = tpu.concatenate %223, %224 in 0 : vector<1x128xf32>, vector<7x128xf32> -> vector<8x128xf32>
    %c3_i32_105 = arith.constant 3 : i32
    %226 = vector.broadcast %c3_i32_105 : i32 to vector<8x128xi32>
    %227 = arith.andi %222, %226 : vector<8x128xi32>
    %c0_i32_106 = arith.constant 0 : i32
    %228 = vector.broadcast %c0_i32_106 : i32 to vector<8x128xi32>
    %229 = arith.cmpi eq, %227, %228 : vector<8x128xi32>
    %cst_107 = arith.constant 0.000000e+00 : f32
    %230 = vector.broadcast %cst_107 : f32 to vector<8x128xf32>
    %231 = arith.select %229, %230, %225 : vector<8x128xi1>, vector<8x128xf32>
    %232 = vector.extract_strided_slice %221 {offsets = [1, 0], sizes = [7, 128], strides = [1, 1]} : vector<8x128xf32> to vector<7x128xf32>
    %233 = tpu.concatenate %232, %223 in 0 : vector<7x128xf32>, vector<1x128xf32> -> vector<8x128xf32>
    %c3_i32_108 = arith.constant 3 : i32
    %234 = vector.broadcast %c3_i32_108 : i32 to vector<8x128xi32>
    %235 = arith.andi %222, %234 : vector<8x128xi32>
    %c3_i32_109 = arith.constant 3 : i32
    %236 = vector.broadcast %c3_i32_109 : i32 to vector<8x128xi32>
    %237 = arith.cmpi eq, %235, %236 : vector<8x128xi32>
    %cst_110 = arith.constant 0.000000e+00 : f32
    %238 = vector.broadcast %cst_110 : f32 to vector<8x128xf32>
    %239 = arith.select %237, %238, %233 : vector<8x128xi1>, vector<8x128xf32>
    %240 = tpu.concatenate %231, %221, %239 in 1 : vector<8x128xf32>, vector<8x128xf32>, vector<8x128xf32> -> vector<8x384xf32>
    %c6 = arith.constant 6 : index
    %c0_111 = arith.constant 0 : index
    %c0_112 = arith.constant 0 : index
    %241 = vector.load %arg3[%c6, %c0_111, %c0_112] : memref<12x384x128xf32, #tpu.memory_space<vmem>>, vector<1x384x128xf32>
    %242 = vector.shape_cast %241 : vector<1x384x128xf32> to vector<384x128xf32>
    %cst_113 = arith.constant dense<0.000000e+00> : vector<8x128xf32>
    %243 = tpu.matmul %240, %242, %cst_113 {dimension_numbers = #tpu.dot_dimension_numbers<[1], [0], [0], [1], [0, 0, 1, 1], [], []>} : vector<8x384xf32>, vector<384x128xf32>, vector<8x128xf32> -> vector<8x128xf32>
    %c6_114 = arith.constant 6 : index
    %c0_115 = arith.constant 0 : index
    %c0_116 = arith.constant 0 : index
    %244 = vector.load %arg4[%c6_114, %c0_115, %c0_116] : memref<12x1x128xf32, #tpu.memory_space<vmem>>, vector<1x1x128xf32>
    %245 = vector.shape_cast %244 : vector<1x1x128xf32> to vector<1x128xf32>
    %246 = vector.broadcast %245 : vector<1x128xf32> to vector<8x128xf32>
    %247 = arith.addf %243, %246 : vector<8x128xf32>
    %248 = arith.addf %247, %193 : vector<8x128xf32>
    %c0_117 = arith.constant 0 : index
    %c0_118 = arith.constant 0 : index
    %c0_119 = arith.constant 0 : index
    %249 = vector.load %arg7[%c0_117, %c0_118, %c0_119] : memref<2x128x256xf32, #tpu.memory_space<vmem>>, vector<1x128x256xf32>
    %250 = vector.shape_cast %249 : vector<1x128x256xf32> to vector<128x256xf32>
    %cst_120 = arith.constant dense<0.000000e+00> : vector<8x256xf32>
    %251 = tpu.matmul %248, %250, %cst_120 {dimension_numbers = #tpu.dot_dimension_numbers<[1], [0], [0], [1], [0, 0, 1, 1], [], []>} : vector<8x128xf32>, vector<128x256xf32>, vector<8x256xf32> -> vector<8x256xf32>
    %252 = vector.extract_strided_slice %251 {offsets = [0, 0], sizes = [8, 128], strides = [1, 1]} : vector<8x256xf32> to vector<8x128xf32>
    %253 = vector.extract_strided_slice %251 {offsets = [0, 128], sizes = [8, 128], strides = [1, 1]} : vector<8x256xf32> to vector<8x128xf32>
    %254 = tpu.iota {dimensions = array<i32: 0>} : vector<16x8xi32>
    %255 = tpu.iota {dimensions = array<i32: 1>} : vector<16x8xi32>
    %c2_i32_121 = arith.constant 2 : i32
    %256 = vector.broadcast %c2_i32_121 : i32 to vector<16x8xi32>
    %257 = arith.muli %256, %255 : vector<16x8xi32>
    %258 = arith.cmpi eq, %254, %257 : vector<16x8xi32>
    %259 = arith.extui %258 : vector<16x8xi1> to vector<16x8xi32>
    %260 = arith.sitofp %259 : vector<16x8xi32> to vector<16x8xf32>
    %cst_122 = arith.constant dense<0.000000e+00> : vector<16x128xf32>
    %261 = tpu.matmul %260, %252, %cst_122 {dimension_numbers = #tpu.dot_dimension_numbers<[1], [0], [0], [1], [0, 0, 1, 1], [], []>} : vector<16x8xf32>, vector<8x128xf32>, vector<16x128xf32> -> vector<16x128xf32>
    %c2_i32_123 = arith.constant 2 : i32
    %262 = vector.broadcast %c2_i32_123 : i32 to vector<16x8xi32>
    %263 = arith.muli %262, %255 : vector<16x8xi32>
    %c1_i32_124 = arith.constant 1 : i32
    %264 = vector.broadcast %c1_i32_124 : i32 to vector<16x8xi32>
    %265 = arith.addi %263, %264 : vector<16x8xi32>
    %266 = arith.cmpi eq, %254, %265 : vector<16x8xi32>
    %267 = arith.extui %266 : vector<16x8xi1> to vector<16x8xi32>
    %268 = arith.sitofp %267 : vector<16x8xi32> to vector<16x8xf32>
    %cst_125 = arith.constant dense<0.000000e+00> : vector<16x128xf32>
    %269 = tpu.matmul %268, %253, %cst_125 {dimension_numbers = #tpu.dot_dimension_numbers<[1], [0], [0], [1], [0, 0, 1, 1], [], []>} : vector<16x8xf32>, vector<8x128xf32>, vector<16x128xf32> -> vector<16x128xf32>
    %270 = arith.addf %261, %269 : vector<16x128xf32>
    %271 = arith.addf %165, %270 : vector<16x128xf32>
    %272 = tpu.iota {dimensions = array<i32: 0>} : vector<16x128xi32>
    %cst_126 = arith.constant 0.000000e+00 : f32
    %273 = vector.broadcast %cst_126 : f32 to vector<1x128xf32>
    %274 = vector.extract_strided_slice %271 {offsets = [0, 0], sizes = [15, 128], strides = [1, 1]} : vector<16x128xf32> to vector<15x128xf32>
    %275 = tpu.concatenate %273, %274 in 0 : vector<1x128xf32>, vector<15x128xf32> -> vector<16x128xf32>
    %c7_i32_127 = arith.constant 7 : i32
    %276 = vector.broadcast %c7_i32_127 : i32 to vector<16x128xi32>
    %277 = arith.andi %272, %276 : vector<16x128xi32>
    %c0_i32_128 = arith.constant 0 : i32
    %278 = vector.broadcast %c0_i32_128 : i32 to vector<16x128xi32>
    %279 = arith.cmpi eq, %277, %278 : vector<16x128xi32>
    %cst_129 = arith.constant 0.000000e+00 : f32
    %280 = vector.broadcast %cst_129 : f32 to vector<16x128xf32>
    %281 = arith.select %279, %280, %275 : vector<16x128xi1>, vector<16x128xf32>
    %282 = vector.extract_strided_slice %271 {offsets = [1, 0], sizes = [15, 128], strides = [1, 1]} : vector<16x128xf32> to vector<15x128xf32>
    %283 = tpu.concatenate %282, %273 in 0 : vector<15x128xf32>, vector<1x128xf32> -> vector<16x128xf32>
    %c7_i32_130 = arith.constant 7 : i32
    %284 = vector.broadcast %c7_i32_130 : i32 to vector<16x128xi32>
    %285 = arith.andi %272, %284 : vector<16x128xi32>
    %c7_i32_131 = arith.constant 7 : i32
    %286 = vector.broadcast %c7_i32_131 : i32 to vector<16x128xi32>
    %287 = arith.cmpi eq, %285, %286 : vector<16x128xi32>
    %cst_132 = arith.constant 0.000000e+00 : f32
    %288 = vector.broadcast %cst_132 : f32 to vector<16x128xf32>
    %289 = arith.select %287, %288, %283 : vector<16x128xi1>, vector<16x128xf32>
    %290 = tpu.concatenate %281, %271, %289 in 1 : vector<16x128xf32>, vector<16x128xf32>, vector<16x128xf32> -> vector<16x384xf32>
    %c7 = arith.constant 7 : index
    %c0_133 = arith.constant 0 : index
    %c0_134 = arith.constant 0 : index
    %291 = vector.load %arg3[%c7, %c0_133, %c0_134] : memref<12x384x128xf32, #tpu.memory_space<vmem>>, vector<1x384x128xf32>
    %292 = vector.shape_cast %291 : vector<1x384x128xf32> to vector<384x128xf32>
    %cst_135 = arith.constant dense<0.000000e+00> : vector<16x128xf32>
    %293 = tpu.matmul %290, %292, %cst_135 {dimension_numbers = #tpu.dot_dimension_numbers<[1], [0], [0], [1], [0, 0, 1, 1], [], []>} : vector<16x384xf32>, vector<384x128xf32>, vector<16x128xf32> -> vector<16x128xf32>
    %c7_136 = arith.constant 7 : index
    %c0_137 = arith.constant 0 : index
    %c0_138 = arith.constant 0 : index
    %294 = vector.load %arg4[%c7_136, %c0_137, %c0_138] : memref<12x1x128xf32, #tpu.memory_space<vmem>>, vector<1x1x128xf32>
    %295 = vector.shape_cast %294 : vector<1x1x128xf32> to vector<1x128xf32>
    %296 = vector.broadcast %295 : vector<1x128xf32> to vector<16x128xf32>
    %297 = arith.addf %293, %296 : vector<16x128xf32>
    %cst_139 = arith.constant 0.000000e+00 : f32
    %298 = vector.broadcast %cst_139 : f32 to vector<16x128xf32>
    %299 = arith.maximumf %297, %298 : vector<16x128xf32>
    %300 = tpu.iota {dimensions = array<i32: 0>} : vector<16x128xi32>
    %cst_140 = arith.constant 0.000000e+00 : f32
    %301 = vector.broadcast %cst_140 : f32 to vector<1x128xf32>
    %302 = vector.extract_strided_slice %299 {offsets = [0, 0], sizes = [15, 128], strides = [1, 1]} : vector<16x128xf32> to vector<15x128xf32>
    %303 = tpu.concatenate %301, %302 in 0 : vector<1x128xf32>, vector<15x128xf32> -> vector<16x128xf32>
    %c7_i32_141 = arith.constant 7 : i32
    %304 = vector.broadcast %c7_i32_141 : i32 to vector<16x128xi32>
    %305 = arith.andi %300, %304 : vector<16x128xi32>
    %c0_i32_142 = arith.constant 0 : i32
    %306 = vector.broadcast %c0_i32_142 : i32 to vector<16x128xi32>
    %307 = arith.cmpi eq, %305, %306 : vector<16x128xi32>
    %cst_143 = arith.constant 0.000000e+00 : f32
    %308 = vector.broadcast %cst_143 : f32 to vector<16x128xf32>
    %309 = arith.select %307, %308, %303 : vector<16x128xi1>, vector<16x128xf32>
    %310 = vector.extract_strided_slice %299 {offsets = [1, 0], sizes = [15, 128], strides = [1, 1]} : vector<16x128xf32> to vector<15x128xf32>
    %311 = tpu.concatenate %310, %301 in 0 : vector<15x128xf32>, vector<1x128xf32> -> vector<16x128xf32>
    %c7_i32_144 = arith.constant 7 : i32
    %312 = vector.broadcast %c7_i32_144 : i32 to vector<16x128xi32>
    %313 = arith.andi %300, %312 : vector<16x128xi32>
    %c7_i32_145 = arith.constant 7 : i32
    %314 = vector.broadcast %c7_i32_145 : i32 to vector<16x128xi32>
    %315 = arith.cmpi eq, %313, %314 : vector<16x128xi32>
    %cst_146 = arith.constant 0.000000e+00 : f32
    %316 = vector.broadcast %cst_146 : f32 to vector<16x128xf32>
    %317 = arith.select %315, %316, %311 : vector<16x128xi1>, vector<16x128xf32>
    %318 = tpu.concatenate %309, %299, %317 in 1 : vector<16x128xf32>, vector<16x128xf32>, vector<16x128xf32> -> vector<16x384xf32>
    %c8 = arith.constant 8 : index
    %c0_147 = arith.constant 0 : index
    %c0_148 = arith.constant 0 : index
    %319 = vector.load %arg3[%c8, %c0_147, %c0_148] : memref<12x384x128xf32, #tpu.memory_space<vmem>>, vector<1x384x128xf32>
    %320 = vector.shape_cast %319 : vector<1x384x128xf32> to vector<384x128xf32>
    %cst_149 = arith.constant dense<0.000000e+00> : vector<16x128xf32>
    %321 = tpu.matmul %318, %320, %cst_149 {dimension_numbers = #tpu.dot_dimension_numbers<[1], [0], [0], [1], [0, 0, 1, 1], [], []>} : vector<16x384xf32>, vector<384x128xf32>, vector<16x128xf32> -> vector<16x128xf32>
    %c8_150 = arith.constant 8 : index
    %c0_151 = arith.constant 0 : index
    %c0_152 = arith.constant 0 : index
    %322 = vector.load %arg4[%c8_150, %c0_151, %c0_152] : memref<12x1x128xf32, #tpu.memory_space<vmem>>, vector<1x1x128xf32>
    %323 = vector.shape_cast %322 : vector<1x1x128xf32> to vector<1x128xf32>
    %324 = vector.broadcast %323 : vector<1x128xf32> to vector<16x128xf32>
    %325 = arith.addf %321, %324 : vector<16x128xf32>
    %326 = arith.addf %325, %271 : vector<16x128xf32>
    %c1_153 = arith.constant 1 : index
    %c0_154 = arith.constant 0 : index
    %c0_155 = arith.constant 0 : index
    %327 = vector.load %arg7[%c1_153, %c0_154, %c0_155] : memref<2x128x256xf32, #tpu.memory_space<vmem>>, vector<1x128x256xf32>
    %328 = vector.shape_cast %327 : vector<1x128x256xf32> to vector<128x256xf32>
    %cst_156 = arith.constant dense<0.000000e+00> : vector<16x256xf32>
    %329 = tpu.matmul %326, %328, %cst_156 {dimension_numbers = #tpu.dot_dimension_numbers<[1], [0], [0], [1], [0, 0, 1, 1], [], []>} : vector<16x128xf32>, vector<128x256xf32>, vector<16x256xf32> -> vector<16x256xf32>
    %330 = vector.extract_strided_slice %329 {offsets = [0, 0], sizes = [16, 128], strides = [1, 1]} : vector<16x256xf32> to vector<16x128xf32>
    %331 = vector.extract_strided_slice %329 {offsets = [0, 128], sizes = [16, 128], strides = [1, 1]} : vector<16x256xf32> to vector<16x128xf32>
    %332 = tpu.iota {dimensions = array<i32: 0>} : vector<32x16xi32>
    %333 = tpu.iota {dimensions = array<i32: 1>} : vector<32x16xi32>
    %c2_i32_157 = arith.constant 2 : i32
    %334 = vector.broadcast %c2_i32_157 : i32 to vector<32x16xi32>
    %335 = arith.muli %334, %333 : vector<32x16xi32>
    %336 = arith.cmpi eq, %332, %335 : vector<32x16xi32>
    %337 = arith.extui %336 : vector<32x16xi1> to vector<32x16xi32>
    %338 = arith.sitofp %337 : vector<32x16xi32> to vector<32x16xf32>
    %cst_158 = arith.constant dense<0.000000e+00> : vector<32x128xf32>
    %339 = tpu.matmul %338, %330, %cst_158 {dimension_numbers = #tpu.dot_dimension_numbers<[1], [0], [0], [1], [0, 0, 1, 1], [], []>} : vector<32x16xf32>, vector<16x128xf32>, vector<32x128xf32> -> vector<32x128xf32>
    %c2_i32_159 = arith.constant 2 : i32
    %340 = vector.broadcast %c2_i32_159 : i32 to vector<32x16xi32>
    %341 = arith.muli %340, %333 : vector<32x16xi32>
    %c1_i32_160 = arith.constant 1 : i32
    %342 = vector.broadcast %c1_i32_160 : i32 to vector<32x16xi32>
    %343 = arith.addi %341, %342 : vector<32x16xi32>
    %344 = arith.cmpi eq, %332, %343 : vector<32x16xi32>
    %345 = arith.extui %344 : vector<32x16xi1> to vector<32x16xi32>
    %346 = arith.sitofp %345 : vector<32x16xi32> to vector<32x16xf32>
    %cst_161 = arith.constant dense<0.000000e+00> : vector<32x128xf32>
    %347 = tpu.matmul %346, %331, %cst_161 {dimension_numbers = #tpu.dot_dimension_numbers<[1], [0], [0], [1], [0, 0, 1, 1], [], []>} : vector<32x16xf32>, vector<16x128xf32>, vector<32x128xf32> -> vector<32x128xf32>
    %348 = arith.addf %339, %347 : vector<32x128xf32>
    %349 = arith.addf %82, %348 : vector<32x128xf32>
    %350 = tpu.iota {dimensions = array<i32: 0>} : vector<32x128xi32>
    %cst_162 = arith.constant 0.000000e+00 : f32
    %351 = vector.broadcast %cst_162 : f32 to vector<1x128xf32>
    %352 = vector.extract_strided_slice %349 {offsets = [0, 0], sizes = [31, 128], strides = [1, 1]} : vector<32x128xf32> to vector<31x128xf32>
    %353 = tpu.concatenate %351, %352 in 0 : vector<1x128xf32>, vector<31x128xf32> -> vector<32x128xf32>
    %c15_i32_163 = arith.constant 15 : i32
    %354 = vector.broadcast %c15_i32_163 : i32 to vector<32x128xi32>
    %355 = arith.andi %350, %354 : vector<32x128xi32>
    %c0_i32_164 = arith.constant 0 : i32
    %356 = vector.broadcast %c0_i32_164 : i32 to vector<32x128xi32>
    %357 = arith.cmpi eq, %355, %356 : vector<32x128xi32>
    %cst_165 = arith.constant 0.000000e+00 : f32
    %358 = vector.broadcast %cst_165 : f32 to vector<32x128xf32>
    %359 = arith.select %357, %358, %353 : vector<32x128xi1>, vector<32x128xf32>
    %360 = vector.extract_strided_slice %349 {offsets = [1, 0], sizes = [31, 128], strides = [1, 1]} : vector<32x128xf32> to vector<31x128xf32>
    %361 = tpu.concatenate %360, %351 in 0 : vector<31x128xf32>, vector<1x128xf32> -> vector<32x128xf32>
    %c15_i32_166 = arith.constant 15 : i32
    %362 = vector.broadcast %c15_i32_166 : i32 to vector<32x128xi32>
    %363 = arith.andi %350, %362 : vector<32x128xi32>
    %c15_i32_167 = arith.constant 15 : i32
    %364 = vector.broadcast %c15_i32_167 : i32 to vector<32x128xi32>
    %365 = arith.cmpi eq, %363, %364 : vector<32x128xi32>
    %cst_168 = arith.constant 0.000000e+00 : f32
    %366 = vector.broadcast %cst_168 : f32 to vector<32x128xf32>
    %367 = arith.select %365, %366, %361 : vector<32x128xi1>, vector<32x128xf32>
    %368 = tpu.concatenate %359, %349, %367 in 1 : vector<32x128xf32>, vector<32x128xf32>, vector<32x128xf32> -> vector<32x384xf32>
    %c9 = arith.constant 9 : index
    %c0_169 = arith.constant 0 : index
    %c0_170 = arith.constant 0 : index
    %369 = vector.load %arg3[%c9, %c0_169, %c0_170] : memref<12x384x128xf32, #tpu.memory_space<vmem>>, vector<1x384x128xf32>
    %370 = vector.shape_cast %369 : vector<1x384x128xf32> to vector<384x128xf32>
    %cst_171 = arith.constant dense<0.000000e+00> : vector<32x128xf32>
    %371 = tpu.matmul %368, %370, %cst_171 {dimension_numbers = #tpu.dot_dimension_numbers<[1], [0], [0], [1], [0, 0, 1, 1], [], []>} : vector<32x384xf32>, vector<384x128xf32>, vector<32x128xf32> -> vector<32x128xf32>
    %c9_172 = arith.constant 9 : index
    %c0_173 = arith.constant 0 : index
    %c0_174 = arith.constant 0 : index
    %372 = vector.load %arg4[%c9_172, %c0_173, %c0_174] : memref<12x1x128xf32, #tpu.memory_space<vmem>>, vector<1x1x128xf32>
    %373 = vector.shape_cast %372 : vector<1x1x128xf32> to vector<1x128xf32>
    %374 = vector.broadcast %373 : vector<1x128xf32> to vector<32x128xf32>
    %375 = arith.addf %371, %374 : vector<32x128xf32>
    %cst_175 = arith.constant 0.000000e+00 : f32
    %376 = vector.broadcast %cst_175 : f32 to vector<32x128xf32>
    %377 = arith.maximumf %375, %376 : vector<32x128xf32>
    %378 = tpu.iota {dimensions = array<i32: 0>} : vector<32x128xi32>
    %cst_176 = arith.constant 0.000000e+00 : f32
    %379 = vector.broadcast %cst_176 : f32 to vector<1x128xf32>
    %380 = vector.extract_strided_slice %377 {offsets = [0, 0], sizes = [31, 128], strides = [1, 1]} : vector<32x128xf32> to vector<31x128xf32>
    %381 = tpu.concatenate %379, %380 in 0 : vector<1x128xf32>, vector<31x128xf32> -> vector<32x128xf32>
    %c15_i32_177 = arith.constant 15 : i32
    %382 = vector.broadcast %c15_i32_177 : i32 to vector<32x128xi32>
    %383 = arith.andi %378, %382 : vector<32x128xi32>
    %c0_i32_178 = arith.constant 0 : i32
    %384 = vector.broadcast %c0_i32_178 : i32 to vector<32x128xi32>
    %385 = arith.cmpi eq, %383, %384 : vector<32x128xi32>
    %cst_179 = arith.constant 0.000000e+00 : f32
    %386 = vector.broadcast %cst_179 : f32 to vector<32x128xf32>
    %387 = arith.select %385, %386, %381 : vector<32x128xi1>, vector<32x128xf32>
    %388 = vector.extract_strided_slice %377 {offsets = [1, 0], sizes = [31, 128], strides = [1, 1]} : vector<32x128xf32> to vector<31x128xf32>
    %389 = tpu.concatenate %388, %379 in 0 : vector<31x128xf32>, vector<1x128xf32> -> vector<32x128xf32>
    %c15_i32_180 = arith.constant 15 : i32
    %390 = vector.broadcast %c15_i32_180 : i32 to vector<32x128xi32>
    %391 = arith.andi %378, %390 : vector<32x128xi32>
    %c15_i32_181 = arith.constant 15 : i32
    %392 = vector.broadcast %c15_i32_181 : i32 to vector<32x128xi32>
    %393 = arith.cmpi eq, %391, %392 : vector<32x128xi32>
    %cst_182 = arith.constant 0.000000e+00 : f32
    %394 = vector.broadcast %cst_182 : f32 to vector<32x128xf32>
    %395 = arith.select %393, %394, %389 : vector<32x128xi1>, vector<32x128xf32>
    %396 = tpu.concatenate %387, %377, %395 in 1 : vector<32x128xf32>, vector<32x128xf32>, vector<32x128xf32> -> vector<32x384xf32>
    %c10 = arith.constant 10 : index
    %c0_183 = arith.constant 0 : index
    %c0_184 = arith.constant 0 : index
    %397 = vector.load %arg3[%c10, %c0_183, %c0_184] : memref<12x384x128xf32, #tpu.memory_space<vmem>>, vector<1x384x128xf32>
    %398 = vector.shape_cast %397 : vector<1x384x128xf32> to vector<384x128xf32>
    %cst_185 = arith.constant dense<0.000000e+00> : vector<32x128xf32>
    %399 = tpu.matmul %396, %398, %cst_185 {dimension_numbers = #tpu.dot_dimension_numbers<[1], [0], [0], [1], [0, 0, 1, 1], [], []>} : vector<32x384xf32>, vector<384x128xf32>, vector<32x128xf32> -> vector<32x128xf32>
    %c10_186 = arith.constant 10 : index
    %c0_187 = arith.constant 0 : index
    %c0_188 = arith.constant 0 : index
    %400 = vector.load %arg4[%c10_186, %c0_187, %c0_188] : memref<12x1x128xf32, #tpu.memory_space<vmem>>, vector<1x1x128xf32>
    %401 = vector.shape_cast %400 : vector<1x1x128xf32> to vector<1x128xf32>
    %402 = vector.broadcast %401 : vector<1x128xf32> to vector<32x128xf32>
    %403 = arith.addf %399, %402 : vector<32x128xf32>
    %404 = arith.addf %403, %349 : vector<32x128xf32>
    %405 = tpu.iota {dimensions = array<i32: 0>} : vector<32x128xi32>
    %cst_189 = arith.constant 0.000000e+00 : f32
    %406 = vector.broadcast %cst_189 : f32 to vector<1x128xf32>
    %407 = vector.extract_strided_slice %404 {offsets = [0, 0], sizes = [31, 128], strides = [1, 1]} : vector<32x128xf32> to vector<31x128xf32>
    %408 = tpu.concatenate %406, %407 in 0 : vector<1x128xf32>, vector<31x128xf32> -> vector<32x128xf32>
    %c15_i32_190 = arith.constant 15 : i32
    %409 = vector.broadcast %c15_i32_190 : i32 to vector<32x128xi32>
    %410 = arith.andi %405, %409 : vector<32x128xi32>
    %c0_i32_191 = arith.constant 0 : i32
    %411 = vector.broadcast %c0_i32_191 : i32 to vector<32x128xi32>
    %412 = arith.cmpi eq, %410, %411 : vector<32x128xi32>
    %cst_192 = arith.constant 0.000000e+00 : f32
    %413 = vector.broadcast %cst_192 : f32 to vector<32x128xf32>
    %414 = arith.select %412, %413, %408 : vector<32x128xi1>, vector<32x128xf32>
    %415 = vector.extract_strided_slice %404 {offsets = [1, 0], sizes = [31, 128], strides = [1, 1]} : vector<32x128xf32> to vector<31x128xf32>
    %416 = tpu.concatenate %415, %406 in 0 : vector<31x128xf32>, vector<1x128xf32> -> vector<32x128xf32>
    %c15_i32_193 = arith.constant 15 : i32
    %417 = vector.broadcast %c15_i32_193 : i32 to vector<32x128xi32>
    %418 = arith.andi %405, %417 : vector<32x128xi32>
    %c15_i32_194 = arith.constant 15 : i32
    %419 = vector.broadcast %c15_i32_194 : i32 to vector<32x128xi32>
    %420 = arith.cmpi eq, %418, %419 : vector<32x128xi32>
    %cst_195 = arith.constant 0.000000e+00 : f32
    %421 = vector.broadcast %cst_195 : f32 to vector<32x128xf32>
    %422 = arith.select %420, %421, %416 : vector<32x128xi1>, vector<32x128xf32>
    %423 = tpu.concatenate %414, %404, %422 in 1 : vector<32x128xf32>, vector<32x128xf32>, vector<32x128xf32> -> vector<32x384xf32>
    %c11 = arith.constant 11 : index
    %c0_196 = arith.constant 0 : index
    %c0_197 = arith.constant 0 : index
    %424 = vector.load %arg3[%c11, %c0_196, %c0_197] : memref<12x384x128xf32, #tpu.memory_space<vmem>>, vector<1x384x128xf32>
    %425 = vector.shape_cast %424 : vector<1x384x128xf32> to vector<384x128xf32>
    %cst_198 = arith.constant dense<0.000000e+00> : vector<32x128xf32>
    %426 = tpu.matmul %423, %425, %cst_198 {dimension_numbers = #tpu.dot_dimension_numbers<[1], [0], [0], [1], [0, 0, 1, 1], [], []>} : vector<32x384xf32>, vector<384x128xf32>, vector<32x128xf32> -> vector<32x128xf32>
    %c11_199 = arith.constant 11 : index
    %c0_200 = arith.constant 0 : index
    %c0_201 = arith.constant 0 : index
    %427 = vector.load %arg4[%c11_199, %c0_200, %c0_201] : memref<12x1x128xf32, #tpu.memory_space<vmem>>, vector<1x1x128xf32>
    %428 = vector.shape_cast %427 : vector<1x1x128xf32> to vector<1x128xf32>
    %429 = vector.broadcast %428 : vector<1x128xf32> to vector<32x128xf32>
    %430 = arith.addf %426, %429 : vector<32x128xf32>
    %431 = arith.mulf %1, %430 : vector<32x128xf32>
    %cst_202 = arith.constant 1.000000e+00 : f32
    %432 = vector.broadcast %cst_202 : f32 to vector<32x128xf32>
    %433 = arith.subf %432, %1 : vector<32x128xf32>
    %434 = arith.mulf %433, %0 : vector<32x128xf32>
    %435 = arith.addf %431, %434 : vector<32x128xf32>
    %c0_203 = arith.constant 0 : index
    %c0_204 = arith.constant 0 : index
    %436 = vector.load %arg8[%c0_203, %c0_204] : memref<32x128xf32, #tpu.memory_space<vmem>>, vector<32x128xf32>
    tpu.vector_store %arg8[%c0_203, %c0_204], %430 {strides = array<i32>} : memref<32x128xf32, #tpu.memory_space<vmem>>, vector<32x128xf32>,
    %c0_205 = arith.constant 0 : index
    %c0_206 = arith.constant 0 : index
    %437 = vector.load %arg9[%c0_205, %c0_206] : memref<32x128xf32, #tpu.memory_space<vmem>>, vector<32x128xf32>
    tpu.vector_store %arg9[%c0_205, %c0_206], %435 {strides = array<i32>} : memref<32x128xf32, #tpu.memory_space<vmem>>, vector<32x128xf32>,
    return
  }
  func.func @transform_0(%arg0: i32) -> (i32, i32) {
    %c0_i32 = arith.constant 0 : i32
    %c0_i32_0 = arith.constant 0 : i32
    return %arg0, %c0_i32 : i32, i32
  }
  func.func @transform_1(%arg0: i32) -> (i32, i32) {
    %c0_i32 = arith.constant 0 : i32
    %c0_i32_0 = arith.constant 0 : i32
    return %arg0, %c0_i32 : i32, i32
  }
  func.func @transform_2(%arg0: i32) -> (i32, i32, i32) {
    %c0_i32 = arith.constant 0 : i32
    %c0_i32_0 = arith.constant 0 : i32
    %c0_i32_1 = arith.constant 0 : i32
    %c0_i32_2 = arith.constant 0 : i32
    return %c0_i32, %c0_i32_0, %c0_i32_1 : i32, i32, i32
  }
  func.func @transform_3(%arg0: i32) -> (i32, i32, i32) {
    %c0_i32 = arith.constant 0 : i32
    %c0_i32_0 = arith.constant 0 : i32
    %c0_i32_1 = arith.constant 0 : i32
    %c0_i32_2 = arith.constant 0 : i32
    return %c0_i32, %c0_i32_0, %c0_i32_1 : i32, i32, i32
  }
  func.func @transform_4(%arg0: i32) -> (i32, i32, i32) {
    %c0_i32 = arith.constant 0 : i32
    %c0_i32_0 = arith.constant 0 : i32
    %c0_i32_1 = arith.constant 0 : i32
    %c0_i32_2 = arith.constant 0 : i32
    return %c0_i32, %c0_i32_0, %c0_i32_1 : i32, i32, i32
  }
  func.func @transform_5(%arg0: i32) -> (i32, i32, i32) {
    %c0_i32 = arith.constant 0 : i32
    %c0_i32_0 = arith.constant 0 : i32
    %c0_i32_1 = arith.constant 0 : i32
    %c0_i32_2 = arith.constant 0 : i32
    return %c0_i32, %c0_i32_0, %c0_i32_1 : i32, i32, i32
  }
  func.func @transform_6(%arg0: i32) -> (i32, i32, i32) {
    %c0_i32 = arith.constant 0 : i32
    %c0_i32_0 = arith.constant 0 : i32
    %c0_i32_1 = arith.constant 0 : i32
    %c0_i32_2 = arith.constant 0 : i32
    return %c0_i32, %c0_i32_0, %c0_i32_1 : i32, i32, i32
  }
  func.func @transform_7(%arg0: i32) -> (i32, i32) {
    %c0_i32 = arith.constant 0 : i32
    %c0_i32_0 = arith.constant 0 : i32
    return %arg0, %c0_i32 : i32, i32
  }
  func.func @transform_8(%arg0: i32) -> (i32, i32) {
    %c0_i32 = arith.constant 0 : i32
    %c0_i32_0 = arith.constant 0 : i32
    return %arg0, %c0_i32 : i32, i32
  }
}

</mosaic_0001>

<llo_original>
// kernel: tile.97
$region0: #{tile.97}
  #allocation2 [shape = 's32[1]{0}', space=sflag, size = 0x4, scoped, tag = 'scoped memory for tile.97']
  %s0 = inlined_call_operand.hbm [shape: f32[32], index: 0, kind: input, shape index: {}]
  %s1 = inlined_call_operand.vmem [shape: f32[4,32], index: 1, kind: output, shape index: {}]
  $region1: #{tile.97} parent=0
    #allocation0 [shape = 'u8[512]{0}', space=vmem, size = 0x400, scoped, tag = 'operand span for operand 0']
    #allocation1 [shape = 's32[1]{0}', space=sflag, size = 0x4, scoped, tag = 'scoped memory for tile.97']
    %2 = vsyncpa [#allocation1], 0
    // Predicated region
    $region2: #{tile.97} parent=1 // pred_check
      _
    $region3: #{tile.97} parent=1 // pred_check_branch
      %4 = sbr.rel (0) target = $region5
    $region4: #{tile.97} parent=1 // pred_region
      %s6 = ssub.s32 16, 16
      %7 = vsyncadd [#allocation1], %s6
      %s9 = sshll.u32 [#allocation0], 4
      %s10 = int_to_ptr.vmem [resolvable:$true] %s9
      %12 = dma.hbm_to_vmem [thread:$0]  %s0, 16, %s10, [#allocation1]
    $region5: #{tile.97} parent=1 // pred_fallthru
      _
    // Predicated region
    $region6: #{tile.97} parent=1 // pred_check
      _
    $region7: #{tile.97} parent=1 // pred_check_branch
      %14 = sbr.rel (0) target = $region9
    $region8: #{tile.97} parent=1 // pred_region
      %15 = dma.done [#allocation1], 16
    $region9: #{tile.97} parent=1 // pred_fallthru
      _
    %v16 = vld [vmem:[#allocation0] ss:$0 sm:$0xff]
    %17 = vst [vmem:[%s1] sm:$0xf] %v16
    %18 = vsyncpa [#allocation1], 1

// kernel: tile.109
$region0: #{tile.109}
  #allocation2 [shape = 's32[1]{0}', space=sflag, size = 0x4, scoped, tag = 'scoped memory for tile.109']
  %s0 = inlined_call_operand.hbm [shape: f32[16], index: 0, kind: input, shape index: {}]
  %s1 = inlined_call_operand.vmem [shape: f32[8,16], index: 1, kind: output, shape index: {}]
  $region1: #{tile.109} parent=0
    #allocation0 [shape = 'u8[512]{0}', space=vmem, size = 0x400, scoped, tag = 'operand span for operand 0']
    #allocation1 [shape = 's32[1]{0}', space=sflag, size = 0x4, scoped, tag = 'scoped memory for tile.109']
    %2 = vsyncpa [#allocation1], 0
    // Predicated region
    $region2: #{tile.109} parent=1 // pred_check
      _
    $region3: #{tile.109} parent=1 // pred_check_branch
      %4 = sbr.rel (0) target = $region5
    $region4: #{tile.109} parent=1 // pred_region
      %s6 = ssub.s32 16, 16
      %7 = vsyncadd [#allocation1], %s6
      %s9 = sshll.u32 [#allocation0], 4
      %s10 = int_to_ptr.vmem [resolvable:$true] %s9
      %12 = dma.hbm_to_vmem [thread:$0]  %s0, 16, %s10, [#allocation1]
    $region5: #{tile.109} parent=1 // pred_fallthru
      _
    // Predicated region
    $region6: #{tile.109} parent=1 // pred_check
      _
    $region7: #{tile.109} parent=1 // pred_check_branch
      %14 = sbr.rel (0) target = $region9
    $region8: #{tile.109} parent=1 // pred_region
      %15 = dma.done [#allocation1], 16
    $region9: #{tile.109} parent=1 // pred_fallthru
      _
    %v16 = vld [vmem:[#allocation0] ss:$0 sm:$0xff]
    %17 = vst [vmem:[%s1] sm:$0xff] %v16
    %18 = vsyncpa [#allocation1], 1

// kernel: tile.133
$region0: #{tile.133}
  %s0 = inlined_call_operand.vmem [shape: f32[8,16], index: 0, kind: input, shape index: {}]
  %s1 = inlined_call_operand.vmem [shape: f32[1,1,128], index: 1, kind: output, shape index: {}]
  $region1: #{tile.133} parent=0
    #allocation0 [shape = 'u8[4096]{0}', space=vmem, size = 0x1000, scoped, tag = 'scoped mem for output reshape']
    %v2 = vld [vmem:[%s0] sm:$0x1]
    %vm3 = vcmask 130048
    %4 = vst.msk [vmem:[#allocation0] sm:$0x1] %vm3, %v2
    %s5 = scalar_lea.vmem %s0, 7
    %v6 = vld [vmem:[%s5] sm:$0x1]
    %7 = vrot.lane.b32.xlu0 %v6, 112
    %v8 = vpop.permute.xlu0 %7
    %vm9 = vcmask 1048448
    %10 = vst.msk [vmem:[#allocation0] sm:$0x1] %vm9, %v8
    %s11 = scalar_lea.vmem %s0, 6
    %v12 = vld [vmem:[%s11] sm:$0x1]
    %13 = vrot.lane.b32.xlu0 %v12, 96
    %v14 = vpop.permute.xlu0 %13
    %vm15 = vcmask 917248
    %16 = vst.msk [vmem:[#allocation0] sm:$0x1] %vm15, %v14
    %s17 = scalar_lea.vmem %s0, 5
    %v18 = vld [vmem:[%s17] sm:$0x1]
    %19 = vrot.lane.b32.xlu0 %v18, 80
    %v20 = vpop.permute.xlu0 %19
    %vm21 = vcmask 786048
    %22 = vst.msk [vmem:[#allocation0] sm:$0x1] %vm21, %v20
    %s23 = scalar_lea.vmem %s0, 4
    %v24 = vld [vmem:[%s23] sm:$0x1]
    %25 = vrot.lane.b32.xlu0 %v24, 64
    %v26 = vpop.permute.xlu0 %25
    %vm27 = vcmask 654848
    %28 = vst.msk [vmem:[#allocation0] sm:$0x1] %vm27, %v26
    %s29 = scalar_lea.vmem %s0, 3
    %v30 = vld [vmem:[%s29] sm:$0x1]
    %31 = vrot.lane.b32.xlu0 %v30, 48
    %v32 = vpop.permute.xlu0 %31
    %vm33 = vcmask 523648
    %34 = vst.msk [vmem:[#allocation0] sm:$0x1] %vm33, %v32
    %s35 = scalar_lea.vmem %s0, 2
    %v36 = vld [vmem:[%s35] sm:$0x1]
    %37 = vrot.lane.b32.xlu0 %v36, 32
    %v38 = vpop.permute.xlu0 %37
    %vm39 = vcmask 392448
    %40 = vst.msk [vmem:[#allocation0] sm:$0x1] %vm39, %v38
    %s41 = scalar_lea.vmem %s0, 1
    %v42 = vld [vmem:[%s41] sm:$0x1]
    %43 = vrot.lane.b32.xlu0 %v42, 16
    %v44 = vpop.permute.xlu0 %43
    %vm45 = vcmask 261248
    %46 = vst.msk [vmem:[#allocation0] sm:$0x1] %vm45, %v44
    %s48 = sshllo.u32 0, 1
    %v50 = vld [vmem:[#allocation0] sm:%s48]
    %s51 = sshllo.u32 0, 1
    %52 = vst [vmem:[%s1] sm:%s51] %v50

// kernel: tile.139
$region0: #{tile.139}
  %s0 = inlined_call_operand.vmem [shape: f32[4,32], index: 0, kind: input, shape index: {}]
  %s1 = inlined_call_operand.vmem [shape: f32[1,1,128], index: 1, kind: output, shape index: {}]
  $region1: #{tile.139} parent=0
    #allocation0 [shape = 'u8[4096]{0}', space=vmem, size = 0x1000, scoped, tag = 'scoped mem for output reshape']
    #allocation1 [shape = 'u8[4096]{0}', space=vmem, size = 0x1000, scoped, tag = 'scoped mem for input reshape']
    %s3 = sshllo.u32 0, 4
    %v4 = vld [vmem:[%s0] sm:%s3]
    %5 = vst [vmem:[#allocation1] sm:%s3] %v4
    %v6 = vld [vmem:[#allocation1] sm:$0x1]
    %vm7 = vcmask 261120
    %8 = vst.msk [vmem:[#allocation0] sm:$0x1] %vm7, %v6
    %s9 = scalar_lea.vmem [#allocation1], 3
    %v10 = vld [vmem:[%s9] sm:$0x1]
    %11 = vrot.lane.b32.xlu0 %v10, 96
    %v12 = vpop.permute.xlu0 %11
    %vm13 = vcmask 1048320
    %14 = vst.msk [vmem:[#allocation0] sm:$0x1] %vm13, %v12
    %s15 = scalar_lea.vmem [#allocation1], 2
    %v16 = vld [vmem:[%s15] sm:$0x1]
    %17 = vrot.lane.b32.xlu0 %v16, 64
    %v18 = vpop.permute.xlu0 %17
    %vm19 = vcmask 785920
    %20 = vst.msk [vmem:[#allocation0] sm:$0x1] %vm19, %v18
    %s21 = scalar_lea.vmem [#allocation1], 1
    %v22 = vld [vmem:[%s21] sm:$0x1]
    %23 = vrot.lane.b32.xlu0 %v22, 32
    %v24 = vpop.permute.xlu0 %23
    %vm25 = vcmask 523520
    %26 = vst.msk [vmem:[#allocation0] sm:$0x1] %vm25, %v24
    %s28 = sshllo.u32 0, 1
    %v30 = vld [vmem:[#allocation0] sm:%s28]
    %s31 = sshllo.u32 0, 1
    %32 = vst [vmem:[%s1] sm:%s31] %v30

// kernel: tile.125
$region0: #{tile.125}
  #allocation0 [shape = 's32[1]{0}', space=sflag, size = 0x4, scoped, tag = 'scoped memory for tile.125']
  %s0 = inlined_call_operand.vmem [shape: f32[8], index: 0, kind: input, shape index: {}]
  %s1 = inlined_call_operand.vmem [shape: f32[16,8], index: 1, kind: output, shape index: {}]
  // Predicated region
  $region2: #{tile.125} parent=0 // pred_check
    _
  $region3: #{tile.125} parent=0 // pred_check_branch
    %3 = sbr.rel (0) target = $region5
  $region4: #{tile.125} parent=0 // pred_region
    _
  $region5: #{tile.125} parent=0 // pred_fallthru
    _
  %v4 = vld [vmem:[%s0] ss:$0 sm:$0xff]
  %5 = vst [vmem:[%s1] sm:$0xff] %v4
  %s6 = scalar_lea.vmem %s1, 8
  %7 = vst [vmem:[%s6] sm:$0xff] %v4

// kernel: tile.137
$region0: #{tile.137}
  %s0 = inlined_call_operand.vmem [shape: f32[16,8], index: 0, kind: input, shape index: {}]
  %s1 = inlined_call_operand.vmem [shape: f32[1,1,128], index: 1, kind: output, shape index: {}]
  $region1: #{tile.137} parent=0
    #allocation0 [shape = 'u8[4096]{0}', space=vmem, size = 0x1000, scoped, tag = 'scoped mem for output reshape']
    %v2 = vld [vmem:[%s0] sm:$0x1]
    %vm3 = vcmask 64512
    %4 = vst.msk [vmem:[#allocation0] sm:$0x1] %vm3, %v2
    %s5 = scalar_lea.vmem %s0, 15
    %v6 = vld [vmem:[%s5] sm:$0x1]
    %7 = vrot.lane.b32.xlu0 %v6, 120
    %v8 = vpop.permute.xlu0 %7
    %vm9 = vcmask 1048512
    %10 = vst.msk [vmem:[#allocation0] sm:$0x1] %vm9, %v8
    %s11 = scalar_lea.vmem %s0, 14
    %v12 = vld [vmem:[%s11] sm:$0x1]
    %13 = vrot.lane.b32.xlu0 %v12, 112
    %v14 = vpop.permute.xlu0 %13
    %vm15 = vcmask 982912
    %16 = vst.msk [vmem:[#allocation0] sm:$0x1] %vm15, %v14
    %s17 = scalar_lea.vmem %s0, 13
    %v18 = vld [vmem:[%s17] sm:$0x1]
    %19 = vrot.lane.b32.xlu0 %v18, 104
    %v20 = vpop.permute.xlu0 %19
    %vm21 = vcmask 917312
    %22 = vst.msk [vmem:[#allocation0] sm:$0x1] %vm21, %v20
    %s23 = scalar_lea.vmem %s0, 12
    %v24 = vld [vmem:[%s23] sm:$0x1]
    %25 = vrot.lane.b32.xlu0 %v24, 96
    %v26 = vpop.permute.xlu0 %25
    %vm27 = vcmask 851712
    %28 = vst.msk [vmem:[#allocation0] sm:$0x1] %vm27, %v26
    %s29 = scalar_lea.vmem %s0, 11
    %v30 = vld [vmem:[%s29] sm:$0x1]
    %31 = vrot.lane.b32.xlu0 %v30, 88
    %v32 = vpop.permute.xlu0 %31
    %vm33 = vcmask 786112
    %34 = vst.msk [vmem:[#allocation0] sm:$0x1] %vm33, %v32
    %s35 = scalar_lea.vmem %s0, 10
    %v36 = vld [vmem:[%s35] sm:$0x1]
    %37 = vrot.lane.b32.xlu0 %v36, 80
    %v38 = vpop.permute.xlu0 %37
    %vm39 = vcmask 720512
    %40 = vst.msk [vmem:[#allocation0] sm:$0x1] %vm39, %v38
    %s41 = scalar_lea.vmem %s0, 9
    %v42 = vld [vmem:[%s41] sm:$0x1]
    %43 = vrot.lane.b32.xlu0 %v42, 72
    %v44 = vpop.permute.xlu0 %43
    %vm45 = vcmask 654912
    %46 = vst.msk [vmem:[#allocation0] sm:$0x1] %vm45, %v44
    %s47 = scalar_lea.vmem %s0, 8
    %v48 = vld [vmem:[%s47] sm:$0x1]
    %49 = vrot.lane.b32.xlu0 %v48, 64
    %v50 = vpop.permute.xlu0 %49
    %vm51 = vcmask 589312
    %52 = vst.msk [vmem:[#allocation0] sm:$0x1] %vm51, %v50
    %s53 = scalar_lea.vmem %s0, 7
    %v54 = vld [vmem:[%s53] sm:$0x1]
    %55 = vrot.lane.b32.xlu0 %v54, 56
    %v56 = vpop.permute.xlu0 %55
    %vm57 = vcmask 523712
    %58 = vst.msk [vmem:[#allocation0] sm:$0x1] %vm57, %v56
    %s59 = scalar_lea.vmem %s0, 6
    %v60 = vld [vmem:[%s59] sm:$0x1]
    %61 = vrot.lane.b32.xlu0 %v60, 48
    %v62 = vpop.permute.xlu0 %61
    %vm63 = vcmask 458112
    %64 = vst.msk [vmem:[#allocation0] sm:$0x1] %vm63, %v62
    %s65 = scalar_lea.vmem %s0, 5
    %v66 = vld [vmem:[%s65] sm:$0x1]
    %67 = vrot.lane.b32.xlu0 %v66, 40
    %v68 = vpop.permute.xlu0 %67
    %vm69 = vcmask 392512
    %70 = vst.msk [vmem:[#allocation0] sm:$0x1] %vm69, %v68
    %s71 = scalar_lea.vmem %s0, 4
    %v72 = vld [vmem:[%s71] sm:$0x1]
    %73 = vrot.lane.b32.xlu0 %v72, 32
    %v74 = vpop.permute.xlu0 %73
    %vm75 = vcmask 326912
    %76 = vst.msk [vmem:[#allocation0] sm:$0x1] %vm75, %v74
    %s77 = scalar_lea.vmem %s0, 3
    %v78 = vld [vmem:[%s77] sm:$0x1]
    %79 = vrot.lane.b32.xlu0 %v78, 24
    %v80 = vpop.permute.xlu0 %79
    %vm81 = vcmask 261312
    %82 = vst.msk [vmem:[#allocation0] sm:$0x1] %vm81, %v80
    %s83 = scalar_lea.vmem %s0, 2
    %v84 = vld [vmem:[%s83] sm:$0x1]
    %85 = vrot.lane.b32.xlu0 %v84, 16
    %v86 = vpop.permute.xlu0 %85
    %vm87 = vcmask 195712
    %88 = vst.msk [vmem:[#allocation0] sm:$0x1] %vm87, %v86
    %s89 = scalar_lea.vmem %s0, 1
    %v90 = vld [vmem:[%s89] sm:$0x1]
    %91 = vrot.lane.b32.xlu0 %v90, 8
    %v92 = vpop.permute.xlu0 %91
    %vm93 = vcmask 130112
    %94 = vst.msk [vmem:[#allocation0] sm:$0x1] %vm93, %v92
    %s96 = sshllo.u32 0, 1
    %v98 = vld [vmem:[#allocation0] sm:%s96]
    %s99 = sshllo.u32 0, 1
    %100 = vst [vmem:[%s1] sm:%s99] %v98

// kernel: tile.117
$region0: #{tile.117}
  #allocation2 [shape = 's32[1]{0}', space=sflag, size = 0x4, scoped, tag = 'scoped memory for tile.117']
  %s0 = inlined_call_operand.hbm [shape: f32[8], index: 0, kind: input, shape index: {}]
  %s1 = inlined_call_operand.vmem [shape: f32[16,8], index: 1, kind: output, shape index: {}]
  $region1: #{tile.117} parent=0
    #allocation0 [shape = 'u8[512]{0}', space=vmem, size = 0x400, scoped, tag = 'operand span for operand 0']
    #allocation1 [shape = 's32[1]{0}', space=sflag, size = 0x4, scoped, tag = 'scoped memory for tile.117']
    %2 = vsyncpa [#allocation1], 0
    // Predicated region
    $region2: #{tile.117} parent=1 // pred_check
      _
    $region3: #{tile.117} parent=1 // pred_check_branch
      %4 = sbr.rel (0) target = $region5
    $region4: #{tile.117} parent=1 // pred_region
      %s6 = ssub.s32 16, 16
      %7 = vsyncadd [#allocation1], %s6
      %s9 = sshll.u32 [#allocation0], 4
      %s10 = int_to_ptr.vmem [resolvable:$true] %s9
      %12 = dma.hbm_to_vmem [thread:$0]  %s0, 16, %s10, [#allocation1]
    $region5: #{tile.117} parent=1 // pred_fallthru
      _
    // Predicated region
    $region6: #{tile.117} parent=1 // pred_check
      _
    $region7: #{tile.117} parent=1 // pred_check_branch
      %14 = sbr.rel (0) target = $region9
    $region8: #{tile.117} parent=1 // pred_region
      %15 = dma.done [#allocation1], 16
    $region9: #{tile.117} parent=1 // pred_fallthru
      _
    %v16 = vld [vmem:[#allocation0] ss:$0 sm:$0xff]
    %17 = vst [vmem:[%s1] sm:$0xff] %v16
    %s18 = scalar_lea.vmem %s1, 8
    %19 = vst [vmem:[%s18] sm:$0xff] %v16
    %20 = vsyncpa [#allocation1], 1

// kernel: forward_pallas.1
$region0: #{forward_pallas.1}
  #allocation0 [shape = 'u32[]', space=smem, size = 0x4, offset = 0x4, fixed_abs, tag = 'smem constant byte address 0x4 - core index']
  #allocation1 [shape = 'u32[144,128]{1,0:T(1,128)}', space=vmem, size = 0x12000, scoped, tag = 'internal scratch']
  %s0 = inlined_call_operand.vmem [shape: f32[32,128], index: 0, kind: input, shape index: {}]
  %s1 = inlined_call_operand.vmem [shape: f32[32,128], index: 1, kind: input, shape index: {}]
  %s2 = inlined_call_operand.vmem [shape: f32[12,384,128], index: 2, kind: input, shape index: {}]
  %s3 = inlined_call_operand.vmem [shape: f32[12,1,128], index: 3, kind: input, shape index: {}]
  %s4 = inlined_call_operand.vmem [shape: f32[2,256,128], index: 4, kind: input, shape index: {}]
  %s5 = inlined_call_operand.vmem [shape: f32[2,1,128], index: 5, kind: input, shape index: {}]
  %s6 = inlined_call_operand.vmem [shape: f32[2,128,256], index: 6, kind: input, shape index: {}]
  %s7 = inlined_call_operand.vmem [shape: f32[32,128], index: 7, kind: output, shape index: {0}]
  %s8 = inlined_call_operand.vmem [shape: f32[32,128], index: 8, kind: output, shape index: {1}]
  %9 = xla_tuple %s7, %s8
  %s10 = sld [smem:[#allocation0]]
  $region46: #{forward_pallas.1} parent=0
    _
  %s12 = ssub.s32 1, %s10
  %s13 = scalar_select 0, %s12, %s10
  // Predicated region
  $region2: #{forward_pallas.1} parent=0 // pred_check
    _
  $region3: #{forward_pallas.1} parent=0 // pred_check_branch
    %15 = sbr.rel (0) target = $region5
  $region4: #{forward_pallas.1} parent=0 // pred_region
    _
  $region5: #{forward_pallas.1} parent=0 // pred_fallthru
    _
  // Predicated region
  $region6: #{forward_pallas.1} parent=0 // pred_check
    _
  $region7: #{forward_pallas.1} parent=0 // pred_check_branch
    %17 = sbr.rel (0) target = $region9
  $region8: #{forward_pallas.1} parent=0 // pred_region
    _
  $region9: #{forward_pallas.1} parent=0 // pred_fallthru
    _
  // Predicated region
  $region10: #{forward_pallas.1} parent=0 // pred_check
    _
  $region11: #{forward_pallas.1} parent=0 // pred_check_branch
    %19 = sbr.rel (0) target = $region13
  $region12: #{forward_pallas.1} parent=0 // pred_region
    _
  $region13: #{forward_pallas.1} parent=0 // pred_fallthru
    _
  // Predicated region
  $region14: #{forward_pallas.1} parent=0 // pred_check
    _
  $region15: #{forward_pallas.1} parent=0 // pred_check_branch
    %21 = sbr.rel (0) target = $region17
  $region16: #{forward_pallas.1} parent=0 // pred_region
    _
  $region17: #{forward_pallas.1} parent=0 // pred_fallthru
    _
  // Predicated region
  $region18: #{forward_pallas.1} parent=0 // pred_check
    _
  $region19: #{forward_pallas.1} parent=0 // pred_check_branch
    %23 = sbr.rel (0) target = $region21
  $region20: #{forward_pallas.1} parent=0 // pred_region
    _
  $region21: #{forward_pallas.1} parent=0 // pred_fallthru
    _
  // Predicated region
  $region22: #{forward_pallas.1} parent=0 // pred_check
    _
  $region23: #{forward_pallas.1} parent=0 // pred_check_branch
    %25 = sbr.rel (0) target = $region25
  $region24: #{forward_pallas.1} parent=0 // pred_region
    _
  $region25: #{forward_pallas.1} parent=0 // pred_fallthru
    _
  // Predicated region
  $region26: #{forward_pallas.1} parent=0 // pred_check
    _
  $region27: #{forward_pallas.1} parent=0 // pred_check_branch
    %27 = sbr.rel (0) target = $region29
  $region28: #{forward_pallas.1} parent=0 // pred_region
    _
  $region29: #{forward_pallas.1} parent=0 // pred_fallthru
    _
  %v28 = vld [vmem:[%s0] sm:$0xff]
  %v29 = vld [vmem:[%s0 + $0x8] sm:$0xff]
  %v30 = vld [vmem:[%s0 + $0x10] sm:$0xff]
  %v31 = vld [vmem:[%s0 + $0x18] sm:$0xff]
  %v32 = vld [vmem:[%s1] sm:$0xff]
  %v33 = vld [vmem:[%s1 + $0x8] sm:$0xff]
  %v34 = vld [vmem:[%s1 + $0x10] sm:$0xff]
  %v35 = vld [vmem:[%s1 + $0x18] sm:$0xff]
  %v36 = vlaneseq
  %v37 = vshrl.u32 %v36, 7
  %v38 = vadd.s32 %v37, 8
  %v39 = vadd.s32 %v37, 16
  %v40 = vadd.s32 %v37, 24
  %vm45 = vcmask 1040384
  %v46 = vrot.slane %v28, 7
  %v47 = vrot.slane %v29, 7
  %v48 = vsel %vm45, %v46, %v47
  %v49 = vrot.slane %v30, 7
  %v50 = vsel %vm45, %v47, %v49
  %v51 = vrot.slane %v31, 7
  %v52 = vsel %vm45, %v49, %v51
  %v57 = vsel %vm45, 0.0, %v46
  %v58 = vand.u32 %v37, 15
  %v59 = vand.u32 %v38, 15
  %v60 = vand.u32 %v39, 15
  %v61 = vand.u32 %v40, 15
  %vm62 = vcmp.eq.s32.totalorder %v58, 0
  %vm63 = vcmp.eq.s32.totalorder %v59, 0
  %vm64 = vcmp.eq.s32.totalorder %v60, 0
  %vm65 = vcmp.eq.s32.totalorder %v61, 0
  %v66 = vsel %vm62, 0.0, %v57
  %v67 = vsel %vm63, 0.0, %v48
  %v68 = vsel %vm64, 0.0, %v50
  %v69 = vsel %vm65, 0.0, %v52
  %vm70 = vcmask 1046528
  %v71 = vrot.slane %v28, 1
  %v72 = vrot.slane %v29, 1
  %v73 = vsel %vm70, %v71, %v72
  %v74 = vrot.slane %v30, 1
  %v75 = vsel %vm70, %v72, %v74
  %v76 = vrot.slane %v31, 1
  %v77 = vsel %vm70, %v74, %v76
  %v82 = vsel %vm70, %v76, 0.0
  %vm83 = vcmp.eq.s32.totalorder %v58, 15
  %vm84 = vcmp.eq.s32.totalorder %v59, 15
  %vm85 = vcmp.eq.s32.totalorder %v60, 15
  %vm86 = vcmp.eq.s32.totalorder %v61, 15
  %v87 = vsel %vm83, 0.0, %v73
  %v88 = vsel %vm84, 0.0, %v75
  %v89 = vsel %vm85, 0.0, %v77
  %v90 = vsel %vm86, 0.0, %v82
  %v91 = vld [vmem:[%s2] sm:$0xff]
  %v92 = vld [vmem:[%s2 + $0x8] sm:$0xff]
  %v93 = vld [vmem:[%s2 + $0x10] sm:$0xff]
  %v94 = vld [vmem:[%s2 + $0x18] sm:$0xff]
  %v95 = vld [vmem:[%s2 + $0x20] sm:$0xff]
  %v96 = vld [vmem:[%s2 + $0x28] sm:$0xff]
  %v97 = vld [vmem:[%s2 + $0x30] sm:$0xff]
  %v98 = vld [vmem:[%s2 + $0x38] sm:$0xff]
  %v99 = vld [vmem:[%s2 + $0x40] sm:$0xff]
  %v100 = vld [vmem:[%s2 + $0x48] sm:$0xff]
  %v101 = vld [vmem:[%s2 + $0x50] sm:$0xff]
  %v102 = vld [vmem:[%s2 + $0x58] sm:$0xff]
  %v103 = vld [vmem:[%s2 + $0x60] sm:$0xff]
  %v104 = vld [vmem:[%s2 + $0x68] sm:$0xff]
  %v105 = vld [vmem:[%s2 + $0x70] sm:$0xff]
  %v106 = vld [vmem:[%s2 + $0x78] sm:$0xff]
  %v107 = vld [vmem:[%s2 + $0x80] sm:$0xff]
  %v108 = vld [vmem:[%s2 + $0x88] sm:$0xff]
  %v109 = vld [vmem:[%s2 + $0x90] sm:$0xff]
  %v110 = vld [vmem:[%s2 + $0x98] sm:$0xff]
  %v111 = vld [vmem:[%s2 + $0xa0] sm:$0xff]
  %v112 = vld [vmem:[%s2 + $0xa8] sm:$0xff]
  %v113 = vld [vmem:[%s2 + $0xb0] sm:$0xff]
  %v114 = vld [vmem:[%s2 + $0xb8] sm:$0xff]
  %v115 = vld [vmem:[%s2 + $0xc0] sm:$0xff]
  %v116 = vld [vmem:[%s2 + $0xc8] sm:$0xff]
  %v117 = vld [vmem:[%s2 + $0xd0] sm:$0xff]
  %v118 = vld [vmem:[%s2 + $0xd8] sm:$0xff]
  %v119 = vld [vmem:[%s2 + $0xe0] sm:$0xff]
  %v120 = vld [vmem:[%s2 + $0xe8] sm:$0xff]
  %v121 = vld [vmem:[%s2 + $0xf0] sm:$0xff]
  %v122 = vld [vmem:[%s2 + $0xf8] sm:$0xff]
  %v123 = vld [vmem:[%s2 + $0x100] sm:$0xff]
  %v124 = vld [vmem:[%s2 + $0x108] sm:$0xff]
  %v125 = vld [vmem:[%s2 + $0x110] sm:$0xff]
  %v126 = vld [vmem:[%s2 + $0x118] sm:$0xff]
  %v127 = vld [vmem:[%s2 + $0x120] sm:$0xff]
  %v128 = vld [vmem:[%s2 + $0x128] sm:$0xff]
  %v129 = vld [vmem:[%s2 + $0x130] sm:$0xff]
  %v130 = vld [vmem:[%s2 + $0x138] sm:$0xff]
  %v131 = vld [vmem:[%s2 + $0x140] sm:$0xff]
  %v132 = vld [vmem:[%s2 + $0x148] sm:$0xff]
  %v133 = vld [vmem:[%s2 + $0x150] sm:$0xff]
  %v134 = vld [vmem:[%s2 + $0x158] sm:$0xff]
  %v135 = vld [vmem:[%s2 + $0x160] sm:$0xff]
  %v136 = vld [vmem:[%s2 + $0x168] sm:$0xff]
  %v137 = vld [vmem:[%s2 + $0x170] sm:$0xff]
  %v138 = vld [vmem:[%s2 + $0x178] sm:$0xff]
  %v139 = vld [vmem:[%s3] sm:$0x1]
  %v141 = vlaneseq
  %v142 = vshrl.u32 %v141, 7
  %v143 = vsub.s32 0, %v142
  %v144 = vrot.slane %v139, %v143
  %146 = vmatprep.subr.mxu0 0.0
  %147 = vmatpush1.msra.mxu0 %v91
  %148 = vmatprep.subr.mxu0 0.0
  %149 = vmatpush1.msra.mxu0 %v92
  %150 = vmatprep.subr.mxu0 0.0
  %151 = vmatpush1.msra.mxu0 %v93
  %152 = vmatprep.subr.mxu0 0.0
  %153 = vmatpush1.msra.mxu0 %v94
  %154 = vmatprep.subr.mxu0 0.0
  %155 = vmatpush1.msra.mxu0 %v95
  %156 = vmatprep.subr.mxu0 0.0
  %157 = vmatpush1.msra.mxu0 %v96
  %158 = vmatprep.subr.mxu0 0.0
  %159 = vmatpush1.msra.mxu0 %v97
  %160 = vmatprep.subr.mxu0 0.0
  %161 = vmatpush1.msra.mxu0 %v98
  %162 = vmatprep.subr.mxu0 0.0
  %163 = vmatpush1.msra.mxu0 %v99
  %164 = vmatprep.subr.mxu0 0.0
  %165 = vmatpush1.msra.mxu0 %v100
  %166 = vmatprep.subr.mxu0 0.0
  %167 = vmatpush1.msra.mxu0 %v101
  %168 = vmatprep.subr.mxu0 0.0
  %169 = vmatpush1.msra.mxu0 %v102
  %170 = vmatprep.subr.mxu0 0.0
  %171 = vmatpush1.msra.mxu0 %v103
  %172 = vmatprep.subr.mxu0 0.0
  %173 = vmatpush1.msra.mxu0 %v104
  %174 = vmatprep.subr.mxu0 0.0
  %175 = vmatpush1.msra.mxu0 %v105
  %176 = vmatprep.subr.mxu0 0.0
  %177 = vmatpush1.msra.mxu0 %v106
  %178 = vmatprep.subr.mxu0 0.0
  %179 = vmatpush1.msra.mxu0 %v107
  %180 = vmatprep.subr.mxu0 0.0
  %181 = vmatpush1.msra.mxu0 %v108
  %182 = vmatprep.subr.mxu0 0.0
  %183 = vmatpush1.msra.mxu0 %v109
  %184 = vmatprep.subr.mxu0 0.0
  %185 = vmatpush1.msra.mxu0 %v110
  %186 = vmatprep.subr.mxu0 0.0
  %187 = vmatpush1.msra.mxu0 %v111
  %188 = vmatprep.subr.mxu0 0.0
  %189 = vmatpush1.msra.mxu0 %v112
  %190 = vmatprep.subr.mxu0 0.0
  %191 = vmatpush1.msra.mxu0 %v113
  %192 = vmatprep.subr.mxu0 0.0
  %193 = vmatpush1.msra.mxu0 %v114
  %194 = vmatprep.subr.mxu0 0.0
  %195 = vmatpush1.msra.mxu0 %v115
  %196 = vmatprep.subr.mxu0 0.0
  %197 = vmatpush1.msra.mxu0 %v116
  %198 = vmatprep.subr.mxu0 0.0
  %199 = vmatpush1.msra.mxu0 %v117
  %200 = vmatprep.subr.mxu0 0.0
  %201 = vmatpush1.msra.mxu0 %v118
  %202 = vmatprep.subr.mxu0 0.0
  %203 = vmatpush1.msra.mxu0 %v119
  %204 = vmatprep.subr.mxu0 0.0
  %205 = vmatpush1.msra.mxu0 %v120
  %206 = vmatprep.subr.mxu0 0.0
  %207 = vmatpush1.msra.mxu0 %v121
  %208 = vmatprep.subr.mxu0 0.0
  %209 = vmatpush1.msra.mxu0 %v122
  %210 = vmatprep.mubr.f32.mxu0 %v28
  %211 = vmatmul.mubr.f32.gmra.mrb[0].mxu0 %v66
  %v212 = vpop.f32.mrb[0].mxu0
  %v213 = vadd.f32 %v144, %v212
  %v214 = vpop.f32.mrb[0].mxu0
  %215 = vmatprep.mubr.f32.mxu0 %v29
  %216 = vmatmul.mubr.f32.gmra.mrb[0].mxu0 %v67
  %v217 = vpop.f32.mrb[0].mxu0
  %v218 = vadd.f32 %v144, %v217
  %v219 = vpop.f32.mrb[0].mxu0
  %220 = vmatprep.mubr.f32.mxu0 %v30
  %221 = vmatmul.mubr.f32.gmra.mrb[0].mxu0 %v68
  %v222 = vpop.f32.mrb[0].mxu0
  %v223 = vadd.f32 %v144, %v222
  %v224 = vpop.f32.mrb[0].mxu0
  %225 = vmatprep.mubr.f32.mxu0 %v31
  %226 = vmatmul.mubr.f32.gmra.mrb[0].mxu0 %v69
  %v227 = vpop.f32.mrb[0].mxu0
  %v228 = vadd.f32 %v144, %v227
  %v229 = vpop.f32.mrb[0].mxu0
  %230 = vdwg.mxu0
  %231 = vmatprep.subr.mxu0 0.0
  %232 = vmatpush1.msra.mxu0 %v123
  %233 = vmatprep.subr.mxu0 0.0
  %234 = vmatpush1.msra.mxu0 %v124
  %235 = vmatprep.subr.mxu0 0.0
  %236 = vmatpush1.msra.mxu0 %v125
  %237 = vmatprep.subr.mxu0 0.0
  %238 = vmatpush1.msra.mxu0 %v126
  %239 = vmatprep.subr.mxu0 0.0
  %240 = vmatpush1.msra.mxu0 %v127
  %241 = vmatprep.subr.mxu0 0.0
  %242 = vmatpush1.msra.mxu0 %v128
  %243 = vmatprep.subr.mxu0 0.0
  %244 = vmatpush1.msra.mxu0 %v129
  %245 = vmatprep.subr.mxu0 0.0
  %246 = vmatpush1.msra.mxu0 %v130
  %247 = vmatprep.subr.mxu0 0.0
  %248 = vmatpush1.msra.mxu0 %v131
  %249 = vmatprep.subr.mxu0 0.0
  %250 = vmatpush1.msra.mxu0 %v132
  %251 = vmatprep.subr.mxu0 0.0
  %252 = vmatpush1.msra.mxu0 %v133
  %253 = vmatprep.subr.mxu0 0.0
  %254 = vmatpush1.msra.mxu0 %v134
  %255 = vmatprep.subr.mxu0 0.0
  %256 = vmatpush1.msra.mxu0 %v135
  %257 = vmatprep.subr.mxu0 0.0
  %258 = vmatpush1.msra.mxu0 %v136
  %259 = vmatprep.subr.mxu0 0.0
  %260 = vmatpush1.msra.mxu0 %v137
  %261 = vmatprep.subr.mxu0 0.0
  %262 = vmatpush1.msra.mxu0 %v138
  %263 = vmatprep.subr.mxu0 0.0
  %264 = vmatpush1.msra.mxu0 0.0
  %265 = vmatprep.subr.mxu0 0.0
  %266 = vmatpush1.msra.mxu0 0.0
  %267 = vmatprep.subr.mxu0 0.0
  %268 = vmatpush1.msra.mxu0 0.0
  %269 = vmatprep.subr.mxu0 0.0
  %270 = vmatpush1.msra.mxu0 0.0
  %271 = vmatprep.subr.mxu0 0.0
  %272 = vmatpush1.msra.mxu0 0.0
  %273 = vmatprep.subr.mxu0 0.0
  %274 = vmatpush1.msra.mxu0 0.0
  %275 = vmatprep.subr.mxu0 0.0
  %276 = vmatpush1.msra.mxu0 0.0
  %277 = vmatprep.subr.mxu0 0.0
  %278 = vmatpush1.msra.mxu0 0.0
  %279 = vmatprep.subr.mxu0 0.0
  %280 = vmatpush1.msra.mxu0 0.0
  %281 = vmatprep.subr.mxu0 0.0
  %282 = vmatpush1.msra.mxu0 0.0
  %283 = vmatprep.subr.mxu0 0.0
  %284 = vmatpush1.msra.mxu0 0.0
  %285 = vmatprep.subr.mxu0 0.0
  %286 = vmatpush1.msra.mxu0 0.0
  %287 = vmatprep.subr.mxu0 0.0
  %288 = vmatpush1.msra.mxu0 0.0
  %289 = vmatprep.subr.mxu0 0.0
  %290 = vmatpush1.msra.mxu0 0.0
  %291 = vmatprep.subr.mxu0 0.0
  %292 = vmatpush1.msra.mxu0 0.0
  %293 = vmatprep.subr.mxu0 0.0
  %294 = vmatpush1.msra.mxu0 0.0
  %295 = vmatprep.mubr.f32.mxu0 0.0
  %296 = vmatmul.mubr.f32.gmra.mrb[0].mxu0 %v87
  %v297 = vpop.f32.mrb[0].mxu0
  %v298 = vadd.f32 %v213, %v297
  %v299 = vpop.f32.mrb[0].mxu0
  %300 = vmatprep.mubr.f32.mxu0 0.0
  %301 = vmatmul.mubr.f32.gmra.mrb[0].mxu0 %v88
  %v302 = vpop.f32.mrb[0].mxu0
  %v303 = vadd.f32 %v218, %v302
  %v304 = vpop.f32.mrb[0].mxu0
  %305 = vmatprep.mubr.f32.mxu0 0.0
  %306 = vmatmul.mubr.f32.gmra.mrb[0].mxu0 %v89
  %v307 = vpop.f32.mrb[0].mxu0
  %v308 = vadd.f32 %v223, %v307
  %v309 = vpop.f32.mrb[0].mxu0
  %310 = vmatprep.mubr.f32.mxu0 0.0
  %311 = vmatmul.mubr.f32.gmra.mrb[0].mxu0 %v90
  %v312 = vpop.f32.mrb[0].mxu0
  %v313 = vadd.f32 %v228, %v312
  %v314 = vpop.f32.mrb[0].mxu0
  %315 = vdwg.mxu0
  %v320 = vrot.slane %v298, 7
  %v321 = vrot.slane %v303, 7
  %v322 = vsel %vm45, %v320, %v321
  %v323 = vrot.slane %v308, 7
  %v324 = vsel %vm45, %v321, %v323
  %v325 = vrot.slane %v313, 7
  %v326 = vsel %vm45, %v323, %v325
  %v331 = vsel %vm45, 0.0, %v320
  %v332 = vsel %vm62, 0.0, %v331
  %v333 = vsel %vm63, 0.0, %v322
  %v334 = vsel %vm64, 0.0, %v324
  %v335 = vsel %vm65, 0.0, %v326
  %v336 = vrot.slane %v298, 1
  %v337 = vrot.slane %v303, 1
  %v338 = vsel %vm70, %v336, %v337
  %v339 = vrot.slane %v308, 1
  %v340 = vsel %vm70, %v337, %v339
  %v341 = vrot.slane %v313, 1
  %v342 = vsel %vm70, %v339, %v341
  %v347 = vsel %vm70, %v341, 0.0
  %v348 = vsel %vm83, 0.0, %v338
  %v349 = vsel %vm84, 0.0, %v340
  %v350 = vsel %vm85, 0.0, %v342
  %v351 = vsel %vm86, 0.0, %v347
  %s352 = scalar_lea.vmem %s2, 384
  %v353 = vld [vmem:[%s352] sm:$0xff]
  %v354 = vld [vmem:[%s352 + $0x8] sm:$0xff]
  %v355 = vld [vmem:[%s352 + $0x10] sm:$0xff]
  %v356 = vld [vmem:[%s352 + $0x18] sm:$0xff]
  %v357 = vld [vmem:[%s352 + $0x20] sm:$0xff]
  %v358 = vld [vmem:[%s352 + $0x28] sm:$0xff]
  %v359 = vld [vmem:[%s352 + $0x30] sm:$0xff]
  %v360 = vld [vmem:[%s352 + $0x38] sm:$0xff]
  %v361 = vld [vmem:[%s352 + $0x40] sm:$0xff]
  %v362 = vld [vmem:[%s352 + $0x48] sm:$0xff]
  %v363 = vld [vmem:[%s352 + $0x50] sm:$0xff]
  %v364 = vld [vmem:[%s352 + $0x58] sm:$0xff]
  %v365 = vld [vmem:[%s352 + $0x60] sm:$0xff]
  %v366 = vld [vmem:[%s352 + $0x68] sm:$0xff]
  %v367 = vld [vmem:[%s352 + $0x70] sm:$0xff]
  %v368 = vld [vmem:[%s352 + $0x78] sm:$0xff]
  %v369 = vld [vmem:[%s352 + $0x80] sm:$0xff]
  %v370 = vld [vmem:[%s352 + $0x88] sm:$0xff]
  %v371 = vld [vmem:[%s352 + $0x90] sm:$0xff]
  %v372 = vld [vmem:[%s352 + $0x98] sm:$0xff]
  %v373 = vld [vmem:[%s352 + $0xa0] sm:$0xff]
  %v374 = vld [vmem:[%s352 + $0xa8] sm:$0xff]
  %v375 = vld [vmem:[%s352 + $0xb0] sm:$0xff]
  %v376 = vld [vmem:[%s352 + $0xb8] sm:$0xff]
  %v377 = vld [vmem:[%s352 + $0xc0] sm:$0xff]
  %v378 = vld [vmem:[%s352 + $0xc8] sm:$0xff]
  %v379 = vld [vmem:[%s352 + $0xd0] sm:$0xff]
  %v380 = vld [vmem:[%s352 + $0xd8] sm:$0xff]
  %v381 = vld [vmem:[%s352 + $0xe0] sm:$0xff]
  %v382 = vld [vmem:[%s352 + $0xe8] sm:$0xff]
  %v383 = vld [vmem:[%s352 + $0xf0] sm:$0xff]
  %v384 = vld [vmem:[%s352 + $0xf8] sm:$0xff]
  %v385 = vld [vmem:[%s352 + $0x100] sm:$0xff]
  %v386 = vld [vmem:[%s352 + $0x108] sm:$0xff]
  %v387 = vld [vmem:[%s352 + $0x110] sm:$0xff]
  %v388 = vld [vmem:[%s352 + $0x118] sm:$0xff]
  %v389 = vld [vmem:[%s352 + $0x120] sm:$0xff]
  %v390 = vld [vmem:[%s352 + $0x128] sm:$0xff]
  %v391 = vld [vmem:[%s352 + $0x130] sm:$0xff]
  %v392 = vld [vmem:[%s352 + $0x138] sm:$0xff]
  %v393 = vld [vmem:[%s352 + $0x140] sm:$0xff]
  %v394 = vld [vmem:[%s352 + $0x148] sm:$0xff]
  %v395 = vld [vmem:[%s352 + $0x150] sm:$0xff]
  %v396 = vld [vmem:[%s352 + $0x158] sm:$0xff]
  %v397 = vld [vmem:[%s352 + $0x160] sm:$0xff]
  %v398 = vld [vmem:[%s352 + $0x168] sm:$0xff]
  %v399 = vld [vmem:[%s352 + $0x170] sm:$0xff]
  %v400 = vld [vmem:[%s352 + $0x178] sm:$0xff]
  %s401 = scalar_lea.vmem %s3, 1
  %v402 = vld [vmem:[%s401] sm:$0x1]
  %v404 = vlaneseq
  %v405 = vshrl.u32 %v404, 7
  %v406 = vsub.s32 0, %v405
  %v407 = vrot.slane %v402, %v406
  %409 = vmatprep.subr.mxu0 0.0
  %410 = vmatpush1.msra.mxu0 %v353
  %411 = vmatprep.subr.mxu0 0.0
  %412 = vmatpush1.msra.mxu0 %v354
  %413 = vmatprep.subr.mxu0 0.0
  %414 = vmatpush1.msra.mxu0 %v355
  %415 = vmatprep.subr.mxu0 0.0
  %416 = vmatpush1.msra.mxu0 %v356
  %417 = vmatprep.subr.mxu0 0.0
  %418 = vmatpush1.msra.mxu0 %v357
  %419 = vmatprep.subr.mxu0 0.0
  %420 = vmatpush1.msra.mxu0 %v358
  %421 = vmatprep.subr.mxu0 0.0
  %422 = vmatpush1.msra.mxu0 %v359
  %423 = vmatprep.subr.mxu0 0.0
  %424 = vmatpush1.msra.mxu0 %v360
  %425 = vmatprep.subr.mxu0 0.0
  %426 = vmatpush1.msra.mxu0 %v361
  %427 = vmatprep.subr.mxu0 0.0
  %428 = vmatpush1.msra.mxu0 %v362
  %429 = vmatprep.subr.mxu0 0.0
  %430 = vmatpush1.msra.mxu0 %v363
  %431 = vmatprep.subr.mxu0 0.0
  %432 = vmatpush1.msra.mxu0 %v364
  %433 = vmatprep.subr.mxu0 0.0
  %434 = vmatpush1.msra.mxu0 %v365
  %435 = vmatprep.subr.mxu0 0.0
  %436 = vmatpush1.msra.mxu0 %v366
  %437 = vmatprep.subr.mxu0 0.0
  %438 = vmatpush1.msra.mxu0 %v367
  %439 = vmatprep.subr.mxu0 0.0
  %440 = vmatpush1.msra.mxu0 %v368
  %441 = vmatprep.subr.mxu0 0.0
  %442 = vmatpush1.msra.mxu0 %v369
  %443 = vmatprep.subr.mxu0 0.0
  %444 = vmatpush1.msra.mxu0 %v370
  %445 = vmatprep.subr.mxu0 0.0
  %446 = vmatpush1.msra.mxu0 %v371
  %447 = vmatprep.subr.mxu0 0.0
  %448 = vmatpush1.msra.mxu0 %v372
  %449 = vmatprep.subr.mxu0 0.0
  %450 = vmatpush1.msra.mxu0 %v373
  %451 = vmatprep.subr.mxu0 0.0
  %452 = vmatpush1.msra.mxu0 %v374
  %453 = vmatprep.subr.mxu0 0.0
  %454 = vmatpush1.msra.mxu0 %v375
  %455 = vmatprep.subr.mxu0 0.0
  %456 = vmatpush1.msra.mxu0 %v376
  %457 = vmatprep.subr.mxu0 0.0
  %458 = vmatpush1.msra.mxu0 %v377
  %459 = vmatprep.subr.mxu0 0.0
  %460 = vmatpush1.msra.mxu0 %v378
  %461 = vmatprep.subr.mxu0 0.0
  %462 = vmatpush1.msra.mxu0 %v379
  %463 = vmatprep.subr.mxu0 0.0
  %464 = vmatpush1.msra.mxu0 %v380
  %465 = vmatprep.subr.mxu0 0.0
  %466 = vmatpush1.msra.mxu0 %v381
  %467 = vmatprep.subr.mxu0 0.0
  %468 = vmatpush1.msra.mxu0 %v382
  %469 = vmatprep.subr.mxu0 0.0
  %470 = vmatpush1.msra.mxu0 %v383
  %471 = vmatprep.subr.mxu0 0.0
  %472 = vmatpush1.msra.mxu0 %v384
  %473 = vmatprep.mubr.f32.mxu0 %v298
  %474 = vmatmul.mubr.f32.gmra.mrb[0].mxu0 %v332
  %v475 = vpop.f32.mrb[0].mxu0
  %v476 = vadd.f32 %v407, %v475
  %v477 = vpop.f32.mrb[0].mxu0
  %478 = vmatprep.mubr.f32.mxu0 %v303
  %479 = vmatmul.mubr.f32.gmra.mrb[0].mxu0 %v333
  %v480 = vpop.f32.mrb[0].mxu0
  %v481 = vadd.f32 %v407, %v480
  %v482 = vpop.f32.mrb[0].mxu0
  %483 = vmatprep.mubr.f32.mxu0 %v308
  %484 = vmatmul.mubr.f32.gmra.mrb[0].mxu0 %v334
  %v485 = vpop.f32.mrb[0].mxu0
  %v486 = vadd.f32 %v407, %v485
  %v487 = vpop.f32.mrb[0].mxu0
  %488 = vmatprep.mubr.f32.mxu0 %v313
  %489 = vmatmul.mubr.f32.gmra.mrb[0].mxu0 %v335
  %v490 = vpop.f32.mrb[0].mxu0
  %v491 = vadd.f32 %v407, %v490
  %v492 = vpop.f32.mrb[0].mxu0
  %493 = vdwg.mxu0
  %494 = vmatprep.subr.mxu0 0.0
  %495 = vmatpush1.msra.mxu0 %v385
  %496 = vmatprep.subr.mxu0 0.0
  %497 = vmatpush1.msra.mxu0 %v386
  %498 = vmatprep.subr.mxu0 0.0
  %499 = vmatpush1.msra.mxu0 %v387
  %500 = vmatprep.subr.mxu0 0.0
  %501 = vmatpush1.msra.mxu0 %v388
  %502 = vmatprep.subr.mxu0 0.0
  %503 = vmatpush1.msra.mxu0 %v389
  %504 = vmatprep.subr.mxu0 0.0
  %505 = vmatpush1.msra.mxu0 %v390
  %506 = vmatprep.subr.mxu0 0.0
  %507 = vmatpush1.msra.mxu0 %v391
  %508 = vmatprep.subr.mxu0 0.0
  %509 = vmatpush1.msra.mxu0 %v392
  %510 = vmatprep.subr.mxu0 0.0
  %511 = vmatpush1.msra.mxu0 %v393
  %512 = vmatprep.subr.mxu0 0.0
  %513 = vmatpush1.msra.mxu0 %v394
  %514 = vmatprep.subr.mxu0 0.0
  %515 = vmatpush1.msra.mxu0 %v395
  %516 = vmatprep.subr.mxu0 0.0
  %517 = vmatpush1.msra.mxu0 %v396
  %518 = vmatprep.subr.mxu0 0.0
  %519 = vmatpush1.msra.mxu0 %v397
  %520 = vmatprep.subr.mxu0 0.0
  %521 = vmatpush1.msra.mxu0 %v398
  %522 = vmatprep.subr.mxu0 0.0
  %523 = vmatpush1.msra.mxu0 %v399
  %524 = vmatprep.subr.mxu0 0.0
  %525 = vmatpush1.msra.mxu0 %v400
  %526 = vmatprep.subr.mxu0 0.0
  %527 = vmatpush1.msra.mxu0 0.0
  %528 = vmatprep.subr.mxu0 0.0
  %529 = vmatpush1.msra.mxu0 0.0
  %530 = vmatprep.subr.mxu0 0.0
  %531 = vmatpush1.msra.mxu0 0.0
  %532 = vmatprep.subr.mxu0 0.0
  %533 = vmatpush1.msra.mxu0 0.0
  %534 = vmatprep.subr.mxu0 0.0
  %535 = vmatpush1.msra.mxu0 0.0
  %536 = vmatprep.subr.mxu0 0.0
  %537 = vmatpush1.msra.mxu0 0.0
  %538 = vmatprep.subr.mxu0 0.0
  %539 = vmatpush1.msra.mxu0 0.0
  %540 = vmatprep.subr.mxu0 0.0
  %541 = vmatpush1.msra.mxu0 0.0
  %542 = vmatprep.subr.mxu0 0.0
  %543 = vmatpush1.msra.mxu0 0.0
  %544 = vmatprep.subr.mxu0 0.0
  %545 = vmatpush1.msra.mxu0 0.0
  %546 = vmatprep.subr.mxu0 0.0
  %547 = vmatpush1.msra.mxu0 0.0
  %548 = vmatprep.subr.mxu0 0.0
  %549 = vmatpush1.msra.mxu0 0.0
  %550 = vmatprep.subr.mxu0 0.0
  %551 = vmatpush1.msra.mxu0 0.0
  %552 = vmatprep.subr.mxu0 0.0
  %553 = vmatpush1.msra.mxu0 0.0
  %554 = vmatprep.subr.mxu0 0.0
  %555 = vmatpush1.msra.mxu0 0.0
  %556 = vmatprep.subr.mxu0 0.0
  %557 = vmatpush1.msra.mxu0 0.0
  %558 = vmatprep.mubr.f32.mxu0 0.0
  %559 = vmatmul.mubr.f32.gmra.mrb[0].mxu0 %v348
  %v560 = vpop.f32.mrb[0].mxu0
  %v561 = vadd.f32 %v476, %v560
  %v562 = vpop.f32.mrb[0].mxu0
  %563 = vmatprep.mubr.f32.mxu0 0.0
  %564 = vmatmul.mubr.f32.gmra.mrb[0].mxu0 %v349
  %v565 = vpop.f32.mrb[0].mxu0
  %v566 = vadd.f32 %v481, %v565
  %v567 = vpop.f32.mrb[0].mxu0
  %568 = vmatprep.mubr.f32.mxu0 0.0
  %569 = vmatmul.mubr.f32.gmra.mrb[0].mxu0 %v350
  %v570 = vpop.f32.mrb[0].mxu0
  %v571 = vadd.f32 %v486, %v570
  %v572 = vpop.f32.mrb[0].mxu0
  %573 = vmatprep.mubr.f32.mxu0 0.0
  %574 = vmatmul.mubr.f32.gmra.mrb[0].mxu0 %v351
  %v575 = vpop.f32.mrb[0].mxu0
  %v576 = vadd.f32 %v491, %v575
  %v577 = vpop.f32.mrb[0].mxu0
  %578 = vdwg.mxu0
  %v579 = vmax.f32 %v561, 0.0
  %v580 = vmax.f32 %v566, 0.0
  %v581 = vmax.f32 %v571, 0.0
  %v582 = vmax.f32 %v576, 0.0
  %v587 = vrot.slane %v579, 7
  %v588 = vrot.slane %v580, 7
  %v589 = vsel %vm45, %v587, %v588
  %v590 = vrot.slane %v581, 7
  %v591 = vsel %vm45, %v588, %v590
  %v592 = vrot.slane %v582, 7
  %v593 = vsel %vm45, %v590, %v592
  %v598 = vsel %vm45, 0.0, %v587
  %v599 = vsel %vm62, 0.0, %v598
  %v600 = vsel %vm63, 0.0, %v589
  %v601 = vsel %vm64, 0.0, %v591
  %v602 = vsel %vm65, 0.0, %v593
  %v603 = vrot.slane %v579, 1
  %v604 = vrot.slane %v580, 1
  %v605 = vsel %vm70, %v603, %v604
  %v606 = vrot.slane %v581, 1
  %v607 = vsel %vm70, %v604, %v606
  %v608 = vrot.slane %v582, 1
  %v609 = vsel %vm70, %v606, %v608
  %v614 = vsel %vm70, %v608, 0.0
  %v615 = vsel %vm83, 0.0, %v605
  %v616 = vsel %vm84, 0.0, %v607
  %v617 = vsel %vm85, 0.0, %v609
  %v618 = vsel %vm86, 0.0, %v614
  %s619 = scalar_lea.vmem %s2, 768
  %v620 = vld [vmem:[%s619] sm:$0xff]
  %v621 = vld [vmem:[%s619 + $0x8] sm:$0xff]
  %v622 = vld [vmem:[%s619 + $0x10] sm:$0xff]
  %v623 = vld [vmem:[%s619 + $0x18] sm:$0xff]
  %v624 = vld [vmem:[%s619 + $0x20] sm:$0xff]
  %v625 = vld [vmem:[%s619 + $0x28] sm:$0xff]
  %v626 = vld [vmem:[%s619 + $0x30] sm:$0xff]
  %v627 = vld [vmem:[%s619 + $0x38] sm:$0xff]
  %v628 = vld [vmem:[%s619 + $0x40] sm:$0xff]
  %v629 = vld [vmem:[%s619 + $0x48] sm:$0xff]
  %v630 = vld [vmem:[%s619 + $0x50] sm:$0xff]
  %v631 = vld [vmem:[%s619 + $0x58] sm:$0xff]
  %v632 = vld [vmem:[%s619 + $0x60] sm:$0xff]
  %v633 = vld [vmem:[%s619 + $0x68] sm:$0xff]
  %v634 = vld [vmem:[%s619 + $0x70] sm:$0xff]
  %v635 = vld [vmem:[%s619 + $0x78] sm:$0xff]
  %v636 = vld [vmem:[%s619 + $0x80] sm:$0xff]
  %v637 = vld [vmem:[%s619 + $0x88] sm:$0xff]
  %v638 = vld [vmem:[%s619 + $0x90] sm:$0xff]
  %v639 = vld [vmem:[%s619 + $0x98] sm:$0xff]
  %v640 = vld [vmem:[%s619 + $0xa0] sm:$0xff]
  %v641 = vld [vmem:[%s619 + $0xa8] sm:$0xff]
  %v642 = vld [vmem:[%s619 + $0xb0] sm:$0xff]
  %v643 = vld [vmem:[%s619 + $0xb8] sm:$0xff]
  %v644 = vld [vmem:[%s619 + $0xc0] sm:$0xff]
  %v645 = vld [vmem:[%s619 + $0xc8] sm:$0xff]
  %v646 = vld [vmem:[%s619 + $0xd0] sm:$0xff]
  %v647 = vld [vmem:[%s619 + $0xd8] sm:$0xff]
  %v648 = vld [vmem:[%s619 + $0xe0] sm:$0xff]
  %v649 = vld [vmem:[%s619 + $0xe8] sm:$0xff]
  %v650 = vld [vmem:[%s619 + $0xf0] sm:$0xff]
  %v651 = vld [vmem:[%s619 + $0xf8] sm:$0xff]
  %v652 = vld [vmem:[%s619 + $0x100] sm:$0xff]
  %v653 = vld [vmem:[%s619 + $0x108] sm:$0xff]
  %v654 = vld [vmem:[%s619 + $0x110] sm:$0xff]
  %v655 = vld [vmem:[%s619 + $0x118] sm:$0xff]
  %v656 = vld [vmem:[%s619 + $0x120] sm:$0xff]
  %v657 = vld [vmem:[%s619 + $0x128] sm:$0xff]
  %v658 = vld [vmem:[%s619 + $0x130] sm:$0xff]
  %v659 = vld [vmem:[%s619 + $0x138] sm:$0xff]
  %v660 = vld [vmem:[%s619 + $0x140] sm:$0xff]
  %v661 = vld [vmem:[%s619 + $0x148] sm:$0xff]
  %v662 = vld [vmem:[%s619 + $0x150] sm:$0xff]
  %v663 = vld [vmem:[%s619 + $0x158] sm:$0xff]
  %v664 = vld [vmem:[%s619 + $0x160] sm:$0xff]
  %v665 = vld [vmem:[%s619 + $0x168] sm:$0xff]
  %v666 = vld [vmem:[%s619 + $0x170] sm:$0xff]
  %v667 = vld [vmem:[%s619 + $0x178] sm:$0xff]
  %s668 = scalar_lea.vmem %s3, 2
  %v669 = vld [vmem:[%s668] sm:$0x1]
  %v671 = vlaneseq
  %v672 = vshrl.u32 %v671, 7
  %v673 = vsub.s32 0, %v672
  %v674 = vrot.slane %v669, %v673
  %676 = vmatprep.subr.mxu0 0.0
  %677 = vmatpush1.msra.mxu0 %v620
  %678 = vmatprep.subr.mxu0 0.0
  %679 = vmatpush1.msra.mxu0 %v621
  %680 = vmatprep.subr.mxu0 0.0
  %681 = vmatpush1.msra.mxu0 %v622
  %682 = vmatprep.subr.mxu0 0.0
  %683 = vmatpush1.msra.mxu0 %v623
  %684 = vmatprep.subr.mxu0 0.0
  %685 = vmatpush1.msra.mxu0 %v624
  %686 = vmatprep.subr.mxu0 0.0
  %687 = vmatpush1.msra.mxu0 %v625
  %688 = vmatprep.subr.mxu0 0.0
  %689 = vmatpush1.msra.mxu0 %v626
  %690 = vmatprep.subr.mxu0 0.0
  %691 = vmatpush1.msra.mxu0 %v627
  %692 = vmatprep.subr.mxu0 0.0
  %693 = vmatpush1.msra.mxu0 %v628
  %694 = vmatprep.subr.mxu0 0.0
  %695 = vmatpush1.msra.mxu0 %v629
  %696 = vmatprep.subr.mxu0 0.0
  %697 = vmatpush1.msra.mxu0 %v630
  %698 = vmatprep.subr.mxu0 0.0
  %699 = vmatpush1.msra.mxu0 %v631
  %700 = vmatprep.subr.mxu0 0.0
  %701 = vmatpush1.msra.mxu0 %v632
  %702 = vmatprep.subr.mxu0 0.0
  %703 = vmatpush1.msra.mxu0 %v633
  %704 = vmatprep.subr.mxu0 0.0
  %705 = vmatpush1.msra.mxu0 %v634
  %706 = vmatprep.subr.mxu0 0.0
  %707 = vmatpush1.msra.mxu0 %v635
  %708 = vmatprep.subr.mxu0 0.0
  %709 = vmatpush1.msra.mxu0 %v636
  %710 = vmatprep.subr.mxu0 0.0
  %711 = vmatpush1.msra.mxu0 %v637
  %712 = vmatprep.subr.mxu0 0.0
  %713 = vmatpush1.msra.mxu0 %v638
  %714 = vmatprep.subr.mxu0 0.0
  %715 = vmatpush1.msra.mxu0 %v639
  %716 = vmatprep.subr.mxu0 0.0
  %717 = vmatpush1.msra.mxu0 %v640
  %718 = vmatprep.subr.mxu0 0.0
  %719 = vmatpush1.msra.mxu0 %v641
  %720 = vmatprep.subr.mxu0 0.0
  %721 = vmatpush1.msra.mxu0 %v642
  %722 = vmatprep.subr.mxu0 0.0
  %723 = vmatpush1.msra.mxu0 %v643
  %724 = vmatprep.subr.mxu0 0.0
  %725 = vmatpush1.msra.mxu0 %v644
  %726 = vmatprep.subr.mxu0 0.0
  %727 = vmatpush1.msra.mxu0 %v645
  %728 = vmatprep.subr.mxu0 0.0
  %729 = vmatpush1.msra.mxu0 %v646
  %730 = vmatprep.subr.mxu0 0.0
  %731 = vmatpush1.msra.mxu0 %v647
  %732 = vmatprep.subr.mxu0 0.0
  %733 = vmatpush1.msra.mxu0 %v648
  %734 = vmatprep.subr.mxu0 0.0
  %735 = vmatpush1.msra.mxu0 %v649
  %736 = vmatprep.subr.mxu0 0.0
  %737 = vmatpush1.msra.mxu0 %v650
  %738 = vmatprep.subr.mxu0 0.0
  %739 = vmatpush1.msra.mxu0 %v651
  %740 = vmatprep.mubr.f32.mxu0 %v579
  %741 = vmatmul.mubr.f32.gmra.mrb[0].mxu0 %v599
  %v742 = vpop.f32.mrb[0].mxu0
  %v743 = vadd.f32 %v674, %v742
  %v744 = vpop.f32.mrb[0].mxu0
  %745 = vmatprep.mubr.f32.mxu0 %v580
  %746 = vmatmul.mubr.f32.gmra.mrb[0].mxu0 %v600
  %v747 = vpop.f32.mrb[0].mxu0
  %v748 = vadd.f32 %v674, %v747
  %v749 = vpop.f32.mrb[0].mxu0
  %750 = vmatprep.mubr.f32.mxu0 %v581
  %751 = vmatmul.mubr.f32.gmra.mrb[0].mxu0 %v601
  %v752 = vpop.f32.mrb[0].mxu0
  %v753 = vadd.f32 %v674, %v752
  %v754 = vpop.f32.mrb[0].mxu0
  %755 = vmatprep.mubr.f32.mxu0 %v582
  %756 = vmatmul.mubr.f32.gmra.mrb[0].mxu0 %v602
  %v757 = vpop.f32.mrb[0].mxu0
  %v758 = vadd.f32 %v674, %v757
  %v759 = vpop.f32.mrb[0].mxu0
  %760 = vdwg.mxu0
  %761 = vmatprep.subr.mxu0 0.0
  %762 = vmatpush1.msra.mxu0 %v652
  %763 = vmatprep.subr.mxu0 0.0
  %764 = vmatpush1.msra.mxu0 %v653
  %765 = vmatprep.subr.mxu0 0.0
  %766 = vmatpush1.msra.mxu0 %v654
  %767 = vmatprep.subr.mxu0 0.0
  %768 = vmatpush1.msra.mxu0 %v655
  %769 = vmatprep.subr.mxu0 0.0
  %770 = vmatpush1.msra.mxu0 %v656
  %771 = vmatprep.subr.mxu0 0.0
  %772 = vmatpush1.msra.mxu0 %v657
  %773 = vmatprep.subr.mxu0 0.0
  %774 = vmatpush1.msra.mxu0 %v658
  %775 = vmatprep.subr.mxu0 0.0
  %776 = vmatpush1.msra.mxu0 %v659
  %777 = vmatprep.subr.mxu0 0.0
  %778 = vmatpush1.msra.mxu0 %v660
  %779 = vmatprep.subr.mxu0 0.0
  %780 = vmatpush1.msra.mxu0 %v661
  %781 = vmatprep.subr.mxu0 0.0
  %782 = vmatpush1.msra.mxu0 %v662
  %783 = vmatprep.subr.mxu0 0.0
  %784 = vmatpush1.msra.mxu0 %v663
  %785 = vmatprep.subr.mxu0 0.0
  %786 = vmatpush1.msra.mxu0 %v664
  %787 = vmatprep.subr.mxu0 0.0
  %788 = vmatpush1.msra.mxu0 %v665
  %789 = vmatprep.subr.mxu0 0.0
  %790 = vmatpush1.msra.mxu0 %v666
  %791 = vmatprep.subr.mxu0 0.0
  %792 = vmatpush1.msra.mxu0 %v667
  %793 = vmatprep.subr.mxu0 0.0
  %794 = vmatpush1.msra.mxu0 0.0
  %795 = vmatprep.subr.mxu0 0.0
  %796 = vmatpush1.msra.mxu0 0.0
  %797 = vmatprep.subr.mxu0 0.0
  %798 = vmatpush1.msra.mxu0 0.0
  %799 = vmatprep.subr.mxu0 0.0
  %800 = vmatpush1.msra.mxu0 0.0
  %801 = vmatprep.subr.mxu0 0.0
  %802 = vmatpush1.msra.mxu0 0.0
  %803 = vmatprep.subr.mxu0 0.0
  %804 = vmatpush1.msra.mxu0 0.0
  %805 = vmatprep.subr.mxu0 0.0
  %806 = vmatpush1.msra.mxu0 0.0
  %807 = vmatprep.subr.mxu0 0.0
  %808 = vmatpush1.msra.mxu0 0.0
  %809 = vmatprep.subr.mxu0 0.0
  %810 = vmatpush1.msra.mxu0 0.0
  %811 = vmatprep.subr.mxu0 0.0
  %812 = vmatpush1.msra.mxu0 0.0
  %813 = vmatprep.subr.mxu0 0.0
  %814 = vmatpush1.msra.mxu0 0.0
  %815 = vmatprep.subr.mxu0 0.0
  %816 = vmatpush1.msra.mxu0 0.0
  %817 = vmatprep.subr.mxu0 0.0
  %818 = vmatpush1.msra.mxu0 0.0
  %819 = vmatprep.subr.mxu0 0.0
  %820 = vmatpush1.msra.mxu0 0.0
  %821 = vmatprep.subr.mxu0 0.0
  %822 = vmatpush1.msra.mxu0 0.0
  %823 = vmatprep.subr.mxu0 0.0
  %824 = vmatpush1.msra.mxu0 0.0
  %825 = vmatprep.mubr.f32.mxu0 0.0
  %826 = vmatmul.mubr.f32.gmra.mrb[0].mxu0 %v615
  %v827 = vpop.f32.mrb[0].mxu0
  %v828 = vadd.f32 %v743, %v827
  %v829 = vpop.f32.mrb[0].mxu0
  %830 = vmatprep.mubr.f32.mxu0 0.0
  %831 = vmatmul.mubr.f32.gmra.mrb[0].mxu0 %v616
  %v832 = vpop.f32.mrb[0].mxu0
  %v833 = vadd.f32 %v748, %v832
  %v834 = vpop.f32.mrb[0].mxu0
  %835 = vmatprep.mubr.f32.mxu0 0.0
  %836 = vmatmul.mubr.f32.gmra.mrb[0].mxu0 %v617
  %v837 = vpop.f32.mrb[0].mxu0
  %v838 = vadd.f32 %v753, %v837
  %v839 = vpop.f32.mrb[0].mxu0
  %840 = vmatprep.mubr.f32.mxu0 0.0
  %841 = vmatmul.mubr.f32.gmra.mrb[0].mxu0 %v618
  %v842 = vpop.f32.mrb[0].mxu0
  %v843 = vadd.f32 %v758, %v842
  %v844 = vpop.f32.mrb[0].mxu0
  %845 = vdwg.mxu0
  %v846 = vadd.f32 %v828, %v298
  %v847 = vadd.f32 %v833, %v303
  %v848 = vadd.f32 %v838, %v308
  %v849 = vadd.f32 %v843, %v313
  %v850 = vlaneseq
  %v851 = vand.u32 %v850, 127
  %v852 = vmul.u32 %v37, 2
  %v853 = vmul.u32 %v38, 2
  %vm854 = vcmp.eq.s32.totalorder %v851, %v852
  %vm855 = vcmp.eq.s32.totalorder %v851, %v853
  %v856 = vsel %vm854, 1, 0
  %v857 = vsel %vm855, 1, 0
  %v858 = vcvt.s32.f32 %v856
  %v859 = vcvt.s32.f32 %v857
  %vm860 = vcmask 261120
  %v862 = vsel %vm860, %v858, 0
  %v865 = vsel %vm860, %v859, 0
  %867 = vmatprep.subr.mxu0 0.0
  %868 = vmatpush1.msra.mxu0 %v846
  %869 = vmatprep.subr.mxu0 0.0
  %870 = vmatpush1.msra.mxu0 %v847
  %871 = vmatprep.subr.mxu0 0.0
  %872 = vmatpush1.msra.mxu0 %v848
  %873 = vmatprep.subr.mxu0 0.0
  %874 = vmatpush1.msra.mxu0 %v849
  %875 = vmatprep.subr.mxu0 0.0
  %876 = vmatpush1.msra.mxu0 0.0
  %877 = vmatprep.subr.mxu0 0.0
  %878 = vmatpush1.msra.mxu0 0.0
  %879 = vmatprep.subr.mxu0 0.0
  %880 = vmatpush1.msra.mxu0 0.0
  %881 = vmatprep.subr.mxu0 0.0
  %882 = vmatpush1.msra.mxu0 0.0
  %883 = vmatprep.subr.mxu0 0.0
  %884 = vmatpush1.msra.mxu0 0.0
  %885 = vmatprep.subr.mxu0 0.0
  %886 = vmatpush1.msra.mxu0 0.0
  %887 = vmatprep.subr.mxu0 0.0
  %888 = vmatpush1.msra.mxu0 0.0
  %889 = vmatprep.subr.mxu0 0.0
  %890 = vmatpush1.msra.mxu0 0.0
  %891 = vmatprep.subr.mxu0 0.0
  %892 = vmatpush1.msra.mxu0 0.0
  %893 = vmatprep.subr.mxu0 0.0
  %894 = vmatpush1.msra.mxu0 0.0
  %895 = vmatprep.subr.mxu0 0.0
  %896 = vmatpush1.msra.mxu0 0.0
  %897 = vmatprep.subr.mxu0 0.0
  %898 = vmatpush1.msra.mxu0 0.0
  %899 = vmatprep.subr.mxu0 0.0
  %900 = vmatpush1.msra.mxu0 0.0
  %901 = vmatprep.subr.mxu0 0.0
  %902 = vmatpush1.msra.mxu0 0.0
  %903 = vmatprep.subr.mxu0 0.0
  %904 = vmatpush1.msra.mxu0 0.0
  %905 = vmatprep.subr.mxu0 0.0
  %906 = vmatpush1.msra.mxu0 0.0
  %907 = vmatprep.subr.mxu0 0.0
  %908 = vmatpush1.msra.mxu0 0.0
  %909 = vmatprep.subr.mxu0 0.0
  %910 = vmatpush1.msra.mxu0 0.0
  %911 = vmatprep.subr.mxu0 0.0
  %912 = vmatpush1.msra.mxu0 0.0
  %913 = vmatprep.subr.mxu0 0.0
  %914 = vmatpush1.msra.mxu0 0.0
  %915 = vmatprep.subr.mxu0 0.0
  %916 = vmatpush1.msra.mxu0 0.0
  %917 = vmatprep.subr.mxu0 0.0
  %918 = vmatpush1.msra.mxu0 0.0
  %919 = vmatprep.subr.mxu0 0.0
  %920 = vmatpush1.msra.mxu0 0.0
  %921 = vmatprep.subr.mxu0 0.0
  %922 = vmatpush1.msra.mxu0 0.0
  %923 = vmatprep.subr.mxu0 0.0
  %924 = vmatpush1.msra.mxu0 0.0
  %925 = vmatprep.subr.mxu0 0.0
  %926 = vmatpush1.msra.mxu0 0.0
  %927 = vmatprep.subr.mxu0 0.0
  %928 = vmatpush1.msra.mxu0 0.0
  %929 = vmatprep.subr.mxu0 0.0
  %930 = vmatpush1.msra.mxu0 0.0
  %931 = vmatprep.mubr.f32.mxu0 0.0
  %932 = vmatmul.mubr.f32.gmra.mrb[0].mxu0 %v862
  %v933 = vpop.f32.mrb[0].mxu0
  %v934 = vadd.f32 0.0, %v933
  %v935 = vpop.f32.mrb[0].mxu0
  %936 = vmatprep.mubr.f32.mxu0 0.0
  %937 = vmatmul.mubr.f32.gmra.mrb[0].mxu0 %v865
  %v938 = vpop.f32.mrb[0].mxu0
  %v939 = vadd.f32 0.0, %v938
  %v940 = vpop.f32.mrb[0].mxu0
  %941 = vdwg.mxu0
  %v942 = vadd.s32 %v852, 1
  %v943 = vadd.s32 %v853, 1
  %vm944 = vcmp.eq.s32.totalorder %v851, %v942
  %vm945 = vcmp.eq.s32.totalorder %v851, %v943
  %v946 = vsel %vm944, 1, 0
  %v947 = vsel %vm945, 1, 0
  %v948 = vcvt.s32.f32 %v946
  %v949 = vcvt.s32.f32 %v947
  %v951 = vsel %vm860, %v948, 0
  %v954 = vsel %vm860, %v949, 0
  %956 = vmatprep.subr.mxu0 0.0
  %957 = vmatpush1.msra.mxu0 %v846
  %958 = vmatprep.subr.mxu0 0.0
  %959 = vmatpush1.msra.mxu0 %v847
  %960 = vmatprep.subr.mxu0 0.0
  %961 = vmatpush1.msra.mxu0 %v848
  %962 = vmatprep.subr.mxu0 0.0
  %963 = vmatpush1.msra.mxu0 %v849
  %964 = vmatprep.subr.mxu0 0.0
  %965 = vmatpush1.msra.mxu0 0.0
  %966 = vmatprep.subr.mxu0 0.0
  %967 = vmatpush1.msra.mxu0 0.0
  %968 = vmatprep.subr.mxu0 0.0
  %969 = vmatpush1.msra.mxu0 0.0
  %970 = vmatprep.subr.mxu0 0.0
  %971 = vmatpush1.msra.mxu0 0.0
  %972 = vmatprep.subr.mxu0 0.0
  %973 = vmatpush1.msra.mxu0 0.0
  %974 = vmatprep.subr.mxu0 0.0
  %975 = vmatpush1.msra.mxu0 0.0
  %976 = vmatprep.subr.mxu0 0.0
  %977 = vmatpush1.msra.mxu0 0.0
  %978 = vmatprep.subr.mxu0 0.0
  %979 = vmatpush1.msra.mxu0 0.0
  %980 = vmatprep.subr.mxu0 0.0
  %981 = vmatpush1.msra.mxu0 0.0
  %982 = vmatprep.subr.mxu0 0.0
  %983 = vmatpush1.msra.mxu0 0.0
  %984 = vmatprep.subr.mxu0 0.0
  %985 = vmatpush1.msra.mxu0 0.0
  %986 = vmatprep.subr.mxu0 0.0
  %987 = vmatpush1.msra.mxu0 0.0
  %988 = vmatprep.subr.mxu0 0.0
  %989 = vmatpush1.msra.mxu0 0.0
  %990 = vmatprep.subr.mxu0 0.0
  %991 = vmatpush1.msra.mxu0 0.0
  %992 = vmatprep.subr.mxu0 0.0
  %993 = vmatpush1.msra.mxu0 0.0
  %994 = vmatprep.subr.mxu0 0.0
  %995 = vmatpush1.msra.mxu0 0.0
  %996 = vmatprep.subr.mxu0 0.0
  %997 = vmatpush1.msra.mxu0 0.0
  %998 = vmatprep.subr.mxu0 0.0
  %999 = vmatpush1.msra.mxu0 0.0
  %1000 = vmatprep.subr.mxu0 0.0
  %1001 = vmatpush1.msra.mxu0 0.0
  %1002 = vmatprep.subr.mxu0 0.0
  %1003 = vmatpush1.msra.mxu0 0.0
  %1004 = vmatprep.subr.mxu0 0.0
  %1005 = vmatpush1.msra.mxu0 0.0
  %1006 = vmatprep.subr.mxu0 0.0
  %1007 = vmatpush1.msra.mxu0 0.0
  %1008 = vmatprep.subr.mxu0 0.0
  %1009 = vmatpush1.msra.mxu0 0.0
  %1010 = vmatprep.subr.mxu0 0.0
  %1011 = vmatpush1.msra.mxu0 0.0
  %1012 = vmatprep.subr.mxu0 0.0
  %1013 = vmatpush1.msra.mxu0 0.0
  %1014 = vmatprep.subr.mxu0 0.0
  %1015 = vmatpush1.msra.mxu0 0.0
  %1016 = vmatprep.subr.mxu0 0.0
  %1017 = vmatpush1.msra.mxu0 0.0
  %1018 = vmatprep.subr.mxu0 0.0
  %1019 = vmatpush1.msra.mxu0 0.0
  %1020 = vmatprep.mubr.f32.mxu0 0.0
  %1021 = vmatmul.mubr.f32.gmra.mrb[0].mxu0 %v951
  %v1022 = vpop.f32.mrb[0].mxu0
  %v1023 = vadd.f32 0.0, %v1022
  %v1024 = vpop.f32.mrb[0].mxu0
  %1025 = vmatprep.mubr.f32.mxu0 0.0
  %1026 = vmatmul.mubr.f32.gmra.mrb[0].mxu0 %v954
  %v1027 = vpop.f32.mrb[0].mxu0
  %v1028 = vadd.f32 0.0, %v1027
  %v1029 = vpop.f32.mrb[0].mxu0
  %1030 = vdwg.mxu0
  %v1031 = vld [vmem:[%s4] sm:$0xff]
  %v1032 = vld [vmem:[%s4 + $0x8] sm:$0xff]
  %v1033 = vld [vmem:[%s4 + $0x10] sm:$0xff]
  %v1034 = vld [vmem:[%s4 + $0x18] sm:$0xff]
  %v1035 = vld [vmem:[%s4 + $0x20] sm:$0xff]
  %v1036 = vld [vmem:[%s4 + $0x28] sm:$0xff]
  %v1037 = vld [vmem:[%s4 + $0x30] sm:$0xff]
  %v1038 = vld [vmem:[%s4 + $0x38] sm:$0xff]
  %v1039 = vld [vmem:[%s4 + $0x40] sm:$0xff]
  %v1040 = vld [vmem:[%s4 + $0x48] sm:$0xff]
  %v1041 = vld [vmem:[%s4 + $0x50] sm:$0xff]
  %v1042 = vld [vmem:[%s4 + $0x58] sm:$0xff]
  %v1043 = vld [vmem:[%s4 + $0x60] sm:$0xff]
  %v1044 = vld [vmem:[%s4 + $0x68] sm:$0xff]
  %v1045 = vld [vmem:[%s4 + $0x70] sm:$0xff]
  %v1046 = vld [vmem:[%s4 + $0x78] sm:$0xff]
  %v1047 = vld [vmem:[%s4 + $0x80] sm:$0xff]
  %v1048 = vld [vmem:[%s4 + $0x88] sm:$0xff]
  %v1049 = vld [vmem:[%s4 + $0x90] sm:$0xff]
  %v1050 = vld [vmem:[%s4 + $0x98] sm:$0xff]
  %v1051 = vld [vmem:[%s4 + $0xa0] sm:$0xff]
  %v1052 = vld [vmem:[%s4 + $0xa8] sm:$0xff]
  %v1053 = vld [vmem:[%s4 + $0xb0] sm:$0xff]
  %v1054 = vld [vmem:[%s4 + $0xb8] sm:$0xff]
  %v1055 = vld [vmem:[%s4 + $0xc0] sm:$0xff]
  %v1056 = vld [vmem:[%s4 + $0xc8] sm:$0xff]
  %v1057 = vld [vmem:[%s4 + $0xd0] sm:$0xff]
  %v1058 = vld [vmem:[%s4 + $0xd8] sm:$0xff]
  %v1059 = vld [vmem:[%s4 + $0xe0] sm:$0xff]
  %v1060 = vld [vmem:[%s4 + $0xe8] sm:$0xff]
  %v1061 = vld [vmem:[%s4 + $0xf0] sm:$0xff]
  %v1062 = vld [vmem:[%s4 + $0xf8] sm:$0xff]
  %v1063 = vld [vmem:[%s5] sm:$0x1]
  %v1065 = vlaneseq
  %v1066 = vshrl.u32 %v1065, 7
  %v1067 = vsub.s32 0, %v1066
  %v1068 = vrot.slane %v1063, %v1067
  %1070 = vmatprep.subr.mxu0 0.0
  %1071 = vmatpush1.msra.mxu0 %v1031
  %1072 = vmatprep.subr.mxu0 0.0
  %1073 = vmatpush1.msra.mxu0 %v1032
  %1074 = vmatprep.subr.mxu0 0.0
  %1075 = vmatpush1.msra.mxu0 %v1033
  %1076 = vmatprep.subr.mxu0 0.0
  %1077 = vmatpush1.msra.mxu0 %v1034
  %1078 = vmatprep.subr.mxu0 0.0
  %1079 = vmatpush1.msra.mxu0 %v1035
  %1080 = vmatprep.subr.mxu0 0.0
  %1081 = vmatpush1.msra.mxu0 %v1036
  %1082 = vmatprep.subr.mxu0 0.0
  %1083 = vmatpush1.msra.mxu0 %v1037
  %1084 = vmatprep.subr.mxu0 0.0
  %1085 = vmatpush1.msra.mxu0 %v1038
  %1086 = vmatprep.subr.mxu0 0.0
  %1087 = vmatpush1.msra.mxu0 %v1039
  %1088 = vmatprep.subr.mxu0 0.0
  %1089 = vmatpush1.msra.mxu0 %v1040
  %1090 = vmatprep.subr.mxu0 0.0
  %1091 = vmatpush1.msra.mxu0 %v1041
  %1092 = vmatprep.subr.mxu0 0.0
  %1093 = vmatpush1.msra.mxu0 %v1042
  %1094 = vmatprep.subr.mxu0 0.0
  %1095 = vmatpush1.msra.mxu0 %v1043
  %1096 = vmatprep.subr.mxu0 0.0
  %1097 = vmatpush1.msra.mxu0 %v1044
  %1098 = vmatprep.subr.mxu0 0.0
  %1099 = vmatpush1.msra.mxu0 %v1045
  %1100 = vmatprep.subr.mxu0 0.0
  %1101 = vmatpush1.msra.mxu0 %v1046
  %1102 = vmatprep.subr.mxu0 0.0
  %1103 = vmatpush1.msra.mxu0 %v1047
  %1104 = vmatprep.subr.mxu0 0.0
  %1105 = vmatpush1.msra.mxu0 %v1048
  %1106 = vmatprep.subr.mxu0 0.0
  %1107 = vmatpush1.msra.mxu0 %v1049
  %1108 = vmatprep.subr.mxu0 0.0
  %1109 = vmatpush1.msra.mxu0 %v1050
  %1110 = vmatprep.subr.mxu0 0.0
  %1111 = vmatpush1.msra.mxu0 %v1051
  %1112 = vmatprep.subr.mxu0 0.0
  %1113 = vmatpush1.msra.mxu0 %v1052
  %1114 = vmatprep.subr.mxu0 0.0
  %1115 = vmatpush1.msra.mxu0 %v1053
  %1116 = vmatprep.subr.mxu0 0.0
  %1117 = vmatpush1.msra.mxu0 %v1054
  %1118 = vmatprep.subr.mxu0 0.0
  %1119 = vmatpush1.msra.mxu0 %v1055
  %1120 = vmatprep.subr.mxu0 0.0
  %1121 = vmatpush1.msra.mxu0 %v1056
  %1122 = vmatprep.subr.mxu0 0.0
  %1123 = vmatpush1.msra.mxu0 %v1057
  %1124 = vmatprep.subr.mxu0 0.0
  %1125 = vmatpush1.msra.mxu0 %v1058
  %1126 = vmatprep.subr.mxu0 0.0
  %1127 = vmatpush1.msra.mxu0 %v1059
  %1128 = vmatprep.subr.mxu0 0.0
  %1129 = vmatpush1.msra.mxu0 %v1060
  %1130 = vmatprep.subr.mxu0 0.0
  %1131 = vmatpush1.msra.mxu0 %v1061
  %1132 = vmatprep.subr.mxu0 0.0
  %1133 = vmatpush1.msra.mxu0 %v1062
  %1134 = vmatprep.mubr.f32.mxu0 %v1023
  %1135 = vmatmul.mubr.f32.gmra.mrb[0].mxu0 %v934
  %v1136 = vpop.f32.mrb[0].mxu0
  %v1137 = vadd.f32 %v1068, %v1136
  %v1138 = vpop.f32.mrb[0].mxu0
  %1139 = vmatprep.mubr.f32.mxu0 %v1028
  %1140 = vmatmul.mubr.f32.gmra.mrb[0].mxu0 %v939
  %v1141 = vpop.f32.mrb[0].mxu0
  %v1142 = vadd.f32 %v1068, %v1141
  %v1143 = vpop.f32.mrb[0].mxu0
  %1144 = vdwg.mxu0
  %v1147 = vrot.slane %v1137, 7
  %v1148 = vrot.slane %v1142, 7
  %v1149 = vsel %vm45, %v1147, %v1148
  %v1152 = vsel %vm45, 0.0, %v1147
  %v1153 = vand.u32 %v37, 7
  %v1154 = vand.u32 %v38, 7
  %vm1155 = vcmp.eq.s32.totalorder %v1153, 0
  %vm1156 = vcmp.eq.s32.totalorder %v1154, 0
  %v1157 = vsel %vm1155, 0.0, %v1152
  %v1158 = vsel %vm1156, 0.0, %v1149
  %v1159 = vrot.slane %v1137, 1
  %v1160 = vrot.slane %v1142, 1
  %v1161 = vsel %vm70, %v1159, %v1160
  %v1164 = vsel %vm70, %v1160, 0.0
  %vm1165 = vcmp.eq.s32.totalorder %v1153, 7
  %vm1166 = vcmp.eq.s32.totalorder %v1154, 7
  %v1167 = vsel %vm1165, 0.0, %v1161
  %v1168 = vsel %vm1166, 0.0, %v1164
  %s1169 = scalar_lea.vmem %s2, 1152
  %v1170 = vld [vmem:[%s1169] sm:$0xff]
  %v1171 = vld [vmem:[%s1169 + $0x8] sm:$0xff]
  %v1172 = vld [vmem:[%s1169 + $0x10] sm:$0xff]
  %v1173 = vld [vmem:[%s1169 + $0x18] sm:$0xff]
  %v1174 = vld [vmem:[%s1169 + $0x20] sm:$0xff]
  %v1175 = vld [vmem:[%s1169 + $0x28] sm:$0xff]
  %v1176 = vld [vmem:[%s1169 + $0x30] sm:$0xff]
  %v1177 = vld [vmem:[%s1169 + $0x38] sm:$0xff]
  %v1178 = vld [vmem:[%s1169 + $0x40] sm:$0xff]
  %v1179 = vld [vmem:[%s1169 + $0x48] sm:$0xff]
  %v1180 = vld [vmem:[%s1169 + $0x50] sm:$0xff]
  %v1181 = vld [vmem:[%s1169 + $0x58] sm:$0xff]
  %v1182 = vld [vmem:[%s1169 + $0x60] sm:$0xff]
  %v1183 = vld [vmem:[%s1169 + $0x68] sm:$0xff]
  %v1184 = vld [vmem:[%s1169 + $0x70] sm:$0xff]
  %v1185 = vld [vmem:[%s1169 + $0x78] sm:$0xff]
  %v1186 = vld [vmem:[%s1169 + $0x80] sm:$0xff]
  %v1187 = vld [vmem:[%s1169 + $0x88] sm:$0xff]
  %v1188 = vld [vmem:[%s1169 + $0x90] sm:$0xff]
  %v1189 = vld [vmem:[%s1169 + $0x98] sm:$0xff]
  %v1190 = vld [vmem:[%s1169 + $0xa0] sm:$0xff]
  %v1191 = vld [vmem:[%s1169 + $0xa8] sm:$0xff]
  %v1192 = vld [vmem:[%s1169 + $0xb0] sm:$0xff]
  %v1193 = vld [vmem:[%s1169 + $0xb8] sm:$0xff]
  %v1194 = vld [vmem:[%s1169 + $0xc0] sm:$0xff]
  %v1195 = vld [vmem:[%s1169 + $0xc8] sm:$0xff]
  %v1196 = vld [vmem:[%s1169 + $0xd0] sm:$0xff]
  %v1197 = vld [vmem:[%s1169 + $0xd8] sm:$0xff]
  %v1198 = vld [vmem:[%s1169 + $0xe0] sm:$0xff]
  %v1199 = vld [vmem:[%s1169 + $0xe8] sm:$0xff]
  %v1200 = vld [vmem:[%s1169 + $0xf0] sm:$0xff]
  %v1201 = vld [vmem:[%s1169 + $0xf8] sm:$0xff]
  %v1202 = vld [vmem:[%s1169 + $0x100] sm:$0xff]
  %v1203 = vld [vmem:[%s1169 + $0x108] sm:$0xff]
  %v1204 = vld [vmem:[%s1169 + $0x110] sm:$0xff]
  %v1205 = vld [vmem:[%s1169 + $0x118] sm:$0xff]
  %v1206 = vld [vmem:[%s1169 + $0x120] sm:$0xff]
  %v1207 = vld [vmem:[%s1169 + $0x128] sm:$0xff]
  %v1208 = vld [vmem:[%s1169 + $0x130] sm:$0xff]
  %v1209 = vld [vmem:[%s1169 + $0x138] sm:$0xff]
  %v1210 = vld [vmem:[%s1169 + $0x140] sm:$0xff]
  %v1211 = vld [vmem:[%s1169 + $0x148] sm:$0xff]
  %v1212 = vld [vmem:[%s1169 + $0x150] sm:$0xff]
  %v1213 = vld [vmem:[%s1169 + $0x158] sm:$0xff]
  %v1214 = vld [vmem:[%s1169 + $0x160] sm:$0xff]
  %v1215 = vld [vmem:[%s1169 + $0x168] sm:$0xff]
  %v1216 = vld [vmem:[%s1169 + $0x170] sm:$0xff]
  %v1217 = vld [vmem:[%s1169 + $0x178] sm:$0xff]
  %s1218 = scalar_lea.vmem %s3, 3
  %v1219 = vld [vmem:[%s1218] sm:$0x1]
  %v1221 = vlaneseq
  %v1222 = vshrl.u32 %v1221, 7
  %v1223 = vsub.s32 0, %v1222
  %v1224 = vrot.slane %v1219, %v1223
  %1226 = vmatprep.subr.mxu0 0.0
  %1227 = vmatpush1.msra.mxu0 %v1170
  %1228 = vmatprep.subr.mxu0 0.0
  %1229 = vmatpush1.msra.mxu0 %v1171
  %1230 = vmatprep.subr.mxu0 0.0
  %1231 = vmatpush1.msra.mxu0 %v1172
  %1232 = vmatprep.subr.mxu0 0.0
  %1233 = vmatpush1.msra.mxu0 %v1173
  %1234 = vmatprep.subr.mxu0 0.0
  %1235 = vmatpush1.msra.mxu0 %v1174
  %1236 = vmatprep.subr.mxu0 0.0
  %1237 = vmatpush1.msra.mxu0 %v1175
  %1238 = vmatprep.subr.mxu0 0.0
  %1239 = vmatpush1.msra.mxu0 %v1176
  %1240 = vmatprep.subr.mxu0 0.0
  %1241 = vmatpush1.msra.mxu0 %v1177
  %1242 = vmatprep.subr.mxu0 0.0
  %1243 = vmatpush1.msra.mxu0 %v1178
  %1244 = vmatprep.subr.mxu0 0.0
  %1245 = vmatpush1.msra.mxu0 %v1179
  %1246 = vmatprep.subr.mxu0 0.0
  %1247 = vmatpush1.msra.mxu0 %v1180
  %1248 = vmatprep.subr.mxu0 0.0
  %1249 = vmatpush1.msra.mxu0 %v1181
  %1250 = vmatprep.subr.mxu0 0.0
  %1251 = vmatpush1.msra.mxu0 %v1182
  %1252 = vmatprep.subr.mxu0 0.0
  %1253 = vmatpush1.msra.mxu0 %v1183
  %1254 = vmatprep.subr.mxu0 0.0
  %1255 = vmatpush1.msra.mxu0 %v1184
  %1256 = vmatprep.subr.mxu0 0.0
  %1257 = vmatpush1.msra.mxu0 %v1185
  %1258 = vmatprep.subr.mxu0 0.0
  %1259 = vmatpush1.msra.mxu0 %v1186
  %1260 = vmatprep.subr.mxu0 0.0
  %1261 = vmatpush1.msra.mxu0 %v1187
  %1262 = vmatprep.subr.mxu0 0.0
  %1263 = vmatpush1.msra.mxu0 %v1188
  %1264 = vmatprep.subr.mxu0 0.0
  %1265 = vmatpush1.msra.mxu0 %v1189
  %1266 = vmatprep.subr.mxu0 0.0
  %1267 = vmatpush1.msra.mxu0 %v1190
  %1268 = vmatprep.subr.mxu0 0.0
  %1269 = vmatpush1.msra.mxu0 %v1191
  %1270 = vmatprep.subr.mxu0 0.0
  %1271 = vmatpush1.msra.mxu0 %v1192
  %1272 = vmatprep.subr.mxu0 0.0
  %1273 = vmatpush1.msra.mxu0 %v1193
  %1274 = vmatprep.subr.mxu0 0.0
  %1275 = vmatpush1.msra.mxu0 %v1194
  %1276 = vmatprep.subr.mxu0 0.0
  %1277 = vmatpush1.msra.mxu0 %v1195
  %1278 = vmatprep.subr.mxu0 0.0
  %1279 = vmatpush1.msra.mxu0 %v1196
  %1280 = vmatprep.subr.mxu0 0.0
  %1281 = vmatpush1.msra.mxu0 %v1197
  %1282 = vmatprep.subr.mxu0 0.0
  %1283 = vmatpush1.msra.mxu0 %v1198
  %1284 = vmatprep.subr.mxu0 0.0
  %1285 = vmatpush1.msra.mxu0 %v1199
  %1286 = vmatprep.subr.mxu0 0.0
  %1287 = vmatpush1.msra.mxu0 %v1200
  %1288 = vmatprep.subr.mxu0 0.0
  %1289 = vmatpush1.msra.mxu0 %v1201
  %1290 = vmatprep.mubr.f32.mxu0 %v1137
  %1291 = vmatmul.mubr.f32.gmra.mrb[0].mxu0 %v1157
  %v1292 = vpop.f32.mrb[0].mxu0
  %v1293 = vadd.f32 %v1224, %v1292
  %v1294 = vpop.f32.mrb[0].mxu0
  %1295 = vmatprep.mubr.f32.mxu0 %v1142
  %1296 = vmatmul.mubr.f32.gmra.mrb[0].mxu0 %v1158
  %v1297 = vpop.f32.mrb[0].mxu0
  %v1298 = vadd.f32 %v1224, %v1297
  %v1299 = vpop.f32.mrb[0].mxu0
  %1300 = vdwg.mxu0
  %1301 = vmatprep.subr.mxu0 0.0
  %1302 = vmatpush1.msra.mxu0 %v1202
  %1303 = vmatprep.subr.mxu0 0.0
  %1304 = vmatpush1.msra.mxu0 %v1203
  %1305 = vmatprep.subr.mxu0 0.0
  %1306 = vmatpush1.msra.mxu0 %v1204
  %1307 = vmatprep.subr.mxu0 0.0
  %1308 = vmatpush1.msra.mxu0 %v1205
  %1309 = vmatprep.subr.mxu0 0.0
  %1310 = vmatpush1.msra.mxu0 %v1206
  %1311 = vmatprep.subr.mxu0 0.0
  %1312 = vmatpush1.msra.mxu0 %v1207
  %1313 = vmatprep.subr.mxu0 0.0
  %1314 = vmatpush1.msra.mxu0 %v1208
  %1315 = vmatprep.subr.mxu0 0.0
  %1316 = vmatpush1.msra.mxu0 %v1209
  %1317 = vmatprep.subr.mxu0 0.0
  %1318 = vmatpush1.msra.mxu0 %v1210
  %1319 = vmatprep.subr.mxu0 0.0
  %1320 = vmatpush1.msra.mxu0 %v1211
  %1321 = vmatprep.subr.mxu0 0.0
  %1322 = vmatpush1.msra.mxu0 %v1212
  %1323 = vmatprep.subr.mxu0 0.0
  %1324 = vmatpush1.msra.mxu0 %v1213
  %1325 = vmatprep.subr.mxu0 0.0
  %1326 = vmatpush1.msra.mxu0 %v1214
  %1327 = vmatprep.subr.mxu0 0.0
  %1328 = vmatpush1.msra.mxu0 %v1215
  %1329 = vmatprep.subr.mxu0 0.0
  %1330 = vmatpush1.msra.mxu0 %v1216
  %1331 = vmatprep.subr.mxu0 0.0
  %1332 = vmatpush1.msra.mxu0 %v1217
  %1333 = vmatprep.subr.mxu0 0.0
  %1334 = vmatpush1.msra.mxu0 0.0
  %1335 = vmatprep.subr.mxu0 0.0
  %1336 = vmatpush1.msra.mxu0 0.0
  %1337 = vmatprep.subr.mxu0 0.0
  %1338 = vmatpush1.msra.mxu0 0.0
  %1339 = vmatprep.subr.mxu0 0.0
  %1340 = vmatpush1.msra.mxu0 0.0
  %1341 = vmatprep.subr.mxu0 0.0
  %1342 = vmatpush1.msra.mxu0 0.0
  %1343 = vmatprep.subr.mxu0 0.0
  %1344 = vmatpush1.msra.mxu0 0.0
  %1345 = vmatprep.subr.mxu0 0.0
  %1346 = vmatpush1.msra.mxu0 0.0
  %1347 = vmatprep.subr.mxu0 0.0
  %1348 = vmatpush1.msra.mxu0 0.0
  %1349 = vmatprep.subr.mxu0 0.0
  %1350 = vmatpush1.msra.mxu0 0.0
  %1351 = vmatprep.subr.mxu0 0.0
  %1352 = vmatpush1.msra.mxu0 0.0
  %1353 = vmatprep.subr.mxu0 0.0
  %1354 = vmatpush1.msra.mxu0 0.0
  %1355 = vmatprep.subr.mxu0 0.0
  %1356 = vmatpush1.msra.mxu0 0.0
  %1357 = vmatprep.subr.mxu0 0.0
  %1358 = vmatpush1.msra.mxu0 0.0
  %1359 = vmatprep.subr.mxu0 0.0
  %1360 = vmatpush1.msra.mxu0 0.0
  %1361 = vmatprep.subr.mxu0 0.0
  %1362 = vmatpush1.msra.mxu0 0.0
  %1363 = vmatprep.subr.mxu0 0.0
  %1364 = vmatpush1.msra.mxu0 0.0
  %1365 = vmatprep.mubr.f32.mxu0 0.0
  %1366 = vmatmul.mubr.f32.gmra.mrb[0].mxu0 %v1167
  %v1367 = vpop.f32.mrb[0].mxu0
  %v1368 = vadd.f32 %v1293, %v1367
  %v1369 = vpop.f32.mrb[0].mxu0
  %1370 = vmatprep.mubr.f32.mxu0 0.0
  %1371 = vmatmul.mubr.f32.gmra.mrb[0].mxu0 %v1168
  %v1372 = vpop.f32.mrb[0].mxu0
  %v1373 = vadd.f32 %v1298, %v1372
  %v1374 = vpop.f32.mrb[0].mxu0
  %1375 = vdwg.mxu0
  %v1376 = vmax.f32 %v1368, 0.0
  %v1377 = vmax.f32 %v1373, 0.0
  %v1380 = vrot.slane %v1376, 7
  %v1381 = vrot.slane %v1377, 7
  %v1382 = vsel %vm45, %v1380, %v1381
  %v1385 = vsel %vm45, 0.0, %v1380
  %v1386 = vsel %vm1155, 0.0, %v1385
  %v1387 = vsel %vm1156, 0.0, %v1382
  %v1388 = vrot.slane %v1376, 1
  %v1389 = vrot.slane %v1377, 1
  %v1390 = vsel %vm70, %v1388, %v1389
  %v1393 = vsel %vm70, %v1389, 0.0
  %v1394 = vsel %vm1165, 0.0, %v1390
  %v1395 = vsel %vm1166, 0.0, %v1393
  %s1396 = scalar_lea.vmem %s2, 1536
  %v1397 = vld [vmem:[%s1396] sm:$0xff]
  %v1398 = vld [vmem:[%s1396 + $0x8] sm:$0xff]
  %v1399 = vld [vmem:[%s1396 + $0x10] sm:$0xff]
  %v1400 = vld [vmem:[%s1396 + $0x18] sm:$0xff]
  %v1401 = vld [vmem:[%s1396 + $0x20] sm:$0xff]
  %v1402 = vld [vmem:[%s1396 + $0x28] sm:$0xff]
  %v1403 = vld [vmem:[%s1396 + $0x30] sm:$0xff]
  %v1404 = vld [vmem:[%s1396 + $0x38] sm:$0xff]
  %v1405 = vld [vmem:[%s1396 + $0x40] sm:$0xff]
  %v1406 = vld [vmem:[%s1396 + $0x48] sm:$0xff]
  %v1407 = vld [vmem:[%s1396 + $0x50] sm:$0xff]
  %v1408 = vld [vmem:[%s1396 + $0x58] sm:$0xff]
  %v1409 = vld [vmem:[%s1396 + $0x60] sm:$0xff]
  %v1410 = vld [vmem:[%s1396 + $0x68] sm:$0xff]
  %v1411 = vld [vmem:[%s1396 + $0x70] sm:$0xff]
  %v1412 = vld [vmem:[%s1396 + $0x78] sm:$0xff]
  %v1413 = vld [vmem:[%s1396 + $0x80] sm:$0xff]
  %v1414 = vld [vmem:[%s1396 + $0x88] sm:$0xff]
  %v1415 = vld [vmem:[%s1396 + $0x90] sm:$0xff]
  %v1416 = vld [vmem:[%s1396 + $0x98] sm:$0xff]
  %v1417 = vld [vmem:[%s1396 + $0xa0] sm:$0xff]
  %v1418 = vld [vmem:[%s1396 + $0xa8] sm:$0xff]
  %v1419 = vld [vmem:[%s1396 + $0xb0] sm:$0xff]
  %v1420 = vld [vmem:[%s1396 + $0xb8] sm:$0xff]
  %v1421 = vld [vmem:[%s1396 + $0xc0] sm:$0xff]
  %v1422 = vld [vmem:[%s1396 + $0xc8] sm:$0xff]
  %v1423 = vld [vmem:[%s1396 + $0xd0] sm:$0xff]
  %v1424 = vld [vmem:[%s1396 + $0xd8] sm:$0xff]
  %v1425 = vld [vmem:[%s1396 + $0xe0] sm:$0xff]
  %v1426 = vld [vmem:[%s1396 + $0xe8] sm:$0xff]
  %v1427 = vld [vmem:[%s1396 + $0xf0] sm:$0xff]
  %v1428 = vld [vmem:[%s1396 + $0xf8] sm:$0xff]
  %v1429 = vld [vmem:[%s1396 + $0x100] sm:$0xff]
  %v1430 = vld [vmem:[%s1396 + $0x108] sm:$0xff]
  %v1431 = vld [vmem:[%s1396 + $0x110] sm:$0xff]
  %v1432 = vld [vmem:[%s1396 + $0x118] sm:$0xff]
  %v1433 = vld [vmem:[%s1396 + $0x120] sm:$0xff]
  %v1434 = vld [vmem:[%s1396 + $0x128] sm:$0xff]
  %v1435 = vld [vmem:[%s1396 + $0x130] sm:$0xff]
  %v1436 = vld [vmem:[%s1396 + $0x138] sm:$0xff]
  %v1437 = vld [vmem:[%s1396 + $0x140] sm:$0xff]
  %v1438 = vld [vmem:[%s1396 + $0x148] sm:$0xff]
  %v1439 = vld [vmem:[%s1396 + $0x150] sm:$0xff]
  %v1440 = vld [vmem:[%s1396 + $0x158] sm:$0xff]
  %v1441 = vld [vmem:[%s1396 + $0x160] sm:$0xff]
  %v1442 = vld [vmem:[%s1396 + $0x168] sm:$0xff]
  %v1443 = vld [vmem:[%s1396 + $0x170] sm:$0xff]
  %v1444 = vld [vmem:[%s1396 + $0x178] sm:$0xff]
  %s1445 = scalar_lea.vmem %s3, 4
  %v1446 = vld [vmem:[%s1445] sm:$0x1]
  %v1448 = vlaneseq
  %v1449 = vshrl.u32 %v1448, 7
  %v1450 = vsub.s32 0, %v1449
  %v1451 = vrot.slane %v1446, %v1450
  %1453 = vmatprep.subr.mxu0 0.0
  %1454 = vmatpush1.msra.mxu0 %v1397
  %1455 = vmatprep.subr.mxu0 0.0
  %1456 = vmatpush1.msra.mxu0 %v1398
  %1457 = vmatprep.subr.mxu0 0.0
  %1458 = vmatpush1.msra.mxu0 %v1399
  %1459 = vmatprep.subr.mxu0 0.0
  %1460 = vmatpush1.msra.mxu0 %v1400
  %1461 = vmatprep.subr.mxu0 0.0
  %1462 = vmatpush1.msra.mxu0 %v1401
  %1463 = vmatprep.subr.mxu0 0.0
  %1464 = vmatpush1.msra.mxu0 %v1402
  %1465 = vmatprep.subr.mxu0 0.0
  %1466 = vmatpush1.msra.mxu0 %v1403
  %1467 = vmatprep.subr.mxu0 0.0
  %1468 = vmatpush1.msra.mxu0 %v1404
  %1469 = vmatprep.subr.mxu0 0.0
  %1470 = vmatpush1.msra.mxu0 %v1405
  %1471 = vmatprep.subr.mxu0 0.0
  %1472 = vmatpush1.msra.mxu0 %v1406
  %1473 = vmatprep.subr.mxu0 0.0
  %1474 = vmatpush1.msra.mxu0 %v1407
  %1475 = vmatprep.subr.mxu0 0.0
  %1476 = vmatpush1.msra.mxu0 %v1408
  %1477 = vmatprep.subr.mxu0 0.0
  %1478 = vmatpush1.msra.mxu0 %v1409
  %1479 = vmatprep.subr.mxu0 0.0
  %1480 = vmatpush1.msra.mxu0 %v1410
  %1481 = vmatprep.subr.mxu0 0.0
  %1482 = vmatpush1.msra.mxu0 %v1411
  %1483 = vmatprep.subr.mxu0 0.0
  %1484 = vmatpush1.msra.mxu0 %v1412
  %1485 = vmatprep.subr.mxu0 0.0
  %1486 = vmatpush1.msra.mxu0 %v1413
  %1487 = vmatprep.subr.mxu0 0.0
  %1488 = vmatpush1.msra.mxu0 %v1414
  %1489 = vmatprep.subr.mxu0 0.0
  %1490 = vmatpush1.msra.mxu0 %v1415
  %1491 = vmatprep.subr.mxu0 0.0
  %1492 = vmatpush1.msra.mxu0 %v1416
  %1493 = vmatprep.subr.mxu0 0.0
  %1494 = vmatpush1.msra.mxu0 %v1417
  %1495 = vmatprep.subr.mxu0 0.0
  %1496 = vmatpush1.msra.mxu0 %v1418
  %1497 = vmatprep.subr.mxu0 0.0
  %1498 = vmatpush1.msra.mxu0 %v1419
  %1499 = vmatprep.subr.mxu0 0.0
  %1500 = vmatpush1.msra.mxu0 %v1420
  %1501 = vmatprep.subr.mxu0 0.0
  %1502 = vmatpush1.msra.mxu0 %v1421
  %1503 = vmatprep.subr.mxu0 0.0
  %1504 = vmatpush1.msra.mxu0 %v1422
  %1505 = vmatprep.subr.mxu0 0.0
  %1506 = vmatpush1.msra.mxu0 %v1423
  %1507 = vmatprep.subr.mxu0 0.0
  %1508 = vmatpush1.msra.mxu0 %v1424
  %1509 = vmatprep.subr.mxu0 0.0
  %1510 = vmatpush1.msra.mxu0 %v1425
  %1511 = vmatprep.subr.mxu0 0.0
  %1512 = vmatpush1.msra.mxu0 %v1426
  %1513 = vmatprep.subr.mxu0 0.0
  %1514 = vmatpush1.msra.mxu0 %v1427
  %1515 = vmatprep.subr.mxu0 0.0
  %1516 = vmatpush1.msra.mxu0 %v1428
  %1517 = vmatprep.mubr.f32.mxu0 %v1376
  %1518 = vmatmul.mubr.f32.gmra.mrb[0].mxu0 %v1386
  %v1519 = vpop.f32.mrb[0].mxu0
  %v1520 = vadd.f32 %v1451, %v1519
  %v1521 = vpop.f32.mrb[0].mxu0
  %1522 = vmatprep.mubr.f32.mxu0 %v1377
  %1523 = vmatmul.mubr.f32.gmra.mrb[0].mxu0 %v1387
  %v1524 = vpop.f32.mrb[0].mxu0
  %v1525 = vadd.f32 %v1451, %v1524
  %v1526 = vpop.f32.mrb[0].mxu0
  %1527 = vdwg.mxu0
  %1528 = vmatprep.subr.mxu0 0.0
  %1529 = vmatpush1.msra.mxu0 %v1429
  %1530 = vmatprep.subr.mxu0 0.0
  %1531 = vmatpush1.msra.mxu0 %v1430
  %1532 = vmatprep.subr.mxu0 0.0
  %1533 = vmatpush1.msra.mxu0 %v1431
  %1534 = vmatprep.subr.mxu0 0.0
  %1535 = vmatpush1.msra.mxu0 %v1432
  %1536 = vmatprep.subr.mxu0 0.0
  %1537 = vmatpush1.msra.mxu0 %v1433
  %1538 = vmatprep.subr.mxu0 0.0
  %1539 = vmatpush1.msra.mxu0 %v1434
  %1540 = vmatprep.subr.mxu0 0.0
  %1541 = vmatpush1.msra.mxu0 %v1435
  %1542 = vmatprep.subr.mxu0 0.0
  %1543 = vmatpush1.msra.mxu0 %v1436
  %1544 = vmatprep.subr.mxu0 0.0
  %1545 = vmatpush1.msra.mxu0 %v1437
  %1546 = vmatprep.subr.mxu0 0.0
  %1547 = vmatpush1.msra.mxu0 %v1438
  %1548 = vmatprep.subr.mxu0 0.0
  %1549 = vmatpush1.msra.mxu0 %v1439
  %1550 = vmatprep.subr.mxu0 0.0
  %1551 = vmatpush1.msra.mxu0 %v1440
  %1552 = vmatprep.subr.mxu0 0.0
  %1553 = vmatpush1.msra.mxu0 %v1441
  %1554 = vmatprep.subr.mxu0 0.0
  %1555 = vmatpush1.msra.mxu0 %v1442
  %1556 = vmatprep.subr.mxu0 0.0
  %1557 = vmatpush1.msra.mxu0 %v1443
  %1558 = vmatprep.subr.mxu0 0.0
  %1559 = vmatpush1.msra.mxu0 %v1444
  %1560 = vmatprep.subr.mxu0 0.0
  %1561 = vmatpush1.msra.mxu0 0.0
  %1562 = vmatprep.subr.mxu0 0.0
  %1563 = vmatpush1.msra.mxu0 0.0
  %1564 = vmatprep.subr.mxu0 0.0
  %1565 = vmatpush1.msra.mxu0 0.0
  %1566 = vmatprep.subr.mxu0 0.0
  %1567 = vmatpush1.msra.mxu0 0.0
  %1568 = vmatprep.subr.mxu0 0.0
  %1569 = vmatpush1.msra.mxu0 0.0
  %1570 = vmatprep.subr.mxu0 0.0
  %1571 = vmatpush1.msra.mxu0 0.0
  %1572 = vmatprep.subr.mxu0 0.0
  %1573 = vmatpush1.msra.mxu0 0.0
  %1574 = vmatprep.subr.mxu0 0.0
  %1575 = vmatpush1.msra.mxu0 0.0
  %1576 = vmatprep.subr.mxu0 0.0
  %1577 = vmatpush1.msra.mxu0 0.0
  %1578 = vmatprep.subr.mxu0 0.0
  %1579 = vmatpush1.msra.mxu0 0.0
  %1580 = vmatprep.subr.mxu0 0.0
  %1581 = vmatpush1.msra.mxu0 0.0
  %1582 = vmatprep.subr.mxu0 0.0
  %1583 = vmatpush1.msra.mxu0 0.0
  %1584 = vmatprep.subr.mxu0 0.0
  %1585 = vmatpush1.msra.mxu0 0.0
  %1586 = vmatprep.subr.mxu0 0.0
  %1587 = vmatpush1.msra.mxu0 0.0
  %1588 = vmatprep.subr.mxu0 0.0
  %1589 = vmatpush1.msra.mxu0 0.0
  %1590 = vmatprep.subr.mxu0 0.0
  %1591 = vmatpush1.msra.mxu0 0.0
  %1592 = vmatprep.mubr.f32.mxu0 0.0
  %1593 = vmatmul.mubr.f32.gmra.mrb[0].mxu0 %v1394
  %v1594 = vpop.f32.mrb[0].mxu0
  %v1595 = vadd.f32 %v1520, %v1594
  %v1596 = vpop.f32.mrb[0].mxu0
  %1597 = vmatprep.mubr.f32.mxu0 0.0
  %1598 = vmatmul.mubr.f32.gmra.mrb[0].mxu0 %v1395
  %v1599 = vpop.f32.mrb[0].mxu0
  %v1600 = vadd.f32 %v1525, %v1599
  %v1601 = vpop.f32.mrb[0].mxu0
  %1602 = vdwg.mxu0
  %v1603 = vadd.f32 %v1595, %v1137
  %v1604 = vadd.f32 %v1600, %v1142
  %vm1605 = vcmask 130048
  %v1606 = vsel %vm1605, %v858, 0
  %1608 = vmatprep.subr.mxu0 0.0
  %1609 = vmatpush1.msra.mxu0 %v1603
  %1610 = vmatprep.subr.mxu0 0.0
  %1611 = vmatpush1.msra.mxu0 %v1604
  %1612 = vmatprep.subr.mxu0 0.0
  %1613 = vmatpush1.msra.mxu0 0.0
  %1614 = vmatprep.subr.mxu0 0.0
  %1615 = vmatpush1.msra.mxu0 0.0
  %1616 = vmatprep.subr.mxu0 0.0
  %1617 = vmatpush1.msra.mxu0 0.0
  %1618 = vmatprep.subr.mxu0 0.0
  %1619 = vmatpush1.msra.mxu0 0.0
  %1620 = vmatprep.subr.mxu0 0.0
  %1621 = vmatpush1.msra.mxu0 0.0
  %1622 = vmatprep.subr.mxu0 0.0
  %1623 = vmatpush1.msra.mxu0 0.0
  %1624 = vmatprep.subr.mxu0 0.0
  %1625 = vmatpush1.msra.mxu0 0.0
  %1626 = vmatprep.subr.mxu0 0.0
  %1627 = vmatpush1.msra.mxu0 0.0
  %1628 = vmatprep.subr.mxu0 0.0
  %1629 = vmatpush1.msra.mxu0 0.0
  %1630 = vmatprep.subr.mxu0 0.0
  %1631 = vmatpush1.msra.mxu0 0.0
  %1632 = vmatprep.subr.mxu0 0.0
  %1633 = vmatpush1.msra.mxu0 0.0
  %1634 = vmatprep.subr.mxu0 0.0
  %1635 = vmatpush1.msra.mxu0 0.0
  %1636 = vmatprep.subr.mxu0 0.0
  %1637 = vmatpush1.msra.mxu0 0.0
  %1638 = vmatprep.subr.mxu0 0.0
  %1639 = vmatpush1.msra.mxu0 0.0
  %1640 = vmatprep.subr.mxu0 0.0
  %1641 = vmatpush1.msra.mxu0 0.0
  %1642 = vmatprep.subr.mxu0 0.0
  %1643 = vmatpush1.msra.mxu0 0.0
  %1644 = vmatprep.subr.mxu0 0.0
  %1645 = vmatpush1.msra.mxu0 0.0
  %1646 = vmatprep.subr.mxu0 0.0
  %1647 = vmatpush1.msra.mxu0 0.0
  %1648 = vmatprep.subr.mxu0 0.0
  %1649 = vmatpush1.msra.mxu0 0.0
  %1650 = vmatprep.subr.mxu0 0.0
  %1651 = vmatpush1.msra.mxu0 0.0
  %1652 = vmatprep.subr.mxu0 0.0
  %1653 = vmatpush1.msra.mxu0 0.0
  %1654 = vmatprep.subr.mxu0 0.0
  %1655 = vmatpush1.msra.mxu0 0.0
  %1656 = vmatprep.subr.mxu0 0.0
  %1657 = vmatpush1.msra.mxu0 0.0
  %1658 = vmatprep.subr.mxu0 0.0
  %1659 = vmatpush1.msra.mxu0 0.0
  %1660 = vmatprep.subr.mxu0 0.0
  %1661 = vmatpush1.msra.mxu0 0.0
  %1662 = vmatprep.subr.mxu0 0.0
  %1663 = vmatpush1.msra.mxu0 0.0
  %1664 = vmatprep.subr.mxu0 0.0
  %1665 = vmatpush1.msra.mxu0 0.0
  %1666 = vmatprep.subr.mxu0 0.0
  %1667 = vmatpush1.msra.mxu0 0.0
  %1668 = vmatprep.subr.mxu0 0.0
  %1669 = vmatpush1.msra.mxu0 0.0
  %1670 = vmatprep.subr.mxu0 0.0
  %1671 = vmatpush1.msra.mxu0 0.0
  %1672 = vmatprep.mubr.f32.mxu0 0.0
  %1673 = vmatmul.mubr.f32.gmra.mrb[0].mxu0 %v1606
  %v1674 = vpop.f32.mrb[0].mxu0
  %v1675 = vadd.f32 0.0, %v1674
  %v1676 = vpop.f32.mrb[0].mxu0
  %1677 = vdwg.mxu0
  %v1678 = vsel %vm1605, %v948, 0
  %1680 = vmatprep.subr.mxu0 0.0
  %1681 = vmatpush1.msra.mxu0 %v1603
  %1682 = vmatprep.subr.mxu0 0.0
  %1683 = vmatpush1.msra.mxu0 %v1604
  %1684 = vmatprep.subr.mxu0 0.0
  %1685 = vmatpush1.msra.mxu0 0.0
  %1686 = vmatprep.subr.mxu0 0.0
  %1687 = vmatpush1.msra.mxu0 0.0
  %1688 = vmatprep.subr.mxu0 0.0
  %1689 = vmatpush1.msra.mxu0 0.0
  %1690 = vmatprep.subr.mxu0 0.0
  %1691 = vmatpush1.msra.mxu0 0.0
  %1692 = vmatprep.subr.mxu0 0.0
  %1693 = vmatpush1.msra.mxu0 0.0
  %1694 = vmatprep.subr.mxu0 0.0
  %1695 = vmatpush1.msra.mxu0 0.0
  %1696 = vmatprep.subr.mxu0 0.0
  %1697 = vmatpush1.msra.mxu0 0.0
  %1698 = vmatprep.subr.mxu0 0.0
  %1699 = vmatpush1.msra.mxu0 0.0
  %1700 = vmatprep.subr.mxu0 0.0
  %1701 = vmatpush1.msra.mxu0 0.0
  %1702 = vmatprep.subr.mxu0 0.0
  %1703 = vmatpush1.msra.mxu0 0.0
  %1704 = vmatprep.subr.mxu0 0.0
  %1705 = vmatpush1.msra.mxu0 0.0
  %1706 = vmatprep.subr.mxu0 0.0
  %1707 = vmatpush1.msra.mxu0 0.0
  %1708 = vmatprep.subr.mxu0 0.0
  %1709 = vmatpush1.msra.mxu0 0.0
  %1710 = vmatprep.subr.mxu0 0.0
  %1711 = vmatpush1.msra.mxu0 0.0
  %1712 = vmatprep.subr.mxu0 0.0
  %1713 = vmatpush1.msra.mxu0 0.0
  %1714 = vmatprep.subr.mxu0 0.0
  %1715 = vmatpush1.msra.mxu0 0.0
  %1716 = vmatprep.subr.mxu0 0.0
  %1717 = vmatpush1.msra.mxu0 0.0
  %1718 = vmatprep.subr.mxu0 0.0
  %1719 = vmatpush1.msra.mxu0 0.0
  %1720 = vmatprep.subr.mxu0 0.0
  %1721 = vmatpush1.msra.mxu0 0.0
  %1722 = vmatprep.subr.mxu0 0.0
  %1723 = vmatpush1.msra.mxu0 0.0
  %1724 = vmatprep.subr.mxu0 0.0
  %1725 = vmatpush1.msra.mxu0 0.0
  %1726 = vmatprep.subr.mxu0 0.0
  %1727 = vmatpush1.msra.mxu0 0.0
  %1728 = vmatprep.subr.mxu0 0.0
  %1729 = vmatpush1.msra.mxu0 0.0
  %1730 = vmatprep.subr.mxu0 0.0
  %1731 = vmatpush1.msra.mxu0 0.0
  %1732 = vmatprep.subr.mxu0 0.0
  %1733 = vmatpush1.msra.mxu0 0.0
  %1734 = vmatprep.subr.mxu0 0.0
  %1735 = vmatpush1.msra.mxu0 0.0
  %1736 = vmatprep.subr.mxu0 0.0
  %1737 = vmatpush1.msra.mxu0 0.0
  %1738 = vmatprep.subr.mxu0 0.0
  %1739 = vmatpush1.msra.mxu0 0.0
  %1740 = vmatprep.subr.mxu0 0.0
  %1741 = vmatpush1.msra.mxu0 0.0
  %1742 = vmatprep.subr.mxu0 0.0
  %1743 = vmatpush1.msra.mxu0 0.0
  %1744 = vmatprep.mubr.f32.mxu0 0.0
  %1745 = vmatmul.mubr.f32.gmra.mrb[0].mxu0 %v1678
  %v1746 = vpop.f32.mrb[0].mxu0
  %v1747 = vadd.f32 0.0, %v1746
  %v1748 = vpop.f32.mrb[0].mxu0
  %1749 = vdwg.mxu0
  %s1750 = scalar_lea.vmem %s4, 256
  %v1751 = vld [vmem:[%s1750] sm:$0xff]
  %v1752 = vld [vmem:[%s1750 + $0x8] sm:$0xff]
  %v1753 = vld [vmem:[%s1750 + $0x10] sm:$0xff]
  %v1754 = vld [vmem:[%s1750 + $0x18] sm:$0xff]
  %v1755 = vld [vmem:[%s1750 + $0x20] sm:$0xff]
  %v1756 = vld [vmem:[%s1750 + $0x28] sm:$0xff]
  %v1757 = vld [vmem:[%s1750 + $0x30] sm:$0xff]
  %v1758 = vld [vmem:[%s1750 + $0x38] sm:$0xff]
  %v1759 = vld [vmem:[%s1750 + $0x40] sm:$0xff]
  %v1760 = vld [vmem:[%s1750 + $0x48] sm:$0xff]
  %v1761 = vld [vmem:[%s1750 + $0x50] sm:$0xff]
  %v1762 = vld [vmem:[%s1750 + $0x58] sm:$0xff]
  %v1763 = vld [vmem:[%s1750 + $0x60] sm:$0xff]
  %v1764 = vld [vmem:[%s1750 + $0x68] sm:$0xff]
  %v1765 = vld [vmem:[%s1750 + $0x70] sm:$0xff]
  %v1766 = vld [vmem:[%s1750 + $0x78] sm:$0xff]
  %v1767 = vld [vmem:[%s1750 + $0x80] sm:$0xff]
  %v1768 = vld [vmem:[%s1750 + $0x88] sm:$0xff]
  %v1769 = vld [vmem:[%s1750 + $0x90] sm:$0xff]
  %v1770 = vld [vmem:[%s1750 + $0x98] sm:$0xff]
  %v1771 = vld [vmem:[%s1750 + $0xa0] sm:$0xff]
  %v1772 = vld [vmem:[%s1750 + $0xa8] sm:$0xff]
  %v1773 = vld [vmem:[%s1750 + $0xb0] sm:$0xff]
  %v1774 = vld [vmem:[%s1750 + $0xb8] sm:$0xff]
  %v1775 = vld [vmem:[%s1750 + $0xc0] sm:$0xff]
  %v1776 = vld [vmem:[%s1750 + $0xc8] sm:$0xff]
  %v1777 = vld [vmem:[%s1750 + $0xd0] sm:$0xff]
  %v1778 = vld [vmem:[%s1750 + $0xd8] sm:$0xff]
  %v1779 = vld [vmem:[%s1750 + $0xe0] sm:$0xff]
  %v1780 = vld [vmem:[%s1750 + $0xe8] sm:$0xff]
  %v1781 = vld [vmem:[%s1750 + $0xf0] sm:$0xff]
  %v1782 = vld [vmem:[%s1750 + $0xf8] sm:$0xff]
  %s1783 = scalar_lea.vmem %s5, 1
  %v1784 = vld [vmem:[%s1783] sm:$0x1]
  %v1786 = vlaneseq
  %v1787 = vshrl.u32 %v1786, 7
  %v1788 = vsub.s32 0, %v1787
  %v1789 = vrot.slane %v1784, %v1788
  %1791 = vmatprep.subr.mxu0 0.0
  %1792 = vmatpush1.msra.mxu0 %v1751
  %1793 = vmatprep.subr.mxu0 0.0
  %1794 = vmatpush1.msra.mxu0 %v1752
  %1795 = vmatprep.subr.mxu0 0.0
  %1796 = vmatpush1.msra.mxu0 %v1753
  %1797 = vmatprep.subr.mxu0 0.0
  %1798 = vmatpush1.msra.mxu0 %v1754
  %1799 = vmatprep.subr.mxu0 0.0
  %1800 = vmatpush1.msra.mxu0 %v1755
  %1801 = vmatprep.subr.mxu0 0.0
  %1802 = vmatpush1.msra.mxu0 %v1756
  %1803 = vmatprep.subr.mxu0 0.0
  %1804 = vmatpush1.msra.mxu0 %v1757
  %1805 = vmatprep.subr.mxu0 0.0
  %1806 = vmatpush1.msra.mxu0 %v1758
  %1807 = vmatprep.subr.mxu0 0.0
  %1808 = vmatpush1.msra.mxu0 %v1759
  %1809 = vmatprep.subr.mxu0 0.0
  %1810 = vmatpush1.msra.mxu0 %v1760
  %1811 = vmatprep.subr.mxu0 0.0
  %1812 = vmatpush1.msra.mxu0 %v1761
  %1813 = vmatprep.subr.mxu0 0.0
  %1814 = vmatpush1.msra.mxu0 %v1762
  %1815 = vmatprep.subr.mxu0 0.0
  %1816 = vmatpush1.msra.mxu0 %v1763
  %1817 = vmatprep.subr.mxu0 0.0
  %1818 = vmatpush1.msra.mxu0 %v1764
  %1819 = vmatprep.subr.mxu0 0.0
  %1820 = vmatpush1.msra.mxu0 %v1765
  %1821 = vmatprep.subr.mxu0 0.0
  %1822 = vmatpush1.msra.mxu0 %v1766
  %1823 = vmatprep.subr.mxu0 0.0
  %1824 = vmatpush1.msra.mxu0 %v1767
  %1825 = vmatprep.subr.mxu0 0.0
  %1826 = vmatpush1.msra.mxu0 %v1768
  %1827 = vmatprep.subr.mxu0 0.0
  %1828 = vmatpush1.msra.mxu0 %v1769
  %1829 = vmatprep.subr.mxu0 0.0
  %1830 = vmatpush1.msra.mxu0 %v1770
  %1831 = vmatprep.subr.mxu0 0.0
  %1832 = vmatpush1.msra.mxu0 %v1771
  %1833 = vmatprep.subr.mxu0 0.0
  %1834 = vmatpush1.msra.mxu0 %v1772
  %1835 = vmatprep.subr.mxu0 0.0
  %1836 = vmatpush1.msra.mxu0 %v1773
  %1837 = vmatprep.subr.mxu0 0.0
  %1838 = vmatpush1.msra.mxu0 %v1774
  %1839 = vmatprep.subr.mxu0 0.0
  %1840 = vmatpush1.msra.mxu0 %v1775
  %1841 = vmatprep.subr.mxu0 0.0
  %1842 = vmatpush1.msra.mxu0 %v1776
  %1843 = vmatprep.subr.mxu0 0.0
  %1844 = vmatpush1.msra.mxu0 %v1777
  %1845 = vmatprep.subr.mxu0 0.0
  %1846 = vmatpush1.msra.mxu0 %v1778
  %1847 = vmatprep.subr.mxu0 0.0
  %1848 = vmatpush1.msra.mxu0 %v1779
  %1849 = vmatprep.subr.mxu0 0.0
  %1850 = vmatpush1.msra.mxu0 %v1780
  %1851 = vmatprep.subr.mxu0 0.0
  %1852 = vmatpush1.msra.mxu0 %v1781
  %1853 = vmatprep.subr.mxu0 0.0
  %1854 = vmatpush1.msra.mxu0 %v1782
  %1855 = vmatprep.mubr.f32.mxu0 %v1747
  %1856 = vmatmul.mubr.f32.gmra.mrb[0].mxu0 %v1675
  %v1857 = vpop.f32.mrb[0].mxu0
  %v1858 = vadd.f32 %v1789, %v1857
  %v1859 = vpop.f32.mrb[0].mxu0
  %1860 = vdwg.mxu0
  %v1862 = vrot.slane %v1858, 7
  %v1864 = vsel %vm45, 0.0, %v1862
  %v1865 = vand.u32 %v37, 3
  %vm1866 = vcmp.eq.s32.totalorder %v1865, 0
  %v1867 = vsel %vm1866, 0.0, %v1864
  %v1868 = vrot.slane %v1858, 1
  %v1870 = vsel %vm70, %v1868, 0.0
  %vm1871 = vcmp.eq.s32.totalorder %v1865, 3
  %v1872 = vsel %vm1871, 0.0, %v1870
  %s1873 = scalar_lea.vmem %s2, 1920
  %v1874 = vld [vmem:[%s1873] sm:$0xff]
  %v1875 = vld [vmem:[%s1873 + $0x8] sm:$0xff]
  %v1876 = vld [vmem:[%s1873 + $0x10] sm:$0xff]
  %v1877 = vld [vmem:[%s1873 + $0x18] sm:$0xff]
  %v1878 = vld [vmem:[%s1873 + $0x20] sm:$0xff]
  %v1879 = vld [vmem:[%s1873 + $0x28] sm:$0xff]
  %v1880 = vld [vmem:[%s1873 + $0x30] sm:$0xff]
  %v1881 = vld [vmem:[%s1873 + $0x38] sm:$0xff]
  %v1882 = vld [vmem:[%s1873 + $0x40] sm:$0xff]
  %v1883 = vld [vmem:[%s1873 + $0x48] sm:$0xff]
  %v1884 = vld [vmem:[%s1873 + $0x50] sm:$0xff]
  %v1885 = vld [vmem:[%s1873 + $0x58] sm:$0xff]
  %v1886 = vld [vmem:[%s1873 + $0x60] sm:$0xff]
  %v1887 = vld [vmem:[%s1873 + $0x68] sm:$0xff]
  %v1888 = vld [vmem:[%s1873 + $0x70] sm:$0xff]
  %v1889 = vld [vmem:[%s1873 + $0x78] sm:$0xff]
  %v1890 = vld [vmem:[%s1873 + $0x80] sm:$0xff]
  %v1891 = vld [vmem:[%s1873 + $0x88] sm:$0xff]
  %v1892 = vld [vmem:[%s1873 + $0x90] sm:$0xff]
  %v1893 = vld [vmem:[%s1873 + $0x98] sm:$0xff]
  %v1894 = vld [vmem:[%s1873 + $0xa0] sm:$0xff]
  %v1895 = vld [vmem:[%s1873 + $0xa8] sm:$0xff]
  %v1896 = vld [vmem:[%s1873 + $0xb0] sm:$0xff]
  %v1897 = vld [vmem:[%s1873 + $0xb8] sm:$0xff]
  %v1898 = vld [vmem:[%s1873 + $0xc0] sm:$0xff]
  %v1899 = vld [vmem:[%s1873 + $0xc8] sm:$0xff]
  %v1900 = vld [vmem:[%s1873 + $0xd0] sm:$0xff]
  %v1901 = vld [vmem:[%s1873 + $0xd8] sm:$0xff]
  %v1902 = vld [vmem:[%s1873 + $0xe0] sm:$0xff]
  %v1903 = vld [vmem:[%s1873 + $0xe8] sm:$0xff]
  %v1904 = vld [vmem:[%s1873 + $0xf0] sm:$0xff]
  %v1905 = vld [vmem:[%s1873 + $0xf8] sm:$0xff]
  %v1906 = vld [vmem:[%s1873 + $0x100] sm:$0xff]
  %v1907 = vld [vmem:[%s1873 + $0x108] sm:$0xff]
  %v1908 = vld [vmem:[%s1873 + $0x110] sm:$0xff]
  %v1909 = vld [vmem:[%s1873 + $0x118] sm:$0xff]
  %v1910 = vld [vmem:[%s1873 + $0x120] sm:$0xff]
  %v1911 = vld [vmem:[%s1873 + $0x128] sm:$0xff]
  %v1912 = vld [vmem:[%s1873 + $0x130] sm:$0xff]
  %v1913 = vld [vmem:[%s1873 + $0x138] sm:$0xff]
  %v1914 = vld [vmem:[%s1873 + $0x140] sm:$0xff]
  %v1915 = vld [vmem:[%s1873 + $0x148] sm:$0xff]
  %v1916 = vld [vmem:[%s1873 + $0x150] sm:$0xff]
  %v1917 = vld [vmem:[%s1873 + $0x158] sm:$0xff]
  %v1918 = vld [vmem:[%s1873 + $0x160] sm:$0xff]
  %v1919 = vld [vmem:[%s1873 + $0x168] sm:$0xff]
  %v1920 = vld [vmem:[%s1873 + $0x170] sm:$0xff]
  %v1921 = vld [vmem:[%s1873 + $0x178] sm:$0xff]
  %s1922 = scalar_lea.vmem %s3, 5
  %v1923 = vld [vmem:[%s1922] sm:$0x1]
  %v1925 = vlaneseq
  %v1926 = vshrl.u32 %v1925, 7
  %v1927 = vsub.s32 0, %v1926
  %v1928 = vrot.slane %v1923, %v1927
  %1930 = vmatprep.subr.mxu0 0.0
  %1931 = vmatpush1.msra.mxu0 %v1874
  %1932 = vmatprep.subr.mxu0 0.0
  %1933 = vmatpush1.msra.mxu0 %v1875
  %1934 = vmatprep.subr.mxu0 0.0
  %1935 = vmatpush1.msra.mxu0 %v1876
  %1936 = vmatprep.subr.mxu0 0.0
  %1937 = vmatpush1.msra.mxu0 %v1877
  %1938 = vmatprep.subr.mxu0 0.0
  %1939 = vmatpush1.msra.mxu0 %v1878
  %1940 = vmatprep.subr.mxu0 0.0
  %1941 = vmatpush1.msra.mxu0 %v1879
  %1942 = vmatprep.subr.mxu0 0.0
  %1943 = vmatpush1.msra.mxu0 %v1880
  %1944 = vmatprep.subr.mxu0 0.0
  %1945 = vmatpush1.msra.mxu0 %v1881
  %1946 = vmatprep.subr.mxu0 0.0
  %1947 = vmatpush1.msra.mxu0 %v1882
  %1948 = vmatprep.subr.mxu0 0.0
  %1949 = vmatpush1.msra.mxu0 %v1883
  %1950 = vmatprep.subr.mxu0 0.0
  %1951 = vmatpush1.msra.mxu0 %v1884
  %1952 = vmatprep.subr.mxu0 0.0
  %1953 = vmatpush1.msra.mxu0 %v1885
  %1954 = vmatprep.subr.mxu0 0.0
  %1955 = vmatpush1.msra.mxu0 %v1886
  %1956 = vmatprep.subr.mxu0 0.0
  %1957 = vmatpush1.msra.mxu0 %v1887
  %1958 = vmatprep.subr.mxu0 0.0
  %1959 = vmatpush1.msra.mxu0 %v1888
  %1960 = vmatprep.subr.mxu0 0.0
  %1961 = vmatpush1.msra.mxu0 %v1889
  %1962 = vmatprep.subr.mxu0 0.0
  %1963 = vmatpush1.msra.mxu0 %v1890
  %1964 = vmatprep.subr.mxu0 0.0
  %1965 = vmatpush1.msra.mxu0 %v1891
  %1966 = vmatprep.subr.mxu0 0.0
  %1967 = vmatpush1.msra.mxu0 %v1892
  %1968 = vmatprep.subr.mxu0 0.0
  %1969 = vmatpush1.msra.mxu0 %v1893
  %1970 = vmatprep.subr.mxu0 0.0
  %1971 = vmatpush1.msra.mxu0 %v1894
  %1972 = vmatprep.subr.mxu0 0.0
  %1973 = vmatpush1.msra.mxu0 %v1895
  %1974 = vmatprep.subr.mxu0 0.0
  %1975 = vmatpush1.msra.mxu0 %v1896
  %1976 = vmatprep.subr.mxu0 0.0
  %1977 = vmatpush1.msra.mxu0 %v1897
  %1978 = vmatprep.subr.mxu0 0.0
  %1979 = vmatpush1.msra.mxu0 %v1898
  %1980 = vmatprep.subr.mxu0 0.0
  %1981 = vmatpush1.msra.mxu0 %v1899
  %1982 = vmatprep.subr.mxu0 0.0
  %1983 = vmatpush1.msra.mxu0 %v1900
  %1984 = vmatprep.subr.mxu0 0.0
  %1985 = vmatpush1.msra.mxu0 %v1901
  %1986 = vmatprep.subr.mxu0 0.0
  %1987 = vmatpush1.msra.mxu0 %v1902
  %1988 = vmatprep.subr.mxu0 0.0
  %1989 = vmatpush1.msra.mxu0 %v1903
  %1990 = vmatprep.subr.mxu0 0.0
  %1991 = vmatpush1.msra.mxu0 %v1904
  %1992 = vmatprep.subr.mxu0 0.0
  %1993 = vmatpush1.msra.mxu0 %v1905
  %1994 = vmatprep.mubr.f32.mxu0 %v1858
  %1995 = vmatmul.mubr.f32.gmra.mrb[0].mxu0 %v1867
  %v1996 = vpop.f32.mrb[0].mxu0
  %v1997 = vadd.f32 %v1928, %v1996
  %v1998 = vpop.f32.mrb[0].mxu0
  %1999 = vdwg.mxu0
  %2000 = vmatprep.subr.mxu0 0.0
  %2001 = vmatpush1.msra.mxu0 %v1906
  %2002 = vmatprep.subr.mxu0 0.0
  %2003 = vmatpush1.msra.mxu0 %v1907
  %2004 = vmatprep.subr.mxu0 0.0
  %2005 = vmatpush1.msra.mxu0 %v1908
  %2006 = vmatprep.subr.mxu0 0.0
  %2007 = vmatpush1.msra.mxu0 %v1909
  %2008 = vmatprep.subr.mxu0 0.0
  %2009 = vmatpush1.msra.mxu0 %v1910
  %2010 = vmatprep.subr.mxu0 0.0
  %2011 = vmatpush1.msra.mxu0 %v1911
  %2012 = vmatprep.subr.mxu0 0.0
  %2013 = vmatpush1.msra.mxu0 %v1912
  %2014 = vmatprep.subr.mxu0 0.0
  %2015 = vmatpush1.msra.mxu0 %v1913
  %2016 = vmatprep.subr.mxu0 0.0
  %2017 = vmatpush1.msra.mxu0 %v1914
  %2018 = vmatprep.subr.mxu0 0.0
  %2019 = vmatpush1.msra.mxu0 %v1915
  %2020 = vmatprep.subr.mxu0 0.0
  %2021 = vmatpush1.msra.mxu0 %v1916
  %2022 = vmatprep.subr.mxu0 0.0
  %2023 = vmatpush1.msra.mxu0 %v1917
  %2024 = vmatprep.subr.mxu0 0.0
  %2025 = vmatpush1.msra.mxu0 %v1918
  %2026 = vmatprep.subr.mxu0 0.0
  %2027 = vmatpush1.msra.mxu0 %v1919
  %2028 = vmatprep.subr.mxu0 0.0
  %2029 = vmatpush1.msra.mxu0 %v1920
  %2030 = vmatprep.subr.mxu0 0.0
  %2031 = vmatpush1.msra.mxu0 %v1921
  %2032 = vmatprep.subr.mxu0 0.0
  %2033 = vmatpush1.msra.mxu0 0.0
  %2034 = vmatprep.subr.mxu0 0.0
  %2035 = vmatpush1.msra.mxu0 0.0
  %2036 = vmatprep.subr.mxu0 0.0
  %2037 = vmatpush1.msra.mxu0 0.0
  %2038 = vmatprep.subr.mxu0 0.0
  %2039 = vmatpush1.msra.mxu0 0.0
  %2040 = vmatprep.subr.mxu0 0.0
  %2041 = vmatpush1.msra.mxu0 0.0
  %2042 = vmatprep.subr.mxu0 0.0
  %2043 = vmatpush1.msra.mxu0 0.0
  %2044 = vmatprep.subr.mxu0 0.0
  %2045 = vmatpush1.msra.mxu0 0.0
  %2046 = vmatprep.subr.mxu0 0.0
  %2047 = vmatpush1.msra.mxu0 0.0
  %2048 = vmatprep.subr.mxu0 0.0
  %2049 = vmatpush1.msra.mxu0 0.0
  %2050 = vmatprep.subr.mxu0 0.0
  %2051 = vmatpush1.msra.mxu0 0.0
  %2052 = vmatprep.subr.mxu0 0.0
  %2053 = vmatpush1.msra.mxu0 0.0
  %2054 = vmatprep.subr.mxu0 0.0
  %2055 = vmatpush1.msra.mxu0 0.0
  %2056 = vmatprep.subr.mxu0 0.0
  %2057 = vmatpush1.msra.mxu0 0.0
  %2058 = vmatprep.subr.mxu0 0.0
  %2059 = vmatpush1.msra.mxu0 0.0
  %2060 = vmatprep.subr.mxu0 0.0
  %2061 = vmatpush1.msra.mxu0 0.0
  %2062 = vmatprep.subr.mxu0 0.0
  %2063 = vmatpush1.msra.mxu0 0.0
  %2064 = vmatprep.mubr.f32.mxu0 0.0
  %2065 = vmatmul.mubr.f32.gmra.mrb[0].mxu0 %v1872
  %v2066 = vpop.f32.mrb[0].mxu0
  %v2067 = vadd.f32 %v1997, %v2066
  %v2068 = vpop.f32.mrb[0].mxu0
  %2069 = vdwg.mxu0
  %v2070 = vmax.f32 %v2067, 0.0
  %v2072 = vrot.slane %v2070, 7
  %v2074 = vsel %vm45, 0.0, %v2072
  %v2075 = vsel %vm1866, 0.0, %v2074
  %v2076 = vrot.slane %v2070, 1
  %v2078 = vsel %vm70, %v2076, 0.0
  %v2079 = vsel %vm1871, 0.0, %v2078
  %s2080 = scalar_lea.vmem %s2, 2304
  %v2081 = vld [vmem:[%s2080] sm:$0xff]
  %v2082 = vld [vmem:[%s2080 + $0x8] sm:$0xff]
  %v2083 = vld [vmem:[%s2080 + $0x10] sm:$0xff]
  %v2084 = vld [vmem:[%s2080 + $0x18] sm:$0xff]
  %v2085 = vld [vmem:[%s2080 + $0x20] sm:$0xff]
  %v2086 = vld [vmem:[%s2080 + $0x28] sm:$0xff]
  %v2087 = vld [vmem:[%s2080 + $0x30] sm:$0xff]
  %v2088 = vld [vmem:[%s2080 + $0x38] sm:$0xff]
  %v2089 = vld [vmem:[%s2080 + $0x40] sm:$0xff]
  %v2090 = vld [vmem:[%s2080 + $0x48] sm:$0xff]
  %v2091 = vld [vmem:[%s2080 + $0x50] sm:$0xff]
  %v2092 = vld [vmem:[%s2080 + $0x58] sm:$0xff]
  %v2093 = vld [vmem:[%s2080 + $0x60] sm:$0xff]
  %v2094 = vld [vmem:[%s2080 + $0x68] sm:$0xff]
  %v2095 = vld [vmem:[%s2080 + $0x70] sm:$0xff]
  %v2096 = vld [vmem:[%s2080 + $0x78] sm:$0xff]
  %v2097 = vld [vmem:[%s2080 + $0x80] sm:$0xff]
  %v2098 = vld [vmem:[%s2080 + $0x88] sm:$0xff]
  %v2099 = vld [vmem:[%s2080 + $0x90] sm:$0xff]
  %v2100 = vld [vmem:[%s2080 + $0x98] sm:$0xff]
  %v2101 = vld [vmem:[%s2080 + $0xa0] sm:$0xff]
  %v2102 = vld [vmem:[%s2080 + $0xa8] sm:$0xff]
  %v2103 = vld [vmem:[%s2080 + $0xb0] sm:$0xff]
  %v2104 = vld [vmem:[%s2080 + $0xb8] sm:$0xff]
  %v2105 = vld [vmem:[%s2080 + $0xc0] sm:$0xff]
  %v2106 = vld [vmem:[%s2080 + $0xc8] sm:$0xff]
  %v2107 = vld [vmem:[%s2080 + $0xd0] sm:$0xff]
  %v2108 = vld [vmem:[%s2080 + $0xd8] sm:$0xff]
  %v2109 = vld [vmem:[%s2080 + $0xe0] sm:$0xff]
  %v2110 = vld [vmem:[%s2080 + $0xe8] sm:$0xff]
  %v2111 = vld [vmem:[%s2080 + $0xf0] sm:$0xff]
  %v2112 = vld [vmem:[%s2080 + $0xf8] sm:$0xff]
  %v2113 = vld [vmem:[%s2080 + $0x100] sm:$0xff]
  %v2114 = vld [vmem:[%s2080 + $0x108] sm:$0xff]
  %v2115 = vld [vmem:[%s2080 + $0x110] sm:$0xff]
  %v2116 = vld [vmem:[%s2080 + $0x118] sm:$0xff]
  %v2117 = vld [vmem:[%s2080 + $0x120] sm:$0xff]
  %v2118 = vld [vmem:[%s2080 + $0x128] sm:$0xff]
  %v2119 = vld [vmem:[%s2080 + $0x130] sm:$0xff]
  %v2120 = vld [vmem:[%s2080 + $0x138] sm:$0xff]
  %v2121 = vld [vmem:[%s2080 + $0x140] sm:$0xff]
  %v2122 = vld [vmem:[%s2080 + $0x148] sm:$0xff]
  %v2123 = vld [vmem:[%s2080 + $0x150] sm:$0xff]
  %v2124 = vld [vmem:[%s2080 + $0x158] sm:$0xff]
  %v2125 = vld [vmem:[%s2080 + $0x160] sm:$0xff]
  %v2126 = vld [vmem:[%s2080 + $0x168] sm:$0xff]
  %v2127 = vld [vmem:[%s2080 + $0x170] sm:$0xff]
  %v2128 = vld [vmem:[%s2080 + $0x178] sm:$0xff]
  %s2129 = scalar_lea.vmem %s3, 6
  %v2130 = vld [vmem:[%s2129] sm:$0x1]
  %v2132 = vlaneseq
  %v2133 = vshrl.u32 %v2132, 7
  %v2134 = vsub.s32 0, %v2133
  %v2135 = vrot.slane %v2130, %v2134
  %2137 = vmatprep.subr.mxu0 0.0
  %2138 = vmatpush1.msra.mxu0 %v2081
  %2139 = vmatprep.subr.mxu0 0.0
  %2140 = vmatpush1.msra.mxu0 %v2082
  %2141 = vmatprep.subr.mxu0 0.0
  %2142 = vmatpush1.msra.mxu0 %v2083
  %2143 = vmatprep.subr.mxu0 0.0
  %2144 = vmatpush1.msra.mxu0 %v2084
  %2145 = vmatprep.subr.mxu0 0.0
  %2146 = vmatpush1.msra.mxu0 %v2085
  %2147 = vmatprep.subr.mxu0 0.0
  %2148 = vmatpush1.msra.mxu0 %v2086
  %2149 = vmatprep.subr.mxu0 0.0
  %2150 = vmatpush1.msra.mxu0 %v2087
  %2151 = vmatprep.subr.mxu0 0.0
  %2152 = vmatpush1.msra.mxu0 %v2088
  %2153 = vmatprep.subr.mxu0 0.0
  %2154 = vmatpush1.msra.mxu0 %v2089
  %2155 = vmatprep.subr.mxu0 0.0
  %2156 = vmatpush1.msra.mxu0 %v2090
  %2157 = vmatprep.subr.mxu0 0.0
  %2158 = vmatpush1.msra.mxu0 %v2091
  %2159 = vmatprep.subr.mxu0 0.0
  %2160 = vmatpush1.msra.mxu0 %v2092
  %2161 = vmatprep.subr.mxu0 0.0
  %2162 = vmatpush1.msra.mxu0 %v2093
  %2163 = vmatprep.subr.mxu0 0.0
  %2164 = vmatpush1.msra.mxu0 %v2094
  %2165 = vmatprep.subr.mxu0 0.0
  %2166 = vmatpush1.msra.mxu0 %v2095
  %2167 = vmatprep.subr.mxu0 0.0
  %2168 = vmatpush1.msra.mxu0 %v2096
  %2169 = vmatprep.subr.mxu0 0.0
  %2170 = vmatpush1.msra.mxu0 %v2097
  %2171 = vmatprep.subr.mxu0 0.0
  %2172 = vmatpush1.msra.mxu0 %v2098
  %2173 = vmatprep.subr.mxu0 0.0
  %2174 = vmatpush1.msra.mxu0 %v2099
  %2175 = vmatprep.subr.mxu0 0.0
  %2176 = vmatpush1.msra.mxu0 %v2100
  %2177 = vmatprep.subr.mxu0 0.0
  %2178 = vmatpush1.msra.mxu0 %v2101
  %2179 = vmatprep.subr.mxu0 0.0
  %2180 = vmatpush1.msra.mxu0 %v2102
  %2181 = vmatprep.subr.mxu0 0.0
  %2182 = vmatpush1.msra.mxu0 %v2103
  %2183 = vmatprep.subr.mxu0 0.0
  %2184 = vmatpush1.msra.mxu0 %v2104
  %2185 = vmatprep.subr.mxu0 0.0
  %2186 = vmatpush1.msra.mxu0 %v2105
  %2187 = vmatprep.subr.mxu0 0.0
  %2188 = vmatpush1.msra.mxu0 %v2106
  %2189 = vmatprep.subr.mxu0 0.0
  %2190 = vmatpush1.msra.mxu0 %v2107
  %2191 = vmatprep.subr.mxu0 0.0
  %2192 = vmatpush1.msra.mxu0 %v2108
  %2193 = vmatprep.subr.mxu0 0.0
  %2194 = vmatpush1.msra.mxu0 %v2109
  %2195 = vmatprep.subr.mxu0 0.0
  %2196 = vmatpush1.msra.mxu0 %v2110
  %2197 = vmatprep.subr.mxu0 0.0
  %2198 = vmatpush1.msra.mxu0 %v2111
  %2199 = vmatprep.subr.mxu0 0.0
  %2200 = vmatpush1.msra.mxu0 %v2112
  %2201 = vmatprep.mubr.f32.mxu0 %v2070
  %2202 = vmatmul.mubr.f32.gmra.mrb[0].mxu0 %v2075
  %v2203 = vpop.f32.mrb[0].mxu0
  %v2204 = vadd.f32 %v2135, %v2203
  %v2205 = vpop.f32.mrb[0].mxu0
  %2206 = vdwg.mxu0
  %2207 = vmatprep.subr.mxu0 0.0
  %2208 = vmatpush1.msra.mxu0 %v2113
  %2209 = vmatprep.subr.mxu0 0.0
  %2210 = vmatpush1.msra.mxu0 %v2114
  %2211 = vmatprep.subr.mxu0 0.0
  %2212 = vmatpush1.msra.mxu0 %v2115
  %2213 = vmatprep.subr.mxu0 0.0
  %2214 = vmatpush1.msra.mxu0 %v2116
  %2215 = vmatprep.subr.mxu0 0.0
  %2216 = vmatpush1.msra.mxu0 %v2117
  %2217 = vmatprep.subr.mxu0 0.0
  %2218 = vmatpush1.msra.mxu0 %v2118
  %2219 = vmatprep.subr.mxu0 0.0
  %2220 = vmatpush1.msra.mxu0 %v2119
  %2221 = vmatprep.subr.mxu0 0.0
  %2222 = vmatpush1.msra.mxu0 %v2120
  %2223 = vmatprep.subr.mxu0 0.0
  %2224 = vmatpush1.msra.mxu0 %v2121
  %2225 = vmatprep.subr.mxu0 0.0
  %2226 = vmatpush1.msra.mxu0 %v2122
  %2227 = vmatprep.subr.mxu0 0.0
  %2228 = vmatpush1.msra.mxu0 %v2123
  %2229 = vmatprep.subr.mxu0 0.0
  %2230 = vmatpush1.msra.mxu0 %v2124
  %2231 = vmatprep.subr.mxu0 0.0
  %2232 = vmatpush1.msra.mxu0 %v2125
  %2233 = vmatprep.subr.mxu0 0.0
  %2234 = vmatpush1.msra.mxu0 %v2126
  %2235 = vmatprep.subr.mxu0 0.0
  %2236 = vmatpush1.msra.mxu0 %v2127
  %2237 = vmatprep.subr.mxu0 0.0
  %2238 = vmatpush1.msra.mxu0 %v2128
  %2239 = vmatprep.subr.mxu0 0.0
  %2240 = vmatpush1.msra.mxu0 0.0
  %2241 = vmatprep.subr.mxu0 0.0
  %2242 = vmatpush1.msra.mxu0 0.0
  %2243 = vmatprep.subr.mxu0 0.0
  %2244 = vmatpush1.msra.mxu0 0.0
  %2245 = vmatprep.subr.mxu0 0.0
  %2246 = vmatpush1.msra.mxu0 0.0
  %2247 = vmatprep.subr.mxu0 0.0
  %2248 = vmatpush1.msra.mxu0 0.0
  %2249 = vmatprep.subr.mxu0 0.0
  %2250 = vmatpush1.msra.mxu0 0.0
  %2251 = vmatprep.subr.mxu0 0.0
  %2252 = vmatpush1.msra.mxu0 0.0
  %2253 = vmatprep.subr.mxu0 0.0
  %2254 = vmatpush1.msra.mxu0 0.0
  %2255 = vmatprep.subr.mxu0 0.0
  %2256 = vmatpush1.msra.mxu0 0.0
  %2257 = vmatprep.subr.mxu0 0.0
  %2258 = vmatpush1.msra.mxu0 0.0
  %2259 = vmatprep.subr.mxu0 0.0
  %2260 = vmatpush1.msra.mxu0 0.0
  %2261 = vmatprep.subr.mxu0 0.0
  %2262 = vmatpush1.msra.mxu0 0.0
  %2263 = vmatprep.subr.mxu0 0.0
  %2264 = vmatpush1.msra.mxu0 0.0
  %2265 = vmatprep.subr.mxu0 0.0
  %2266 = vmatpush1.msra.mxu0 0.0
  %2267 = vmatprep.subr.mxu0 0.0
  %2268 = vmatpush1.msra.mxu0 0.0
  %2269 = vmatprep.subr.mxu0 0.0
  %2270 = vmatpush1.msra.mxu0 0.0
  %2271 = vmatprep.mubr.f32.mxu0 0.0
  %2272 = vmatmul.mubr.f32.gmra.mrb[0].mxu0 %v2079
  %v2273 = vpop.f32.mrb[0].mxu0
  %v2274 = vadd.f32 %v2204, %v2273
  %v2275 = vpop.f32.mrb[0].mxu0
  %2276 = vdwg.mxu0
  %v2277 = vadd.f32 %v2274, %v1858
  %v2278 = vld [vmem:[%s6] sm:$0xff]
  %v2279 = vld [vmem:[%s6 + $0x8] sm:$0xff]
  %v2280 = vld [vmem:[%s6 + $0x10] sm:$0xff]
  %v2281 = vld [vmem:[%s6 + $0x18] sm:$0xff]
  %v2282 = vld [vmem:[%s6 + $0x20] sm:$0xff]
  %v2283 = vld [vmem:[%s6 + $0x28] sm:$0xff]
  %v2284 = vld [vmem:[%s6 + $0x30] sm:$0xff]
  %v2285 = vld [vmem:[%s6 + $0x38] sm:$0xff]
  %v2286 = vld [vmem:[%s6 + $0x40] sm:$0xff]
  %v2287 = vld [vmem:[%s6 + $0x48] sm:$0xff]
  %v2288 = vld [vmem:[%s6 + $0x50] sm:$0xff]
  %v2289 = vld [vmem:[%s6 + $0x58] sm:$0xff]
  %v2290 = vld [vmem:[%s6 + $0x60] sm:$0xff]
  %v2291 = vld [vmem:[%s6 + $0x68] sm:$0xff]
  %v2292 = vld [vmem:[%s6 + $0x70] sm:$0xff]
  %v2293 = vld [vmem:[%s6 + $0x78] sm:$0xff]
  %v2294 = vld [vmem:[%s6 + $0x80] sm:$0xff]
  %v2295 = vld [vmem:[%s6 + $0x88] sm:$0xff]
  %v2296 = vld [vmem:[%s6 + $0x90] sm:$0xff]
  %v2297 = vld [vmem:[%s6 + $0x98] sm:$0xff]
  %v2298 = vld [vmem:[%s6 + $0xa0] sm:$0xff]
  %v2299 = vld [vmem:[%s6 + $0xa8] sm:$0xff]
  %v2300 = vld [vmem:[%s6 + $0xb0] sm:$0xff]
  %v2301 = vld [vmem:[%s6 + $0xb8] sm:$0xff]
  %v2302 = vld [vmem:[%s6 + $0xc0] sm:$0xff]
  %v2303 = vld [vmem:[%s6 + $0xc8] sm:$0xff]
  %v2304 = vld [vmem:[%s6 + $0xd0] sm:$0xff]
  %v2305 = vld [vmem:[%s6 + $0xd8] sm:$0xff]
  %v2306 = vld [vmem:[%s6 + $0xe0] sm:$0xff]
  %v2307 = vld [vmem:[%s6 + $0xe8] sm:$0xff]
  %v2308 = vld [vmem:[%s6 + $0xf0] sm:$0xff]
  %v2309 = vld [vmem:[%s6 + $0xf8] sm:$0xff]
  %2310 = vmatprep.subr.mxu0 %v2279
  %2311 = vmatpush1.msra.mxu0 %v2278
  %2312 = vmatprep.subr.mxu0 %v2281
  %2313 = vmatpush1.msra.mxu0 %v2280
  %2314 = vmatprep.subr.mxu0 %v2283
  %2315 = vmatpush1.msra.mxu0 %v2282
  %2316 = vmatprep.subr.mxu0 %v2285
  %2317 = vmatpush1.msra.mxu0 %v2284
  %2318 = vmatprep.subr.mxu0 %v2287
  %2319 = vmatpush1.msra.mxu0 %v2286
  %2320 = vmatprep.subr.mxu0 %v2289
  %2321 = vmatpush1.msra.mxu0 %v2288
  %2322 = vmatprep.subr.mxu0 %v2291
  %2323 = vmatpush1.msra.mxu0 %v2290
  %2324 = vmatprep.subr.mxu0 %v2293
  %2325 = vmatpush1.msra.mxu0 %v2292
  %2326 = vmatprep.subr.mxu0 %v2295
  %2327 = vmatpush1.msra.mxu0 %v2294
  %2328 = vmatprep.subr.mxu0 %v2297
  %2329 = vmatpush1.msra.mxu0 %v2296
  %2330 = vmatprep.subr.mxu0 %v2299
  %2331 = vmatpush1.msra.mxu0 %v2298
  %2332 = vmatprep.subr.mxu0 %v2301
  %2333 = vmatpush1.msra.mxu0 %v2300
  %2334 = vmatprep.subr.mxu0 %v2303
  %2335 = vmatpush1.msra.mxu0 %v2302
  %2336 = vmatprep.subr.mxu0 %v2305
  %2337 = vmatpush1.msra.mxu0 %v2304
  %2338 = vmatprep.subr.mxu0 %v2307
  %2339 = vmatpush1.msra.mxu0 %v2306
  %2340 = vmatprep.subr.mxu0 %v2309
  %2341 = vmatpush1.msra.mxu0 %v2308
  %2342 = vmatprep.subr.mxu0 0.0
  %2343 = vmatpush1.msra.mxu0 0.0
  %2344 = vmatprep.subr.mxu0 0.0
  %2345 = vmatpush1.msra.mxu0 0.0
  %2346 = vmatprep.subr.mxu0 0.0
  %2347 = vmatpush1.msra.mxu0 0.0
  %2348 = vmatprep.subr.mxu0 0.0
  %2349 = vmatpush1.msra.mxu0 0.0
  %2350 = vmatprep.subr.mxu0 0.0
  %2351 = vmatpush1.msra.mxu0 0.0
  %2352 = vmatprep.subr.mxu0 0.0
  %2353 = vmatpush1.msra.mxu0 0.0
  %2354 = vmatprep.subr.mxu0 0.0
  %2355 = vmatpush1.msra.mxu0 0.0
  %2356 = vmatprep.subr.mxu0 0.0
  %2357 = vmatpush1.msra.mxu0 0.0
  %2358 = vmatprep.subr.mxu0 0.0
  %2359 = vmatpush1.msra.mxu0 0.0
  %2360 = vmatprep.subr.mxu0 0.0
  %2361 = vmatpush1.msra.mxu0 0.0
  %2362 = vmatprep.subr.mxu0 0.0
  %2363 = vmatpush1.msra.mxu0 0.0
  %2364 = vmatprep.subr.mxu0 0.0
  %2365 = vmatpush1.msra.mxu0 0.0
  %2366 = vmatprep.subr.mxu0 0.0
  %2367 = vmatpush1.msra.mxu0 0.0
  %2368 = vmatprep.subr.mxu0 0.0
  %2369 = vmatpush1.msra.mxu0 0.0
  %2370 = vmatprep.subr.mxu0 0.0
  %2371 = vmatpush1.msra.mxu0 0.0
  %2372 = vmatprep.subr.mxu0 0.0
  %2373 = vmatpush1.msra.mxu0 0.0
  %2374 = vmatprep.mubr.f32.mxu0 0.0
  %2375 = vmatmul.mubr.f32.gmra.mrb[0].mxu0 %v2277
  %v2376 = vpop.f32.mrb[0].mxu0
  %v2377 = vadd.f32 0.0, %v2376
  %v2378 = vpop.f32.mrb[0].mxu0
  %v2379 = vadd.f32 0.0, %v2378
  %2380 = vdwg.mxu0
  %v2381 = vmul.u32 %v851, 2
  %vm2382 = vcmp.eq.s32.totalorder %v37, %v2381
  %vm2383 = vcmp.eq.s32.totalorder %v38, %v2381
  %v2384 = vsel %vm2382, 1, 0
  %v2385 = vsel %vm2383, 1, 0
  %v2386 = vcvt.s32.f32 %v2384
  %v2387 = vcvt.s32.f32 %v2385
  %v2388 = vadd.s32 %v2381, 1
  %vm2389 = vcmp.eq.s32.totalorder %v37, %v2388
  %vm2390 = vcmp.eq.s32.totalorder %v38, %v2388
  %v2391 = vsel %vm2389, 1, 0
  %v2392 = vsel %vm2390, 1, 0
  %v2393 = vcvt.s32.f32 %v2391
  %v2394 = vcvt.s32.f32 %v2392
  %vm2395 = vcmask 64512
  %v2397 = vsel %vm2395, %v2393, 0
  %v2400 = vsel %vm2395, %v2394, 0
  %2402 = vmatprep.subr.mxu0 0.0
  %2403 = vmatpush1.msra.mxu0 %v2379
  %2404 = vmatprep.subr.mxu0 0.0
  %2405 = vmatpush1.msra.mxu0 0.0
  %2406 = vmatprep.subr.mxu0 0.0
  %2407 = vmatpush1.msra.mxu0 0.0
  %2408 = vmatprep.subr.mxu0 0.0
  %2409 = vmatpush1.msra.mxu0 0.0
  %2410 = vmatprep.subr.mxu0 0.0
  %2411 = vmatpush1.msra.mxu0 0.0
  %2412 = vmatprep.subr.mxu0 0.0
  %2413 = vmatpush1.msra.mxu0 0.0
  %2414 = vmatprep.subr.mxu0 0.0
  %2415 = vmatpush1.msra.mxu0 0.0
  %2416 = vmatprep.subr.mxu0 0.0
  %2417 = vmatpush1.msra.mxu0 0.0
  %2418 = vmatprep.subr.mxu0 0.0
  %2419 = vmatpush1.msra.mxu0 0.0
  %2420 = vmatprep.subr.mxu0 0.0
  %2421 = vmatpush1.msra.mxu0 0.0
  %2422 = vmatprep.subr.mxu0 0.0
  %2423 = vmatpush1.msra.mxu0 0.0
  %2424 = vmatprep.subr.mxu0 0.0
  %2425 = vmatpush1.msra.mxu0 0.0
  %2426 = vmatprep.subr.mxu0 0.0
  %2427 = vmatpush1.msra.mxu0 0.0
  %2428 = vmatprep.subr.mxu0 0.0
  %2429 = vmatpush1.msra.mxu0 0.0
  %2430 = vmatprep.subr.mxu0 0.0
  %2431 = vmatpush1.msra.mxu0 0.0
  %2432 = vmatprep.subr.mxu0 0.0
  %2433 = vmatpush1.msra.mxu0 0.0
  %2434 = vmatprep.subr.mxu0 0.0
  %2435 = vmatpush1.msra.mxu0 0.0
  %2436 = vmatprep.subr.mxu0 0.0
  %2437 = vmatpush1.msra.mxu0 0.0
  %2438 = vmatprep.subr.mxu0 0.0
  %2439 = vmatpush1.msra.mxu0 0.0
  %2440 = vmatprep.subr.mxu0 0.0
  %2441 = vmatpush1.msra.mxu0 0.0
  %2442 = vmatprep.subr.mxu0 0.0
  %2443 = vmatpush1.msra.mxu0 0.0
  %2444 = vmatprep.subr.mxu0 0.0
  %2445 = vmatpush1.msra.mxu0 0.0
  %2446 = vmatprep.subr.mxu0 0.0
  %2447 = vmatpush1.msra.mxu0 0.0
  %2448 = vmatprep.subr.mxu0 0.0
  %2449 = vmatpush1.msra.mxu0 0.0
  %2450 = vmatprep.subr.mxu0 0.0
  %2451 = vmatpush1.msra.mxu0 0.0
  %2452 = vmatprep.subr.mxu0 0.0
  %2453 = vmatpush1.msra.mxu0 0.0
  %2454 = vmatprep.subr.mxu0 0.0
  %2455 = vmatpush1.msra.mxu0 0.0
  %2456 = vmatprep.subr.mxu0 0.0
  %2457 = vmatpush1.msra.mxu0 0.0
  %2458 = vmatprep.subr.mxu0 0.0
  %2459 = vmatpush1.msra.mxu0 0.0
  %2460 = vmatprep.subr.mxu0 0.0
  %2461 = vmatpush1.msra.mxu0 0.0
  %2462 = vmatprep.subr.mxu0 0.0
  %2463 = vmatpush1.msra.mxu0 0.0
  %2464 = vmatprep.subr.mxu0 0.0
  %2465 = vmatpush1.msra.mxu0 0.0
  %2466 = vmatprep.mubr.f32.mxu0 0.0
  %2467 = vmatmul.mubr.f32.gmra.mrb[0].mxu0 %v2397
  %v2468 = vpop.f32.mrb[0].mxu0
  %v2469 = vadd.f32 0.0, %v2468
  %v2470 = vpop.f32.mrb[0].mxu0
  %2471 = vmatprep.mubr.f32.mxu0 0.0
  %2472 = vmatmul.mubr.f32.gmra.mrb[0].mxu0 %v2400
  %v2473 = vpop.f32.mrb[0].mxu0
  %v2474 = vadd.f32 0.0, %v2473
  %v2475 = vpop.f32.mrb[0].mxu0
  %2476 = vdwg.mxu0
  %v2478 = vsel %vm2395, %v2386, 0
  %v2481 = vsel %vm2395, %v2387, 0
  %2483 = vmatprep.subr.mxu0 0.0
  %2484 = vmatpush1.msra.mxu0 %v2377
  %2485 = vmatprep.subr.mxu0 0.0
  %2486 = vmatpush1.msra.mxu0 0.0
  %2487 = vmatprep.subr.mxu0 0.0
  %2488 = vmatpush1.msra.mxu0 0.0
  %2489 = vmatprep.subr.mxu0 0.0
  %2490 = vmatpush1.msra.mxu0 0.0
  %2491 = vmatprep.subr.mxu0 0.0
  %2492 = vmatpush1.msra.mxu0 0.0
  %2493 = vmatprep.subr.mxu0 0.0
  %2494 = vmatpush1.msra.mxu0 0.0
  %2495 = vmatprep.subr.mxu0 0.0
  %2496 = vmatpush1.msra.mxu0 0.0
  %2497 = vmatprep.subr.mxu0 0.0
  %2498 = vmatpush1.msra.mxu0 0.0
  %2499 = vmatprep.subr.mxu0 0.0
  %2500 = vmatpush1.msra.mxu0 0.0
  %2501 = vmatprep.subr.mxu0 0.0
  %2502 = vmatpush1.msra.mxu0 0.0
  %2503 = vmatprep.subr.mxu0 0.0
  %2504 = vmatpush1.msra.mxu0 0.0
  %2505 = vmatprep.subr.mxu0 0.0
  %2506 = vmatpush1.msra.mxu0 0.0
  %2507 = vmatprep.subr.mxu0 0.0
  %2508 = vmatpush1.msra.mxu0 0.0
  %2509 = vmatprep.subr.mxu0 0.0
  %2510 = vmatpush1.msra.mxu0 0.0
  %2511 = vmatprep.subr.mxu0 0.0
  %2512 = vmatpush1.msra.mxu0 0.0
  %2513 = vmatprep.subr.mxu0 0.0
  %2514 = vmatpush1.msra.mxu0 0.0
  %2515 = vmatprep.subr.mxu0 0.0
  %2516 = vmatpush1.msra.mxu0 0.0
  %2517 = vmatprep.subr.mxu0 0.0
  %2518 = vmatpush1.msra.mxu0 0.0
  %2519 = vmatprep.subr.mxu0 0.0
  %2520 = vmatpush1.msra.mxu0 0.0
  %2521 = vmatprep.subr.mxu0 0.0
  %2522 = vmatpush1.msra.mxu0 0.0
  %2523 = vmatprep.subr.mxu0 0.0
  %2524 = vmatpush1.msra.mxu0 0.0
  %2525 = vmatprep.subr.mxu0 0.0
  %2526 = vmatpush1.msra.mxu0 0.0
  %2527 = vmatprep.subr.mxu0 0.0
  %2528 = vmatpush1.msra.mxu0 0.0
  %2529 = vmatprep.subr.mxu0 0.0
  %2530 = vmatpush1.msra.mxu0 0.0
  %2531 = vmatprep.subr.mxu0 0.0
  %2532 = vmatpush1.msra.mxu0 0.0
  %2533 = vmatprep.subr.mxu0 0.0
  %2534 = vmatpush1.msra.mxu0 0.0
  %2535 = vmatprep.subr.mxu0 0.0
  %2536 = vmatpush1.msra.mxu0 0.0
  %2537 = vmatprep.subr.mxu0 0.0
  %2538 = vmatpush1.msra.mxu0 0.0
  %2539 = vmatprep.subr.mxu0 0.0
  %2540 = vmatpush1.msra.mxu0 0.0
  %2541 = vmatprep.subr.mxu0 0.0
  %2542 = vmatpush1.msra.mxu0 0.0
  %2543 = vmatprep.subr.mxu0 0.0
  %2544 = vmatpush1.msra.mxu0 0.0
  %2545 = vmatprep.subr.mxu0 0.0
  %2546 = vmatpush1.msra.mxu0 0.0
  %2547 = vmatprep.mubr.f32.mxu0 0.0
  %2548 = vmatmul.mubr.f32.gmra.mrb[0].mxu0 %v2478
  %v2549 = vpop.f32.mrb[0].mxu0
  %v2550 = vadd.f32 %v2469, %v2549
  %v2551 = vpop.f32.mrb[0].mxu0
  %2552 = vmatprep.mubr.f32.mxu0 0.0
  %2553 = vmatmul.mubr.f32.gmra.mrb[0].mxu0 %v2481
  %v2554 = vpop.f32.mrb[0].mxu0
  %v2555 = vadd.f32 %v2474, %v2554
  %v2556 = vpop.f32.mrb[0].mxu0
  %2557 = vdwg.mxu0
  %v2558 = vadd.f32 %v1603, %v2550
  %v2559 = vadd.f32 %v1604, %v2555
  %v2562 = vrot.slane %v2558, 7
  %v2563 = vrot.slane %v2559, 7
  %v2564 = vsel %vm45, %v2562, %v2563
  %v2567 = vsel %vm45, 0.0, %v2562
  %v2568 = vsel %vm1155, 0.0, %v2567
  %v2569 = vsel %vm1156, 0.0, %v2564
  %v2570 = vrot.slane %v2558, 1
  %v2571 = vrot.slane %v2559, 1
  %v2572 = vsel %vm70, %v2570, %v2571
  %v2575 = vsel %vm70, %v2571, 0.0
  %v2576 = vsel %vm1165, 0.0, %v2572
  %v2577 = vsel %vm1166, 0.0, %v2575
  %s2578 = scalar_lea.vmem %s2, 2688
  %v2579 = vld [vmem:[%s2578] sm:$0xff]
  %v2580 = vld [vmem:[%s2578 + $0x8] sm:$0xff]
  %v2581 = vld [vmem:[%s2578 + $0x10] sm:$0xff]
  %v2582 = vld [vmem:[%s2578 + $0x18] sm:$0xff]
  %v2583 = vld [vmem:[%s2578 + $0x20] sm:$0xff]
  %v2584 = vld [vmem:[%s2578 + $0x28] sm:$0xff]
  %v2585 = vld [vmem:[%s2578 + $0x30] sm:$0xff]
  %v2586 = vld [vmem:[%s2578 + $0x38] sm:$0xff]
  %v2587 = vld [vmem:[%s2578 + $0x40] sm:$0xff]
  %v2588 = vld [vmem:[%s2578 + $0x48] sm:$0xff]
  %v2589 = vld [vmem:[%s2578 + $0x50] sm:$0xff]
  %v2590 = vld [vmem:[%s2578 + $0x58] sm:$0xff]
  %v2591 = vld [vmem:[%s2578 + $0x60] sm:$0xff]
  %v2592 = vld [vmem:[%s2578 + $0x68] sm:$0xff]
  %v2593 = vld [vmem:[%s2578 + $0x70] sm:$0xff]
  %v2594 = vld [vmem:[%s2578 + $0x78] sm:$0xff]
  %v2595 = vld [vmem:[%s2578 + $0x80] sm:$0xff]
  %v2596 = vld [vmem:[%s2578 + $0x88] sm:$0xff]
  %v2597 = vld [vmem:[%s2578 + $0x90] sm:$0xff]
  %v2598 = vld [vmem:[%s2578 + $0x98] sm:$0xff]
  %v2599 = vld [vmem:[%s2578 + $0xa0] sm:$0xff]
  %v2600 = vld [vmem:[%s2578 + $0xa8] sm:$0xff]
  %v2601 = vld [vmem:[%s2578 + $0xb0] sm:$0xff]
  %v2602 = vld [vmem:[%s2578 + $0xb8] sm:$0xff]
  %v2603 = vld [vmem:[%s2578 + $0xc0] sm:$0xff]
  %v2604 = vld [vmem:[%s2578 + $0xc8] sm:$0xff]
  %v2605 = vld [vmem:[%s2578 + $0xd0] sm:$0xff]
  %v2606 = vld [vmem:[%s2578 + $0xd8] sm:$0xff]
  %v2607 = vld [vmem:[%s2578 + $0xe0] sm:$0xff]
  %v2608 = vld [vmem:[%s2578 + $0xe8] sm:$0xff]
  %v2609 = vld [vmem:[%s2578 + $0xf0] sm:$0xff]
  %v2610 = vld [vmem:[%s2578 + $0xf8] sm:$0xff]
  %v2611 = vld [vmem:[%s2578 + $0x100] sm:$0xff]
  %v2612 = vld [vmem:[%s2578 + $0x108] sm:$0xff]
  %v2613 = vld [vmem:[%s2578 + $0x110] sm:$0xff]
  %v2614 = vld [vmem:[%s2578 + $0x118] sm:$0xff]
  %v2615 = vld [vmem:[%s2578 + $0x120] sm:$0xff]
  %v2616 = vld [vmem:[%s2578 + $0x128] sm:$0xff]
  %v2617 = vld [vmem:[%s2578 + $0x130] sm:$0xff]
  %v2618 = vld [vmem:[%s2578 + $0x138] sm:$0xff]
  %v2619 = vld [vmem:[%s2578 + $0x140] sm:$0xff]
  %v2620 = vld [vmem:[%s2578 + $0x148] sm:$0xff]
  %v2621 = vld [vmem:[%s2578 + $0x150] sm:$0xff]
  %v2622 = vld [vmem:[%s2578 + $0x158] sm:$0xff]
  %v2623 = vld [vmem:[%s2578 + $0x160] sm:$0xff]
  %v2624 = vld [vmem:[%s2578 + $0x168] sm:$0xff]
  %v2625 = vld [vmem:[%s2578 + $0x170] sm:$0xff]
  %v2626 = vld [vmem:[%s2578 + $0x178] sm:$0xff]
  %s2627 = scalar_lea.vmem %s3, 7
  %v2628 = vld [vmem:[%s2627] sm:$0x1]
  %v2630 = vlaneseq
  %v2631 = vshrl.u32 %v2630, 7
  %v2632 = vsub.s32 0, %v2631
  %v2633 = vrot.slane %v2628, %v2632
  %2635 = vmatprep.subr.mxu0 0.0
  %2636 = vmatpush1.msra.mxu0 %v2579
  %2637 = vmatprep.subr.mxu0 0.0
  %2638 = vmatpush1.msra.mxu0 %v2580
  %2639 = vmatprep.subr.mxu0 0.0
  %2640 = vmatpush1.msra.mxu0 %v2581
  %2641 = vmatprep.subr.mxu0 0.0
  %2642 = vmatpush1.msra.mxu0 %v2582
  %2643 = vmatprep.subr.mxu0 0.0
  %2644 = vmatpush1.msra.mxu0 %v2583
  %2645 = vmatprep.subr.mxu0 0.0
  %2646 = vmatpush1.msra.mxu0 %v2584
  %2647 = vmatprep.subr.mxu0 0.0
  %2648 = vmatpush1.msra.mxu0 %v2585
  %2649 = vmatprep.subr.mxu0 0.0
  %2650 = vmatpush1.msra.mxu0 %v2586
  %2651 = vmatprep.subr.mxu0 0.0
  %2652 = vmatpush1.msra.mxu0 %v2587
  %2653 = vmatprep.subr.mxu0 0.0
  %2654 = vmatpush1.msra.mxu0 %v2588
  %2655 = vmatprep.subr.mxu0 0.0
  %2656 = vmatpush1.msra.mxu0 %v2589
  %2657 = vmatprep.subr.mxu0 0.0
  %2658 = vmatpush1.msra.mxu0 %v2590
  %2659 = vmatprep.subr.mxu0 0.0
  %2660 = vmatpush1.msra.mxu0 %v2591
  %2661 = vmatprep.subr.mxu0 0.0
  %2662 = vmatpush1.msra.mxu0 %v2592
  %2663 = vmatprep.subr.mxu0 0.0
  %2664 = vmatpush1.msra.mxu0 %v2593
  %2665 = vmatprep.subr.mxu0 0.0
  %2666 = vmatpush1.msra.mxu0 %v2594
  %2667 = vmatprep.subr.mxu0 0.0
  %2668 = vmatpush1.msra.mxu0 %v2595
  %2669 = vmatprep.subr.mxu0 0.0
  %2670 = vmatpush1.msra.mxu0 %v2596
  %2671 = vmatprep.subr.mxu0 0.0
  %2672 = vmatpush1.msra.mxu0 %v2597
  %2673 = vmatprep.subr.mxu0 0.0
  %2674 = vmatpush1.msra.mxu0 %v2598
  %2675 = vmatprep.subr.mxu0 0.0
  %2676 = vmatpush1.msra.mxu0 %v2599
  %2677 = vmatprep.subr.mxu0 0.0
  %2678 = vmatpush1.msra.mxu0 %v2600
  %2679 = vmatprep.subr.mxu0 0.0
  %2680 = vmatpush1.msra.mxu0 %v2601
  %2681 = vmatprep.subr.mxu0 0.0
  %2682 = vmatpush1.msra.mxu0 %v2602
  %2683 = vmatprep.subr.mxu0 0.0
  %2684 = vmatpush1.msra.mxu0 %v2603
  %2685 = vmatprep.subr.mxu0 0.0
  %2686 = vmatpush1.msra.mxu0 %v2604
  %2687 = vmatprep.subr.mxu0 0.0
  %2688 = vmatpush1.msra.mxu0 %v2605
  %2689 = vmatprep.subr.mxu0 0.0
  %2690 = vmatpush1.msra.mxu0 %v2606
  %2691 = vmatprep.subr.mxu0 0.0
  %2692 = vmatpush1.msra.mxu0 %v2607
  %2693 = vmatprep.subr.mxu0 0.0
  %2694 = vmatpush1.msra.mxu0 %v2608
  %2695 = vmatprep.subr.mxu0 0.0
  %2696 = vmatpush1.msra.mxu0 %v2609
  %2697 = vmatprep.subr.mxu0 0.0
  %2698 = vmatpush1.msra.mxu0 %v2610
  %2699 = vmatprep.mubr.f32.mxu0 %v2558
  %2700 = vmatmul.mubr.f32.gmra.mrb[0].mxu0 %v2568
  %v2701 = vpop.f32.mrb[0].mxu0
  %v2702 = vadd.f32 %v2633, %v2701
  %v2703 = vpop.f32.mrb[0].mxu0
  %2704 = vmatprep.mubr.f32.mxu0 %v2559
  %2705 = vmatmul.mubr.f32.gmra.mrb[0].mxu0 %v2569
  %v2706 = vpop.f32.mrb[0].mxu0
  %v2707 = vadd.f32 %v2633, %v2706
  %v2708 = vpop.f32.mrb[0].mxu0
  %2709 = vdwg.mxu0
  %2710 = vmatprep.subr.mxu0 0.0
  %2711 = vmatpush1.msra.mxu0 %v2611
  %2712 = vmatprep.subr.mxu0 0.0
  %2713 = vmatpush1.msra.mxu0 %v2612
  %2714 = vmatprep.subr.mxu0 0.0
  %2715 = vmatpush1.msra.mxu0 %v2613
  %2716 = vmatprep.subr.mxu0 0.0
  %2717 = vmatpush1.msra.mxu0 %v2614
  %2718 = vmatprep.subr.mxu0 0.0
  %2719 = vmatpush1.msra.mxu0 %v2615
  %2720 = vmatprep.subr.mxu0 0.0
  %2721 = vmatpush1.msra.mxu0 %v2616
  %2722 = vmatprep.subr.mxu0 0.0
  %2723 = vmatpush1.msra.mxu0 %v2617
  %2724 = vmatprep.subr.mxu0 0.0
  %2725 = vmatpush1.msra.mxu0 %v2618
  %2726 = vmatprep.subr.mxu0 0.0
  %2727 = vmatpush1.msra.mxu0 %v2619
  %2728 = vmatprep.subr.mxu0 0.0
  %2729 = vmatpush1.msra.mxu0 %v2620
  %2730 = vmatprep.subr.mxu0 0.0
  %2731 = vmatpush1.msra.mxu0 %v2621
  %2732 = vmatprep.subr.mxu0 0.0
  %2733 = vmatpush1.msra.mxu0 %v2622
  %2734 = vmatprep.subr.mxu0 0.0
  %2735 = vmatpush1.msra.mxu0 %v2623
  %2736 = vmatprep.subr.mxu0 0.0
  %2737 = vmatpush1.msra.mxu0 %v2624
  %2738 = vmatprep.subr.mxu0 0.0
  %2739 = vmatpush1.msra.mxu0 %v2625
  %2740 = vmatprep.subr.mxu0 0.0
  %2741 = vmatpush1.msra.mxu0 %v2626
  %2742 = vmatprep.subr.mxu0 0.0
  %2743 = vmatpush1.msra.mxu0 0.0
  %2744 = vmatprep.subr.mxu0 0.0
  %2745 = vmatpush1.msra.mxu0 0.0
  %2746 = vmatprep.subr.mxu0 0.0
  %2747 = vmatpush1.msra.mxu0 0.0
  %2748 = vmatprep.subr.mxu0 0.0
  %2749 = vmatpush1.msra.mxu0 0.0
  %2750 = vmatprep.subr.mxu0 0.0
  %2751 = vmatpush1.msra.mxu0 0.0
  %2752 = vmatprep.subr.mxu0 0.0
  %2753 = vmatpush1.msra.mxu0 0.0
  %2754 = vmatprep.subr.mxu0 0.0
  %2755 = vmatpush1.msra.mxu0 0.0
  %2756 = vmatprep.subr.mxu0 0.0
  %2757 = vmatpush1.msra.mxu0 0.0
  %2758 = vmatprep.subr.mxu0 0.0
  %2759 = vmatpush1.msra.mxu0 0.0
  %2760 = vmatprep.subr.mxu0 0.0
  %2761 = vmatpush1.msra.mxu0 0.0
  %2762 = vmatprep.subr.mxu0 0.0
  %2763 = vmatpush1.msra.mxu0 0.0
  %2764 = vmatprep.subr.mxu0 0.0
  %2765 = vmatpush1.msra.mxu0 0.0
  %2766 = vmatprep.subr.mxu0 0.0
  %2767 = vmatpush1.msra.mxu0 0.0
  %2768 = vmatprep.subr.mxu0 0.0
  %2769 = vmatpush1.msra.mxu0 0.0
  %2770 = vmatprep.subr.mxu0 0.0
  %2771 = vmatpush1.msra.mxu0 0.0
  %2772 = vmatprep.subr.mxu0 0.0
  %2773 = vmatpush1.msra.mxu0 0.0
  %2774 = vmatprep.mubr.f32.mxu0 0.0
  %2775 = vmatmul.mubr.f32.gmra.mrb[0].mxu0 %v2576
  %v2776 = vpop.f32.mrb[0].mxu0
  %v2777 = vadd.f32 %v2702, %v2776
  %v2778 = vpop.f32.mrb[0].mxu0
  %2779 = vmatprep.mubr.f32.mxu0 0.0
  %2780 = vmatmul.mubr.f32.gmra.mrb[0].mxu0 %v2577
  %v2781 = vpop.f32.mrb[0].mxu0
  %v2782 = vadd.f32 %v2707, %v2781
  %v2783 = vpop.f32.mrb[0].mxu0
  %2784 = vdwg.mxu0
  %v2785 = vmax.f32 %v2777, 0.0
  %v2786 = vmax.f32 %v2782, 0.0
  %v2789 = vrot.slane %v2785, 7
  %v2790 = vrot.slane %v2786, 7
  %v2791 = vsel %vm45, %v2789, %v2790
  %v2794 = vsel %vm45, 0.0, %v2789
  %v2795 = vsel %vm1155, 0.0, %v2794
  %v2796 = vsel %vm1156, 0.0, %v2791
  %v2797 = vrot.slane %v2785, 1
  %v2798 = vrot.slane %v2786, 1
  %v2799 = vsel %vm70, %v2797, %v2798
  %v2802 = vsel %vm70, %v2798, 0.0
  %v2803 = vsel %vm1165, 0.0, %v2799
  %v2804 = vsel %vm1166, 0.0, %v2802
  %s2805 = scalar_lea.vmem %s2, 3072
  %v2806 = vld [vmem:[%s2805] sm:$0xff]
  %v2807 = vld [vmem:[%s2805 + $0x8] sm:$0xff]
  %v2808 = vld [vmem:[%s2805 + $0x10] sm:$0xff]
  %v2809 = vld [vmem:[%s2805 + $0x18] sm:$0xff]
  %v2810 = vld [vmem:[%s2805 + $0x20] sm:$0xff]
  %v2811 = vld [vmem:[%s2805 + $0x28] sm:$0xff]
  %v2812 = vld [vmem:[%s2805 + $0x30] sm:$0xff]
  %v2813 = vld [vmem:[%s2805 + $0x38] sm:$0xff]
  %v2814 = vld [vmem:[%s2805 + $0x40] sm:$0xff]
  %v2815 = vld [vmem:[%s2805 + $0x48] sm:$0xff]
  %v2816 = vld [vmem:[%s2805 + $0x50] sm:$0xff]
  %v2817 = vld [vmem:[%s2805 + $0x58] sm:$0xff]
  %v2818 = vld [vmem:[%s2805 + $0x60] sm:$0xff]
  %v2819 = vld [vmem:[%s2805 + $0x68] sm:$0xff]
  %v2820 = vld [vmem:[%s2805 + $0x70] sm:$0xff]
  %v2821 = vld [vmem:[%s2805 + $0x78] sm:$0xff]
  %v2822 = vld [vmem:[%s2805 + $0x80] sm:$0xff]
  %v2823 = vld [vmem:[%s2805 + $0x88] sm:$0xff]
  %v2824 = vld [vmem:[%s2805 + $0x90] sm:$0xff]
  %v2825 = vld [vmem:[%s2805 + $0x98] sm:$0xff]
  %v2826 = vld [vmem:[%s2805 + $0xa0] sm:$0xff]
  %v2827 = vld [vmem:[%s2805 + $0xa8] sm:$0xff]
  %v2828 = vld [vmem:[%s2805 + $0xb0] sm:$0xff]
  %v2829 = vld [vmem:[%s2805 + $0xb8] sm:$0xff]
  %v2830 = vld [vmem:[%s2805 + $0xc0] sm:$0xff]
  %v2831 = vld [vmem:[%s2805 + $0xc8] sm:$0xff]
  %v2832 = vld [vmem:[%s2805 + $0xd0] sm:$0xff]
  %v2833 = vld [vmem:[%s2805 + $0xd8] sm:$0xff]
  %v2834 = vld [vmem:[%s2805 + $0xe0] sm:$0xff]
  %v2835 = vld [vmem:[%s2805 + $0xe8] sm:$0xff]
  %v2836 = vld [vmem:[%s2805 + $0xf0] sm:$0xff]
  %v2837 = vld [vmem:[%s2805 + $0xf8] sm:$0xff]
  %v2838 = vld [vmem:[%s2805 + $0x100] sm:$0xff]
  %v2839 = vld [vmem:[%s2805 + $0x108] sm:$0xff]
  %v2840 = vld [vmem:[%s2805 + $0x110] sm:$0xff]
  %v2841 = vld [vmem:[%s2805 + $0x118] sm:$0xff]
  %v2842 = vld [vmem:[%s2805 + $0x120] sm:$0xff]
  %v2843 = vld [vmem:[%s2805 + $0x128] sm:$0xff]
  %v2844 = vld [vmem:[%s2805 + $0x130] sm:$0xff]
  %v2845 = vld [vmem:[%s2805 + $0x138] sm:$0xff]
  %v2846 = vld [vmem:[%s2805 + $0x140] sm:$0xff]
  %v2847 = vld [vmem:[%s2805 + $0x148] sm:$0xff]
  %v2848 = vld [vmem:[%s2805 + $0x150] sm:$0xff]
  %v2849 = vld [vmem:[%s2805 + $0x158] sm:$0xff]
  %v2850 = vld [vmem:[%s2805 + $0x160] sm:$0xff]
  %v2851 = vld [vmem:[%s2805 + $0x168] sm:$0xff]
  %v2852 = vld [vmem:[%s2805 + $0x170] sm:$0xff]
  %v2853 = vld [vmem:[%s2805 + $0x178] sm:$0xff]
  %s2854 = scalar_lea.vmem %s3, 8
  %v2855 = vld [vmem:[%s2854] sm:$0x1]
  %v2857 = vlaneseq
  %v2858 = vshrl.u32 %v2857, 7
  %v2859 = vsub.s32 0, %v2858
  %v2860 = vrot.slane %v2855, %v2859
  %2862 = vmatprep.subr.mxu0 0.0
  %2863 = vmatpush1.msra.mxu0 %v2806
  %2864 = vmatprep.subr.mxu0 0.0
  %2865 = vmatpush1.msra.mxu0 %v2807
  %2866 = vmatprep.subr.mxu0 0.0
  %2867 = vmatpush1.msra.mxu0 %v2808
  %2868 = vmatprep.subr.mxu0 0.0
  %2869 = vmatpush1.msra.mxu0 %v2809
  %2870 = vmatprep.subr.mxu0 0.0
  %2871 = vmatpush1.msra.mxu0 %v2810
  %2872 = vmatprep.subr.mxu0 0.0
  %2873 = vmatpush1.msra.mxu0 %v2811
  %2874 = vmatprep.subr.mxu0 0.0
  %2875 = vmatpush1.msra.mxu0 %v2812
  %2876 = vmatprep.subr.mxu0 0.0
  %2877 = vmatpush1.msra.mxu0 %v2813
  %2878 = vmatprep.subr.mxu0 0.0
  %2879 = vmatpush1.msra.mxu0 %v2814
  %2880 = vmatprep.subr.mxu0 0.0
  %2881 = vmatpush1.msra.mxu0 %v2815
  %2882 = vmatprep.subr.mxu0 0.0
  %2883 = vmatpush1.msra.mxu0 %v2816
  %2884 = vmatprep.subr.mxu0 0.0
  %2885 = vmatpush1.msra.mxu0 %v2817
  %2886 = vmatprep.subr.mxu0 0.0
  %2887 = vmatpush1.msra.mxu0 %v2818
  %2888 = vmatprep.subr.mxu0 0.0
  %2889 = vmatpush1.msra.mxu0 %v2819
  %2890 = vmatprep.subr.mxu0 0.0
  %2891 = vmatpush1.msra.mxu0 %v2820
  %2892 = vmatprep.subr.mxu0 0.0
  %2893 = vmatpush1.msra.mxu0 %v2821
  %2894 = vmatprep.subr.mxu0 0.0
  %2895 = vmatpush1.msra.mxu0 %v2822
  %2896 = vmatprep.subr.mxu0 0.0
  %2897 = vmatpush1.msra.mxu0 %v2823
  %2898 = vmatprep.subr.mxu0 0.0
  %2899 = vmatpush1.msra.mxu0 %v2824
  %2900 = vmatprep.subr.mxu0 0.0
  %2901 = vmatpush1.msra.mxu0 %v2825
  %2902 = vmatprep.subr.mxu0 0.0
  %2903 = vmatpush1.msra.mxu0 %v2826
  %2904 = vmatprep.subr.mxu0 0.0
  %2905 = vmatpush1.msra.mxu0 %v2827
  %2906 = vmatprep.subr.mxu0 0.0
  %2907 = vmatpush1.msra.mxu0 %v2828
  %2908 = vmatprep.subr.mxu0 0.0
  %2909 = vmatpush1.msra.mxu0 %v2829
  %2910 = vmatprep.subr.mxu0 0.0
  %2911 = vmatpush1.msra.mxu0 %v2830
  %2912 = vmatprep.subr.mxu0 0.0
  %2913 = vmatpush1.msra.mxu0 %v2831
  %2914 = vmatprep.subr.mxu0 0.0
  %2915 = vmatpush1.msra.mxu0 %v2832
  %2916 = vmatprep.subr.mxu0 0.0
  %2917 = vmatpush1.msra.mxu0 %v2833
  %2918 = vmatprep.subr.mxu0 0.0
  %2919 = vmatpush1.msra.mxu0 %v2834
  %2920 = vmatprep.subr.mxu0 0.0
  %2921 = vmatpush1.msra.mxu0 %v2835
  %2922 = vmatprep.subr.mxu0 0.0
  %2923 = vmatpush1.msra.mxu0 %v2836
  %2924 = vmatprep.subr.mxu0 0.0
  %2925 = vmatpush1.msra.mxu0 %v2837
  %2926 = vmatprep.mubr.f32.mxu0 %v2785
  %2927 = vmatmul.mubr.f32.gmra.mrb[0].mxu0 %v2795
  %v2928 = vpop.f32.mrb[0].mxu0
  %v2929 = vadd.f32 %v2860, %v2928
  %v2930 = vpop.f32.mrb[0].mxu0
  %2931 = vmatprep.mubr.f32.mxu0 %v2786
  %2932 = vmatmul.mubr.f32.gmra.mrb[0].mxu0 %v2796
  %v2933 = vpop.f32.mrb[0].mxu0
  %v2934 = vadd.f32 %v2860, %v2933
  %v2935 = vpop.f32.mrb[0].mxu0
  %2936 = vdwg.mxu0
  %2937 = vmatprep.subr.mxu0 0.0
  %2938 = vmatpush1.msra.mxu0 %v2838
  %2939 = vmatprep.subr.mxu0 0.0
  %2940 = vmatpush1.msra.mxu0 %v2839
  %2941 = vmatprep.subr.mxu0 0.0
  %2942 = vmatpush1.msra.mxu0 %v2840
  %2943 = vmatprep.subr.mxu0 0.0
  %2944 = vmatpush1.msra.mxu0 %v2841
  %2945 = vmatprep.subr.mxu0 0.0
  %2946 = vmatpush1.msra.mxu0 %v2842
  %2947 = vmatprep.subr.mxu0 0.0
  %2948 = vmatpush1.msra.mxu0 %v2843
  %2949 = vmatprep.subr.mxu0 0.0
  %2950 = vmatpush1.msra.mxu0 %v2844
  %2951 = vmatprep.subr.mxu0 0.0
  %2952 = vmatpush1.msra.mxu0 %v2845
  %2953 = vmatprep.subr.mxu0 0.0
  %2954 = vmatpush1.msra.mxu0 %v2846
  %2955 = vmatprep.subr.mxu0 0.0
  %2956 = vmatpush1.msra.mxu0 %v2847
  %2957 = vmatprep.subr.mxu0 0.0
  %2958 = vmatpush1.msra.mxu0 %v2848
  %2959 = vmatprep.subr.mxu0 0.0
  %2960 = vmatpush1.msra.mxu0 %v2849
  %2961 = vmatprep.subr.mxu0 0.0
  %2962 = vmatpush1.msra.mxu0 %v2850
  %2963 = vmatprep.subr.mxu0 0.0
  %2964 = vmatpush1.msra.mxu0 %v2851
  %2965 = vmatprep.subr.mxu0 0.0
  %2966 = vmatpush1.msra.mxu0 %v2852
  %2967 = vmatprep.subr.mxu0 0.0
  %2968 = vmatpush1.msra.mxu0 %v2853
  %2969 = vmatprep.subr.mxu0 0.0
  %2970 = vmatpush1.msra.mxu0 0.0
  %2971 = vmatprep.subr.mxu0 0.0
  %2972 = vmatpush1.msra.mxu0 0.0
  %2973 = vmatprep.subr.mxu0 0.0
  %2974 = vmatpush1.msra.mxu0 0.0
  %2975 = vmatprep.subr.mxu0 0.0
  %2976 = vmatpush1.msra.mxu0 0.0
  %2977 = vmatprep.subr.mxu0 0.0
  %2978 = vmatpush1.msra.mxu0 0.0
  %2979 = vmatprep.subr.mxu0 0.0
  %2980 = vmatpush1.msra.mxu0 0.0
  %2981 = vmatprep.subr.mxu0 0.0
  %2982 = vmatpush1.msra.mxu0 0.0
  %2983 = vmatprep.subr.mxu0 0.0
  %2984 = vmatpush1.msra.mxu0 0.0
  %2985 = vmatprep.subr.mxu0 0.0
  %2986 = vmatpush1.msra.mxu0 0.0
  %2987 = vmatprep.subr.mxu0 0.0
  %2988 = vmatpush1.msra.mxu0 0.0
  %2989 = vmatprep.subr.mxu0 0.0
  %2990 = vmatpush1.msra.mxu0 0.0
  %2991 = vmatprep.subr.mxu0 0.0
  %2992 = vmatpush1.msra.mxu0 0.0
  %2993 = vmatprep.subr.mxu0 0.0
  %2994 = vmatpush1.msra.mxu0 0.0
  %2995 = vmatprep.subr.mxu0 0.0
  %2996 = vmatpush1.msra.mxu0 0.0
  %2997 = vmatprep.subr.mxu0 0.0
  %2998 = vmatpush1.msra.mxu0 0.0
  %2999 = vmatprep.subr.mxu0 0.0
  %3000 = vmatpush1.msra.mxu0 0.0
  %3001 = vmatprep.mubr.f32.mxu0 0.0
  %3002 = vmatmul.mubr.f32.gmra.mrb[0].mxu0 %v2803
  %v3003 = vpop.f32.mrb[0].mxu0
  %v3004 = vadd.f32 %v2929, %v3003
  %v3005 = vpop.f32.mrb[0].mxu0
  %3006 = vmatprep.mubr.f32.mxu0 0.0
  %3007 = vmatmul.mubr.f32.gmra.mrb[0].mxu0 %v2804
  %v3008 = vpop.f32.mrb[0].mxu0
  %v3009 = vadd.f32 %v2934, %v3008
  %v3010 = vpop.f32.mrb[0].mxu0
  %3011 = vdwg.mxu0
  %v3012 = vadd.f32 %v3004, %v2558
  %v3013 = vadd.f32 %v3009, %v2559
  %s3014 = scalar_lea.vmem %s6, 256
  %v3015 = vld [vmem:[%s3014] sm:$0xff]
  %v3016 = vld [vmem:[%s3014 + $0x8] sm:$0xff]
  %v3017 = vld [vmem:[%s3014 + $0x10] sm:$0xff]
  %v3018 = vld [vmem:[%s3014 + $0x18] sm:$0xff]
  %v3019 = vld [vmem:[%s3014 + $0x20] sm:$0xff]
  %v3020 = vld [vmem:[%s3014 + $0x28] sm:$0xff]
  %v3021 = vld [vmem:[%s3014 + $0x30] sm:$0xff]
  %v3022 = vld [vmem:[%s3014 + $0x38] sm:$0xff]
  %v3023 = vld [vmem:[%s3014 + $0x40] sm:$0xff]
  %v3024 = vld [vmem:[%s3014 + $0x48] sm:$0xff]
  %v3025 = vld [vmem:[%s3014 + $0x50] sm:$0xff]
  %v3026 = vld [vmem:[%s3014 + $0x58] sm:$0xff]
  %v3027 = vld [vmem:[%s3014 + $0x60] sm:$0xff]
  %v3028 = vld [vmem:[%s3014 + $0x68] sm:$0xff]
  %v3029 = vld [vmem:[%s3014 + $0x70] sm:$0xff]
  %v3030 = vld [vmem:[%s3014 + $0x78] sm:$0xff]
  %v3031 = vld [vmem:[%s3014 + $0x80] sm:$0xff]
  %v3032 = vld [vmem:[%s3014 + $0x88] sm:$0xff]
  %v3033 = vld [vmem:[%s3014 + $0x90] sm:$0xff]
  %v3034 = vld [vmem:[%s3014 + $0x98] sm:$0xff]
  %v3035 = vld [vmem:[%s3014 + $0xa0] sm:$0xff]
  %v3036 = vld [vmem:[%s3014 + $0xa8] sm:$0xff]
  %v3037 = vld [vmem:[%s3014 + $0xb0] sm:$0xff]
  %v3038 = vld [vmem:[%s3014 + $0xb8] sm:$0xff]
  %v3039 = vld [vmem:[%s3014 + $0xc0] sm:$0xff]
  %v3040 = vld [vmem:[%s3014 + $0xc8] sm:$0xff]
  %v3041 = vld [vmem:[%s3014 + $0xd0] sm:$0xff]
  %v3042 = vld [vmem:[%s3014 + $0xd8] sm:$0xff]
  %v3043 = vld [vmem:[%s3014 + $0xe0] sm:$0xff]
  %v3044 = vld [vmem:[%s3014 + $0xe8] sm:$0xff]
  %v3045 = vld [vmem:[%s3014 + $0xf0] sm:$0xff]
  %v3046 = vld [vmem:[%s3014 + $0xf8] sm:$0xff]
  %3047 = vmatprep.subr.mxu0 %v3016
  %3048 = vmatpush1.msra.mxu0 %v3015
  %3049 = vmatprep.subr.mxu0 %v3018
  %3050 = vmatpush1.msra.mxu0 %v3017
  %3051 = vmatprep.subr.mxu0 %v3020
  %3052 = vmatpush1.msra.mxu0 %v3019
  %3053 = vmatprep.subr.mxu0 %v3022
  %3054 = vmatpush1.msra.mxu0 %v3021
  %3055 = vmatprep.subr.mxu0 %v3024
  %3056 = vmatpush1.msra.mxu0 %v3023
  %3057 = vmatprep.subr.mxu0 %v3026
  %3058 = vmatpush1.msra.mxu0 %v3025
  %3059 = vmatprep.subr.mxu0 %v3028
  %3060 = vmatpush1.msra.mxu0 %v3027
  %3061 = vmatprep.subr.mxu0 %v3030
  %3062 = vmatpush1.msra.mxu0 %v3029
  %3063 = vmatprep.subr.mxu0 %v3032
  %3064 = vmatpush1.msra.mxu0 %v3031
  %3065 = vmatprep.subr.mxu0 %v3034
  %3066 = vmatpush1.msra.mxu0 %v3033
  %3067 = vmatprep.subr.mxu0 %v3036
  %3068 = vmatpush1.msra.mxu0 %v3035
  %3069 = vmatprep.subr.mxu0 %v3038
  %3070 = vmatpush1.msra.mxu0 %v3037
  %3071 = vmatprep.subr.mxu0 %v3040
  %3072 = vmatpush1.msra.mxu0 %v3039
  %3073 = vmatprep.subr.mxu0 %v3042
  %3074 = vmatpush1.msra.mxu0 %v3041
  %3075 = vmatprep.subr.mxu0 %v3044
  %3076 = vmatpush1.msra.mxu0 %v3043
  %3077 = vmatprep.subr.mxu0 %v3046
  %3078 = vmatpush1.msra.mxu0 %v3045
  %3079 = vmatprep.subr.mxu0 0.0
  %3080 = vmatpush1.msra.mxu0 0.0
  %3081 = vmatprep.subr.mxu0 0.0
  %3082 = vmatpush1.msra.mxu0 0.0
  %3083 = vmatprep.subr.mxu0 0.0
  %3084 = vmatpush1.msra.mxu0 0.0
  %3085 = vmatprep.subr.mxu0 0.0
  %3086 = vmatpush1.msra.mxu0 0.0
  %3087 = vmatprep.subr.mxu0 0.0
  %3088 = vmatpush1.msra.mxu0 0.0
  %3089 = vmatprep.subr.mxu0 0.0
  %3090 = vmatpush1.msra.mxu0 0.0
  %3091 = vmatprep.subr.mxu0 0.0
  %3092 = vmatpush1.msra.mxu0 0.0
  %3093 = vmatprep.subr.mxu0 0.0
  %3094 = vmatpush1.msra.mxu0 0.0
  %3095 = vmatprep.subr.mxu0 0.0
  %3096 = vmatpush1.msra.mxu0 0.0
  %3097 = vmatprep.subr.mxu0 0.0
  %3098 = vmatpush1.msra.mxu0 0.0
  %3099 = vmatprep.subr.mxu0 0.0
  %3100 = vmatpush1.msra.mxu0 0.0
  %3101 = vmatprep.subr.mxu0 0.0
  %3102 = vmatpush1.msra.mxu0 0.0
  %3103 = vmatprep.subr.mxu0 0.0
  %3104 = vmatpush1.msra.mxu0 0.0
  %3105 = vmatprep.subr.mxu0 0.0
  %3106 = vmatpush1.msra.mxu0 0.0
  %3107 = vmatprep.subr.mxu0 0.0
  %3108 = vmatpush1.msra.mxu0 0.0
  %3109 = vmatprep.subr.mxu0 0.0
  %3110 = vmatpush1.msra.mxu0 0.0
  %3111 = vmatprep.mubr.f32.mxu0 0.0
  %3112 = vmatmul.mubr.f32.gmra.mrb[0].mxu0 %v3012
  %v3113 = vpop.f32.mrb[0].mxu0
  %v3114 = vadd.f32 0.0, %v3113
  %v3115 = vpop.f32.mrb[0].mxu0
  %v3116 = vadd.f32 0.0, %v3115
  %3117 = vmatprep.mubr.f32.mxu0 0.0
  %3118 = vmatmul.mubr.f32.gmra.mrb[0].mxu0 %v3013
  %v3119 = vpop.f32.mrb[0].mxu0
  %v3120 = vadd.f32 0.0, %v3119
  %v3121 = vpop.f32.mrb[0].mxu0
  %v3122 = vadd.f32 0.0, %v3121
  %3123 = vdwg.mxu0
  %vm3124 = vcmp.eq.s32.totalorder %v39, %v2381
  %vm3125 = vcmp.eq.s32.totalorder %v40, %v2381
  %v3126 = vsel %vm3124, 1, 0
  %v3127 = vsel %vm3125, 1, 0
  %v3128 = vcvt.s32.f32 %v3126
  %v3129 = vcvt.s32.f32 %v3127
  %vm3130 = vcmp.eq.s32.totalorder %v39, %v2388
  %vm3131 = vcmp.eq.s32.totalorder %v40, %v2388
  %v3132 = vsel %vm3130, 1, 0
  %v3133 = vsel %vm3131, 1, 0
  %v3134 = vcvt.s32.f32 %v3132
  %v3135 = vcvt.s32.f32 %v3133
  %v3136 = vsel %vm1605, %v2393, 0
  %v3138 = vsel %vm1605, %v2394, 0
  %v3141 = vsel %vm1605, %v3134, 0
  %v3144 = vsel %vm1605, %v3135, 0
  %3146 = vmatprep.subr.mxu0 0.0
  %3147 = vmatpush1.msra.mxu0 %v3116
  %3148 = vmatprep.subr.mxu0 0.0
  %3149 = vmatpush1.msra.mxu0 %v3122
  %3150 = vmatprep.subr.mxu0 0.0
  %3151 = vmatpush1.msra.mxu0 0.0
  %3152 = vmatprep.subr.mxu0 0.0
  %3153 = vmatpush1.msra.mxu0 0.0
  %3154 = vmatprep.subr.mxu0 0.0
  %3155 = vmatpush1.msra.mxu0 0.0
  %3156 = vmatprep.subr.mxu0 0.0
  %3157 = vmatpush1.msra.mxu0 0.0
  %3158 = vmatprep.subr.mxu0 0.0
  %3159 = vmatpush1.msra.mxu0 0.0
  %3160 = vmatprep.subr.mxu0 0.0
  %3161 = vmatpush1.msra.mxu0 0.0
  %3162 = vmatprep.subr.mxu0 0.0
  %3163 = vmatpush1.msra.mxu0 0.0
  %3164 = vmatprep.subr.mxu0 0.0
  %3165 = vmatpush1.msra.mxu0 0.0
  %3166 = vmatprep.subr.mxu0 0.0
  %3167 = vmatpush1.msra.mxu0 0.0
  %3168 = vmatprep.subr.mxu0 0.0
  %3169 = vmatpush1.msra.mxu0 0.0
  %3170 = vmatprep.subr.mxu0 0.0
  %3171 = vmatpush1.msra.mxu0 0.0
  %3172 = vmatprep.subr.mxu0 0.0
  %3173 = vmatpush1.msra.mxu0 0.0
  %3174 = vmatprep.subr.mxu0 0.0
  %3175 = vmatpush1.msra.mxu0 0.0
  %3176 = vmatprep.subr.mxu0 0.0
  %3177 = vmatpush1.msra.mxu0 0.0
  %3178 = vmatprep.subr.mxu0 0.0
  %3179 = vmatpush1.msra.mxu0 0.0
  %3180 = vmatprep.subr.mxu0 0.0
  %3181 = vmatpush1.msra.mxu0 0.0
  %3182 = vmatprep.subr.mxu0 0.0
  %3183 = vmatpush1.msra.mxu0 0.0
  %3184 = vmatprep.subr.mxu0 0.0
  %3185 = vmatpush1.msra.mxu0 0.0
  %3186 = vmatprep.subr.mxu0 0.0
  %3187 = vmatpush1.msra.mxu0 0.0
  %3188 = vmatprep.subr.mxu0 0.0
  %3189 = vmatpush1.msra.mxu0 0.0
  %3190 = vmatprep.subr.mxu0 0.0
  %3191 = vmatpush1.msra.mxu0 0.0
  %3192 = vmatprep.subr.mxu0 0.0
  %3193 = vmatpush1.msra.mxu0 0.0
  %3194 = vmatprep.subr.mxu0 0.0
  %3195 = vmatpush1.msra.mxu0 0.0
  %3196 = vmatprep.subr.mxu0 0.0
  %3197 = vmatpush1.msra.mxu0 0.0
  %3198 = vmatprep.subr.mxu0 0.0
  %3199 = vmatpush1.msra.mxu0 0.0
  %3200 = vmatprep.subr.mxu0 0.0
  %3201 = vmatpush1.msra.mxu0 0.0
  %3202 = vmatprep.subr.mxu0 0.0
  %3203 = vmatpush1.msra.mxu0 0.0
  %3204 = vmatprep.subr.mxu0 0.0
  %3205 = vmatpush1.msra.mxu0 0.0
  %3206 = vmatprep.subr.mxu0 0.0
  %3207 = vmatpush1.msra.mxu0 0.0
  %3208 = vmatprep.subr.mxu0 0.0
  %3209 = vmatpush1.msra.mxu0 0.0
  %3210 = vmatprep.mubr.f32.mxu0 0.0
  %3211 = vmatmul.mubr.f32.gmra.mrb[0].mxu0 %v3136
  %v3212 = vpop.f32.mrb[0].mxu0
  %v3213 = vadd.f32 0.0, %v3212
  %v3214 = vpop.f32.mrb[0].mxu0
  %3215 = vmatprep.mubr.f32.mxu0 0.0
  %3216 = vmatmul.mubr.f32.gmra.mrb[0].mxu0 %v3138
  %v3217 = vpop.f32.mrb[0].mxu0
  %v3218 = vadd.f32 0.0, %v3217
  %v3219 = vpop.f32.mrb[0].mxu0
  %3220 = vmatprep.mubr.f32.mxu0 0.0
  %3221 = vmatmul.mubr.f32.gmra.mrb[0].mxu0 %v3141
  %v3222 = vpop.f32.mrb[0].mxu0
  %v3223 = vadd.f32 0.0, %v3222
  %v3224 = vpop.f32.mrb[0].mxu0
  %3225 = vmatprep.mubr.f32.mxu0 0.0
  %3226 = vmatmul.mubr.f32.gmra.mrb[0].mxu0 %v3144
  %v3227 = vpop.f32.mrb[0].mxu0
  %v3228 = vadd.f32 0.0, %v3227
  %v3229 = vpop.f32.mrb[0].mxu0
  %3230 = vdwg.mxu0
  %v3231 = vsel %vm1605, %v2386, 0
  %v3233 = vsel %vm1605, %v2387, 0
  %v3236 = vsel %vm1605, %v3128, 0
  %v3239 = vsel %vm1605, %v3129, 0
  %3241 = vmatprep.subr.mxu0 0.0
  %3242 = vmatpush1.msra.mxu0 %v3114
  %3243 = vmatprep.subr.mxu0 0.0
  %3244 = vmatpush1.msra.mxu0 %v3120
  %3245 = vmatprep.subr.mxu0 0.0
  %3246 = vmatpush1.msra.mxu0 0.0
  %3247 = vmatprep.subr.mxu0 0.0
  %3248 = vmatpush1.msra.mxu0 0.0
  %3249 = vmatprep.subr.mxu0 0.0
  %3250 = vmatpush1.msra.mxu0 0.0
  %3251 = vmatprep.subr.mxu0 0.0
  %3252 = vmatpush1.msra.mxu0 0.0
  %3253 = vmatprep.subr.mxu0 0.0
  %3254 = vmatpush1.msra.mxu0 0.0
  %3255 = vmatprep.subr.mxu0 0.0
  %3256 = vmatpush1.msra.mxu0 0.0
  %3257 = vmatprep.subr.mxu0 0.0
  %3258 = vmatpush1.msra.mxu0 0.0
  %3259 = vmatprep.subr.mxu0 0.0
  %3260 = vmatpush1.msra.mxu0 0.0
  %3261 = vmatprep.subr.mxu0 0.0
  %3262 = vmatpush1.msra.mxu0 0.0
  %3263 = vmatprep.subr.mxu0 0.0
  %3264 = vmatpush1.msra.mxu0 0.0
  %3265 = vmatprep.subr.mxu0 0.0
  %3266 = vmatpush1.msra.mxu0 0.0
  %3267 = vmatprep.subr.mxu0 0.0
  %3268 = vmatpush1.msra.mxu0 0.0
  %3269 = vmatprep.subr.mxu0 0.0
  %3270 = vmatpush1.msra.mxu0 0.0
  %3271 = vmatprep.subr.mxu0 0.0
  %3272 = vmatpush1.msra.mxu0 0.0
  %3273 = vmatprep.subr.mxu0 0.0
  %3274 = vmatpush1.msra.mxu0 0.0
  %3275 = vmatprep.subr.mxu0 0.0
  %3276 = vmatpush1.msra.mxu0 0.0
  %3277 = vmatprep.subr.mxu0 0.0
  %3278 = vmatpush1.msra.mxu0 0.0
  %3279 = vmatprep.subr.mxu0 0.0
  %3280 = vmatpush1.msra.mxu0 0.0
  %3281 = vmatprep.subr.mxu0 0.0
  %3282 = vmatpush1.msra.mxu0 0.0
  %3283 = vmatprep.subr.mxu0 0.0
  %3284 = vmatpush1.msra.mxu0 0.0
  %3285 = vmatprep.subr.mxu0 0.0
  %3286 = vmatpush1.msra.mxu0 0.0
  %3287 = vmatprep.subr.mxu0 0.0
  %3288 = vmatpush1.msra.mxu0 0.0
  %3289 = vmatprep.subr.mxu0 0.0
  %3290 = vmatpush1.msra.mxu0 0.0
  %3291 = vmatprep.subr.mxu0 0.0
  %3292 = vmatpush1.msra.mxu0 0.0
  %3293 = vmatprep.subr.mxu0 0.0
  %3294 = vmatpush1.msra.mxu0 0.0
  %3295 = vmatprep.subr.mxu0 0.0
  %3296 = vmatpush1.msra.mxu0 0.0
  %3297 = vmatprep.subr.mxu0 0.0
  %3298 = vmatpush1.msra.mxu0 0.0
  %3299 = vmatprep.subr.mxu0 0.0
  %3300 = vmatpush1.msra.mxu0 0.0
  %3301 = vmatprep.subr.mxu0 0.0
  %3302 = vmatpush1.msra.mxu0 0.0
  %3303 = vmatprep.subr.mxu0 0.0
  %3304 = vmatpush1.msra.mxu0 0.0
  %3305 = vmatprep.mubr.f32.mxu0 0.0
  %3306 = vmatmul.mubr.f32.gmra.mrb[0].mxu0 %v3231
  %v3307 = vpop.f32.mrb[0].mxu0
  %v3308 = vadd.f32 %v3213, %v3307
  %v3309 = vpop.f32.mrb[0].mxu0
  %3310 = vmatprep.mubr.f32.mxu0 0.0
  %3311 = vmatmul.mubr.f32.gmra.mrb[0].mxu0 %v3233
  %v3312 = vpop.f32.mrb[0].mxu0
  %v3313 = vadd.f32 %v3218, %v3312
  %v3314 = vpop.f32.mrb[0].mxu0
  %3315 = vmatprep.mubr.f32.mxu0 0.0
  %3316 = vmatmul.mubr.f32.gmra.mrb[0].mxu0 %v3236
  %v3317 = vpop.f32.mrb[0].mxu0
  %v3318 = vadd.f32 %v3223, %v3317
  %v3319 = vpop.f32.mrb[0].mxu0
  %3320 = vmatprep.mubr.f32.mxu0 0.0
  %3321 = vmatmul.mubr.f32.gmra.mrb[0].mxu0 %v3239
  %v3322 = vpop.f32.mrb[0].mxu0
  %v3323 = vadd.f32 %v3228, %v3322
  %v3324 = vpop.f32.mrb[0].mxu0
  %3325 = vdwg.mxu0
  %v3326 = vadd.f32 %v846, %v3308
  %v3327 = vadd.f32 %v847, %v3313
  %v3328 = vadd.f32 %v848, %v3318
  %v3329 = vadd.f32 %v849, %v3323
  %v3334 = vrot.slane %v3326, 7
  %v3335 = vrot.slane %v3327, 7
  %v3336 = vsel %vm45, %v3334, %v3335
  %v3337 = vrot.slane %v3328, 7
  %v3338 = vsel %vm45, %v3335, %v3337
  %v3339 = vrot.slane %v3329, 7
  %v3340 = vsel %vm45, %v3337, %v3339
  %v3345 = vsel %vm45, 0.0, %v3334
  %v3346 = vsel %vm62, 0.0, %v3345
  %v3347 = vsel %vm63, 0.0, %v3336
  %v3348 = vsel %vm64, 0.0, %v3338
  %v3349 = vsel %vm65, 0.0, %v3340
  %v3350 = vrot.slane %v3326, 1
  %v3351 = vrot.slane %v3327, 1
  %v3352 = vsel %vm70, %v3350, %v3351
  %v3353 = vrot.slane %v3328, 1
  %v3354 = vsel %vm70, %v3351, %v3353
  %v3355 = vrot.slane %v3329, 1
  %v3356 = vsel %vm70, %v3353, %v3355
  %v3361 = vsel %vm70, %v3355, 0.0
  %v3362 = vsel %vm83, 0.0, %v3352
  %v3363 = vsel %vm84, 0.0, %v3354
  %v3364 = vsel %vm85, 0.0, %v3356
  %v3365 = vsel %vm86, 0.0, %v3361
  %s3366 = scalar_lea.vmem %s2, 3456
  %v3367 = vld [vmem:[%s3366] sm:$0xff]
  %v3368 = vld [vmem:[%s3366 + $0x8] sm:$0xff]
  %v3369 = vld [vmem:[%s3366 + $0x10] sm:$0xff]
  %v3370 = vld [vmem:[%s3366 + $0x18] sm:$0xff]
  %v3371 = vld [vmem:[%s3366 + $0x20] sm:$0xff]
  %v3372 = vld [vmem:[%s3366 + $0x28] sm:$0xff]
  %v3373 = vld [vmem:[%s3366 + $0x30] sm:$0xff]
  %v3374 = vld [vmem:[%s3366 + $0x38] sm:$0xff]
  %v3375 = vld [vmem:[%s3366 + $0x40] sm:$0xff]
  %v3376 = vld [vmem:[%s3366 + $0x48] sm:$0xff]
  %v3377 = vld [vmem:[%s3366 + $0x50] sm:$0xff]
  %v3378 = vld [vmem:[%s3366 + $0x58] sm:$0xff]
  %v3379 = vld [vmem:[%s3366 + $0x60] sm:$0xff]
  %v3380 = vld [vmem:[%s3366 + $0x68] sm:$0xff]
  %v3381 = vld [vmem:[%s3366 + $0x70] sm:$0xff]
  %v3382 = vld [vmem:[%s3366 + $0x78] sm:$0xff]
  %v3383 = vld [vmem:[%s3366 + $0x80] sm:$0xff]
  %v3384 = vld [vmem:[%s3366 + $0x88] sm:$0xff]
  %v3385 = vld [vmem:[%s3366 + $0x90] sm:$0xff]
  %v3386 = vld [vmem:[%s3366 + $0x98] sm:$0xff]
  %v3387 = vld [vmem:[%s3366 + $0xa0] sm:$0xff]
  %v3388 = vld [vmem:[%s3366 + $0xa8] sm:$0xff]
  %v3389 = vld [vmem:[%s3366 + $0xb0] sm:$0xff]
  %v3390 = vld [vmem:[%s3366 + $0xb8] sm:$0xff]
  %v3391 = vld [vmem:[%s3366 + $0xc0] sm:$0xff]
  %v3392 = vld [vmem:[%s3366 + $0xc8] sm:$0xff]
  %v3393 = vld [vmem:[%s3366 + $0xd0] sm:$0xff]
  %v3394 = vld [vmem:[%s3366 + $0xd8] sm:$0xff]
  %v3395 = vld [vmem:[%s3366 + $0xe0] sm:$0xff]
  %v3396 = vld [vmem:[%s3366 + $0xe8] sm:$0xff]
  %v3397 = vld [vmem:[%s3366 + $0xf0] sm:$0xff]
  %v3398 = vld [vmem:[%s3366 + $0xf8] sm:$0xff]
  %v3399 = vld [vmem:[%s3366 + $0x100] sm:$0xff]
  %v3400 = vld [vmem:[%s3366 + $0x108] sm:$0xff]
  %v3401 = vld [vmem:[%s3366 + $0x110] sm:$0xff]
  %v3402 = vld [vmem:[%s3366 + $0x118] sm:$0xff]
  %v3403 = vld [vmem:[%s3366 + $0x120] sm:$0xff]
  %v3404 = vld [vmem:[%s3366 + $0x128] sm:$0xff]
  %v3405 = vld [vmem:[%s3366 + $0x130] sm:$0xff]
  %v3406 = vld [vmem:[%s3366 + $0x138] sm:$0xff]
  %v3407 = vld [vmem:[%s3366 + $0x140] sm:$0xff]
  %v3408 = vld [vmem:[%s3366 + $0x148] sm:$0xff]
  %v3409 = vld [vmem:[%s3366 + $0x150] sm:$0xff]
  %v3410 = vld [vmem:[%s3366 + $0x158] sm:$0xff]
  %v3411 = vld [vmem:[%s3366 + $0x160] sm:$0xff]
  %v3412 = vld [vmem:[%s3366 + $0x168] sm:$0xff]
  %v3413 = vld [vmem:[%s3366 + $0x170] sm:$0xff]
  %v3414 = vld [vmem:[%s3366 + $0x178] sm:$0xff]
  %s3415 = scalar_lea.vmem %s3, 9
  %v3416 = vld [vmem:[%s3415] sm:$0x1]
  %v3418 = vlaneseq
  %v3419 = vshrl.u32 %v3418, 7
  %v3420 = vsub.s32 0, %v3419
  %v3421 = vrot.slane %v3416, %v3420
  %3423 = vmatprep.subr.mxu0 0.0
  %3424 = vmatpush1.msra.mxu0 %v3367
  %3425 = vmatprep.subr.mxu0 0.0
  %3426 = vmatpush1.msra.mxu0 %v3368
  %3427 = vmatprep.subr.mxu0 0.0
  %3428 = vmatpush1.msra.mxu0 %v3369
  %3429 = vmatprep.subr.mxu0 0.0
  %3430 = vmatpush1.msra.mxu0 %v3370
  %3431 = vmatprep.subr.mxu0 0.0
  %3432 = vmatpush1.msra.mxu0 %v3371
  %3433 = vmatprep.subr.mxu0 0.0
  %3434 = vmatpush1.msra.mxu0 %v3372
  %3435 = vmatprep.subr.mxu0 0.0
  %3436 = vmatpush1.msra.mxu0 %v3373
  %3437 = vmatprep.subr.mxu0 0.0
  %3438 = vmatpush1.msra.mxu0 %v3374
  %3439 = vmatprep.subr.mxu0 0.0
  %3440 = vmatpush1.msra.mxu0 %v3375
  %3441 = vmatprep.subr.mxu0 0.0
  %3442 = vmatpush1.msra.mxu0 %v3376
  %3443 = vmatprep.subr.mxu0 0.0
  %3444 = vmatpush1.msra.mxu0 %v3377
  %3445 = vmatprep.subr.mxu0 0.0
  %3446 = vmatpush1.msra.mxu0 %v3378
  %3447 = vmatprep.subr.mxu0 0.0
  %3448 = vmatpush1.msra.mxu0 %v3379
  %3449 = vmatprep.subr.mxu0 0.0
  %3450 = vmatpush1.msra.mxu0 %v3380
  %3451 = vmatprep.subr.mxu0 0.0
  %3452 = vmatpush1.msra.mxu0 %v3381
  %3453 = vmatprep.subr.mxu0 0.0
  %3454 = vmatpush1.msra.mxu0 %v3382
  %3455 = vmatprep.subr.mxu0 0.0
  %3456 = vmatpush1.msra.mxu0 %v3383
  %3457 = vmatprep.subr.mxu0 0.0
  %3458 = vmatpush1.msra.mxu0 %v3384
  %3459 = vmatprep.subr.mxu0 0.0
  %3460 = vmatpush1.msra.mxu0 %v3385
  %3461 = vmatprep.subr.mxu0 0.0
  %3462 = vmatpush1.msra.mxu0 %v3386
  %3463 = vmatprep.subr.mxu0 0.0
  %3464 = vmatpush1.msra.mxu0 %v3387
  %3465 = vmatprep.subr.mxu0 0.0
  %3466 = vmatpush1.msra.mxu0 %v3388
  %3467 = vmatprep.subr.mxu0 0.0
  %3468 = vmatpush1.msra.mxu0 %v3389
  %3469 = vmatprep.subr.mxu0 0.0
  %3470 = vmatpush1.msra.mxu0 %v3390
  %3471 = vmatprep.subr.mxu0 0.0
  %3472 = vmatpush1.msra.mxu0 %v3391
  %3473 = vmatprep.subr.mxu0 0.0
  %3474 = vmatpush1.msra.mxu0 %v3392
  %3475 = vmatprep.subr.mxu0 0.0
  %3476 = vmatpush1.msra.mxu0 %v3393
  %3477 = vmatprep.subr.mxu0 0.0
  %3478 = vmatpush1.msra.mxu0 %v3394
  %3479 = vmatprep.subr.mxu0 0.0
  %3480 = vmatpush1.msra.mxu0 %v3395
  %3481 = vmatprep.subr.mxu0 0.0
  %3482 = vmatpush1.msra.mxu0 %v3396
  %3483 = vmatprep.subr.mxu0 0.0
  %3484 = vmatpush1.msra.mxu0 %v3397
  %3485 = vmatprep.subr.mxu0 0.0
  %3486 = vmatpush1.msra.mxu0 %v3398
  %3487 = vmatprep.mubr.f32.mxu0 %v3326
  %3488 = vmatmul.mubr.f32.gmra.mrb[0].mxu0 %v3346
  %v3489 = vpop.f32.mrb[0].mxu0
  %v3490 = vadd.f32 %v3421, %v3489
  %v3491 = vpop.f32.mrb[0].mxu0
  %3492 = vmatprep.mubr.f32.mxu0 %v3327
  %3493 = vmatmul.mubr.f32.gmra.mrb[0].mxu0 %v3347
  %v3494 = vpop.f32.mrb[0].mxu0
  %v3495 = vadd.f32 %v3421, %v3494
  %v3496 = vpop.f32.mrb[0].mxu0
  %3497 = vmatprep.mubr.f32.mxu0 %v3328
  %3498 = vmatmul.mubr.f32.gmra.mrb[0].mxu0 %v3348
  %v3499 = vpop.f32.mrb[0].mxu0
  %v3500 = vadd.f32 %v3421, %v3499
  %v3501 = vpop.f32.mrb[0].mxu0
  %3502 = vmatprep.mubr.f32.mxu0 %v3329
  %3503 = vmatmul.mubr.f32.gmra.mrb[0].mxu0 %v3349
  %v3504 = vpop.f32.mrb[0].mxu0
  %v3505 = vadd.f32 %v3421, %v3504
  %v3506 = vpop.f32.mrb[0].mxu0
  %3507 = vdwg.mxu0
  %3508 = vmatprep.subr.mxu0 0.0
  %3509 = vmatpush1.msra.mxu0 %v3399
  %3510 = vmatprep.subr.mxu0 0.0
  %3511 = vmatpush1.msra.mxu0 %v3400
  %3512 = vmatprep.subr.mxu0 0.0
  %3513 = vmatpush1.msra.mxu0 %v3401
  %3514 = vmatprep.subr.mxu0 0.0
  %3515 = vmatpush1.msra.mxu0 %v3402
  %3516 = vmatprep.subr.mxu0 0.0
  %3517 = vmatpush1.msra.mxu0 %v3403
  %3518 = vmatprep.subr.mxu0 0.0
  %3519 = vmatpush1.msra.mxu0 %v3404
  %3520 = vmatprep.subr.mxu0 0.0
  %3521 = vmatpush1.msra.mxu0 %v3405
  %3522 = vmatprep.subr.mxu0 0.0
  %3523 = vmatpush1.msra.mxu0 %v3406
  %3524 = vmatprep.subr.mxu0 0.0
  %3525 = vmatpush1.msra.mxu0 %v3407
  %3526 = vmatprep.subr.mxu0 0.0
  %3527 = vmatpush1.msra.mxu0 %v3408
  %3528 = vmatprep.subr.mxu0 0.0
  %3529 = vmatpush1.msra.mxu0 %v3409
  %3530 = vmatprep.subr.mxu0 0.0
  %3531 = vmatpush1.msra.mxu0 %v3410
  %3532 = vmatprep.subr.mxu0 0.0
  %3533 = vmatpush1.msra.mxu0 %v3411
  %3534 = vmatprep.subr.mxu0 0.0
  %3535 = vmatpush1.msra.mxu0 %v3412
  %3536 = vmatprep.subr.mxu0 0.0
  %3537 = vmatpush1.msra.mxu0 %v3413
  %3538 = vmatprep.subr.mxu0 0.0
  %3539 = vmatpush1.msra.mxu0 %v3414
  %3540 = vmatprep.subr.mxu0 0.0
  %3541 = vmatpush1.msra.mxu0 0.0
  %3542 = vmatprep.subr.mxu0 0.0
  %3543 = vmatpush1.msra.mxu0 0.0
  %3544 = vmatprep.subr.mxu0 0.0
  %3545 = vmatpush1.msra.mxu0 0.0
  %3546 = vmatprep.subr.mxu0 0.0
  %3547 = vmatpush1.msra.mxu0 0.0
  %3548 = vmatprep.subr.mxu0 0.0
  %3549 = vmatpush1.msra.mxu0 0.0
  %3550 = vmatprep.subr.mxu0 0.0
  %3551 = vmatpush1.msra.mxu0 0.0
  %3552 = vmatprep.subr.mxu0 0.0
  %3553 = vmatpush1.msra.mxu0 0.0
  %3554 = vmatprep.subr.mxu0 0.0
  %3555 = vmatpush1.msra.mxu0 0.0
  %3556 = vmatprep.subr.mxu0 0.0
  %3557 = vmatpush1.msra.mxu0 0.0
  %3558 = vmatprep.subr.mxu0 0.0
  %3559 = vmatpush1.msra.mxu0 0.0
  %3560 = vmatprep.subr.mxu0 0.0
  %3561 = vmatpush1.msra.mxu0 0.0
  %3562 = vmatprep.subr.mxu0 0.0
  %3563 = vmatpush1.msra.mxu0 0.0
  %3564 = vmatprep.subr.mxu0 0.0
  %3565 = vmatpush1.msra.mxu0 0.0
  %3566 = vmatprep.subr.mxu0 0.0
  %3567 = vmatpush1.msra.mxu0 0.0
  %3568 = vmatprep.subr.mxu0 0.0
  %3569 = vmatpush1.msra.mxu0 0.0
  %3570 = vmatprep.subr.mxu0 0.0
  %3571 = vmatpush1.msra.mxu0 0.0
  %3572 = vmatprep.mubr.f32.mxu0 0.0
  %3573 = vmatmul.mubr.f32.gmra.mrb[0].mxu0 %v3362
  %v3574 = vpop.f32.mrb[0].mxu0
  %v3575 = vadd.f32 %v3490, %v3574
  %v3576 = vpop.f32.mrb[0].mxu0
  %3577 = vmatprep.mubr.f32.mxu0 0.0
  %3578 = vmatmul.mubr.f32.gmra.mrb[0].mxu0 %v3363
  %v3579 = vpop.f32.mrb[0].mxu0
  %v3580 = vadd.f32 %v3495, %v3579
  %v3581 = vpop.f32.mrb[0].mxu0
  %3582 = vmatprep.mubr.f32.mxu0 0.0
  %3583 = vmatmul.mubr.f32.gmra.mrb[0].mxu0 %v3364
  %v3584 = vpop.f32.mrb[0].mxu0
  %v3585 = vadd.f32 %v3500, %v3584
  %v3586 = vpop.f32.mrb[0].mxu0
  %3587 = vmatprep.mubr.f32.mxu0 0.0
  %3588 = vmatmul.mubr.f32.gmra.mrb[0].mxu0 %v3365
  %v3589 = vpop.f32.mrb[0].mxu0
  %v3590 = vadd.f32 %v3505, %v3589
  %v3591 = vpop.f32.mrb[0].mxu0
  %3592 = vdwg.mxu0
  %v3593 = vmax.f32 %v3575, 0.0
  %v3594 = vmax.f32 %v3580, 0.0
  %v3595 = vmax.f32 %v3585, 0.0
  %v3596 = vmax.f32 %v3590, 0.0
  %v3601 = vrot.slane %v3593, 7
  %v3602 = vrot.slane %v3594, 7
  %v3603 = vsel %vm45, %v3601, %v3602
  %v3604 = vrot.slane %v3595, 7
  %v3605 = vsel %vm45, %v3602, %v3604
  %v3606 = vrot.slane %v3596, 7
  %v3607 = vsel %vm45, %v3604, %v3606
  %v3612 = vsel %vm45, 0.0, %v3601
  %v3613 = vsel %vm62, 0.0, %v3612
  %v3614 = vsel %vm63, 0.0, %v3603
  %v3615 = vsel %vm64, 0.0, %v3605
  %v3616 = vsel %vm65, 0.0, %v3607
  %v3617 = vrot.slane %v3593, 1
  %v3618 = vrot.slane %v3594, 1
  %v3619 = vsel %vm70, %v3617, %v3618
  %v3620 = vrot.slane %v3595, 1
  %v3621 = vsel %vm70, %v3618, %v3620
  %v3622 = vrot.slane %v3596, 1
  %v3623 = vsel %vm70, %v3620, %v3622
  %v3628 = vsel %vm70, %v3622, 0.0
  %v3629 = vsel %vm83, 0.0, %v3619
  %v3630 = vsel %vm84, 0.0, %v3621
  %v3631 = vsel %vm85, 0.0, %v3623
  %v3632 = vsel %vm86, 0.0, %v3628
  %s3633 = scalar_lea.vmem %s2, 3840
  %v3634 = vld [vmem:[%s3633] sm:$0xff]
  %v3635 = vld [vmem:[%s3633 + $0x8] sm:$0xff]
  %v3636 = vld [vmem:[%s3633 + $0x10] sm:$0xff]
  %v3637 = vld [vmem:[%s3633 + $0x18] sm:$0xff]
  %v3638 = vld [vmem:[%s3633 + $0x20] sm:$0xff]
  %v3639 = vld [vmem:[%s3633 + $0x28] sm:$0xff]
  %v3640 = vld [vmem:[%s3633 + $0x30] sm:$0xff]
  %v3641 = vld [vmem:[%s3633 + $0x38] sm:$0xff]
  %v3642 = vld [vmem:[%s3633 + $0x40] sm:$0xff]
  %v3643 = vld [vmem:[%s3633 + $0x48] sm:$0xff]
  %v3644 = vld [vmem:[%s3633 + $0x50] sm:$0xff]
  %v3645 = vld [vmem:[%s3633 + $0x58] sm:$0xff]
  %v3646 = vld [vmem:[%s3633 + $0x60] sm:$0xff]
  %v3647 = vld [vmem:[%s3633 + $0x68] sm:$0xff]
  %v3648 = vld [vmem:[%s3633 + $0x70] sm:$0xff]
  %v3649 = vld [vmem:[%s3633 + $0x78] sm:$0xff]
  %v3650 = vld [vmem:[%s3633 + $0x80] sm:$0xff]
  %v3651 = vld [vmem:[%s3633 + $0x88] sm:$0xff]
  %v3652 = vld [vmem:[%s3633 + $0x90] sm:$0xff]
  %v3653 = vld [vmem:[%s3633 + $0x98] sm:$0xff]
  %v3654 = vld [vmem:[%s3633 + $0xa0] sm:$0xff]
  %v3655 = vld [vmem:[%s3633 + $0xa8] sm:$0xff]
  %v3656 = vld [vmem:[%s3633 + $0xb0] sm:$0xff]
  %v3657 = vld [vmem:[%s3633 + $0xb8] sm:$0xff]
  %v3658 = vld [vmem:[%s3633 + $0xc0] sm:$0xff]
  %v3659 = vld [vmem:[%s3633 + $0xc8] sm:$0xff]
  %v3660 = vld [vmem:[%s3633 + $0xd0] sm:$0xff]
  %v3661 = vld [vmem:[%s3633 + $0xd8] sm:$0xff]
  %v3662 = vld [vmem:[%s3633 + $0xe0] sm:$0xff]
  %v3663 = vld [vmem:[%s3633 + $0xe8] sm:$0xff]
  %v3664 = vld [vmem:[%s3633 + $0xf0] sm:$0xff]
  %v3665 = vld [vmem:[%s3633 + $0xf8] sm:$0xff]
  %v3666 = vld [vmem:[%s3633 + $0x100] sm:$0xff]
  %v3667 = vld [vmem:[%s3633 + $0x108] sm:$0xff]
  %v3668 = vld [vmem:[%s3633 + $0x110] sm:$0xff]
  %v3669 = vld [vmem:[%s3633 + $0x118] sm:$0xff]
  %v3670 = vld [vmem:[%s3633 + $0x120] sm:$0xff]
  %v3671 = vld [vmem:[%s3633 + $0x128] sm:$0xff]
  %v3672 = vld [vmem:[%s3633 + $0x130] sm:$0xff]
  %v3673 = vld [vmem:[%s3633 + $0x138] sm:$0xff]
  %v3674 = vld [vmem:[%s3633 + $0x140] sm:$0xff]
  %v3675 = vld [vmem:[%s3633 + $0x148] sm:$0xff]
  %v3676 = vld [vmem:[%s3633 + $0x150] sm:$0xff]
  %v3677 = vld [vmem:[%s3633 + $0x158] sm:$0xff]
  %v3678 = vld [vmem:[%s3633 + $0x160] sm:$0xff]
  %v3679 = vld [vmem:[%s3633 + $0x168] sm:$0xff]
  %v3680 = vld [vmem:[%s3633 + $0x170] sm:$0xff]
  %v3681 = vld [vmem:[%s3633 + $0x178] sm:$0xff]
  %s3682 = scalar_lea.vmem %s3, 10
  %v3683 = vld [vmem:[%s3682] sm:$0x1]
  %v3685 = vlaneseq
  %v3686 = vshrl.u32 %v3685, 7
  %v3687 = vsub.s32 0, %v3686
  %v3688 = vrot.slane %v3683, %v3687
  %3690 = vmatprep.subr.mxu0 0.0
  %3691 = vmatpush1.msra.mxu0 %v3634
  %3692 = vmatprep.subr.mxu0 0.0
  %3693 = vmatpush1.msra.mxu0 %v3635
  %3694 = vmatprep.subr.mxu0 0.0
  %3695 = vmatpush1.msra.mxu0 %v3636
  %3696 = vmatprep.subr.mxu0 0.0
  %3697 = vmatpush1.msra.mxu0 %v3637
  %3698 = vmatprep.subr.mxu0 0.0
  %3699 = vmatpush1.msra.mxu0 %v3638
  %3700 = vmatprep.subr.mxu0 0.0
  %3701 = vmatpush1.msra.mxu0 %v3639
  %3702 = vmatprep.subr.mxu0 0.0
  %3703 = vmatpush1.msra.mxu0 %v3640
  %3704 = vmatprep.subr.mxu0 0.0
  %3705 = vmatpush1.msra.mxu0 %v3641
  %3706 = vmatprep.subr.mxu0 0.0
  %3707 = vmatpush1.msra.mxu0 %v3642
  %3708 = vmatprep.subr.mxu0 0.0
  %3709 = vmatpush1.msra.mxu0 %v3643
  %3710 = vmatprep.subr.mxu0 0.0
  %3711 = vmatpush1.msra.mxu0 %v3644
  %3712 = vmatprep.subr.mxu0 0.0
  %3713 = vmatpush1.msra.mxu0 %v3645
  %3714 = vmatprep.subr.mxu0 0.0
  %3715 = vmatpush1.msra.mxu0 %v3646
  %3716 = vmatprep.subr.mxu0 0.0
  %3717 = vmatpush1.msra.mxu0 %v3647
  %3718 = vmatprep.subr.mxu0 0.0
  %3719 = vmatpush1.msra.mxu0 %v3648
  %3720 = vmatprep.subr.mxu0 0.0
  %3721 = vmatpush1.msra.mxu0 %v3649
  %3722 = vmatprep.subr.mxu0 0.0
  %3723 = vmatpush1.msra.mxu0 %v3650
  %3724 = vmatprep.subr.mxu0 0.0
  %3725 = vmatpush1.msra.mxu0 %v3651
  %3726 = vmatprep.subr.mxu0 0.0
  %3727 = vmatpush1.msra.mxu0 %v3652
  %3728 = vmatprep.subr.mxu0 0.0
  %3729 = vmatpush1.msra.mxu0 %v3653
  %3730 = vmatprep.subr.mxu0 0.0
  %3731 = vmatpush1.msra.mxu0 %v3654
  %3732 = vmatprep.subr.mxu0 0.0
  %3733 = vmatpush1.msra.mxu0 %v3655
  %3734 = vmatprep.subr.mxu0 0.0
  %3735 = vmatpush1.msra.mxu0 %v3656
  %3736 = vmatprep.subr.mxu0 0.0
  %3737 = vmatpush1.msra.mxu0 %v3657
  %3738 = vmatprep.subr.mxu0 0.0
  %3739 = vmatpush1.msra.mxu0 %v3658
  %3740 = vmatprep.subr.mxu0 0.0
  %3741 = vmatpush1.msra.mxu0 %v3659
  %3742 = vmatprep.subr.mxu0 0.0
  %3743 = vmatpush1.msra.mxu0 %v3660
  %3744 = vmatprep.subr.mxu0 0.0
  %3745 = vmatpush1.msra.mxu0 %v3661
  %3746 = vmatprep.subr.mxu0 0.0
  %3747 = vmatpush1.msra.mxu0 %v3662
  %3748 = vmatprep.subr.mxu0 0.0
  %3749 = vmatpush1.msra.mxu0 %v3663
  %3750 = vmatprep.subr.mxu0 0.0
  %3751 = vmatpush1.msra.mxu0 %v3664
  %3752 = vmatprep.subr.mxu0 0.0
  %3753 = vmatpush1.msra.mxu0 %v3665
  %3754 = vmatprep.mubr.f32.mxu0 %v3593
  %3755 = vmatmul.mubr.f32.gmra.mrb[0].mxu0 %v3613
  %v3756 = vpop.f32.mrb[0].mxu0
  %v3757 = vadd.f32 %v3688, %v3756
  %v3758 = vpop.f32.mrb[0].mxu0
  %3759 = vmatprep.mubr.f32.mxu0 %v3594
  %3760 = vmatmul.mubr.f32.gmra.mrb[0].mxu0 %v3614
  %v3761 = vpop.f32.mrb[0].mxu0
  %v3762 = vadd.f32 %v3688, %v3761
  %v3763 = vpop.f32.mrb[0].mxu0
  %3764 = vmatprep.mubr.f32.mxu0 %v3595
  %3765 = vmatmul.mubr.f32.gmra.mrb[0].mxu0 %v3615
  %v3766 = vpop.f32.mrb[0].mxu0
  %v3767 = vadd.f32 %v3688, %v3766
  %v3768 = vpop.f32.mrb[0].mxu0
  %3769 = vmatprep.mubr.f32.mxu0 %v3596
  %3770 = vmatmul.mubr.f32.gmra.mrb[0].mxu0 %v3616
  %v3771 = vpop.f32.mrb[0].mxu0
  %v3772 = vadd.f32 %v3688, %v3771
  %v3773 = vpop.f32.mrb[0].mxu0
  %3774 = vdwg.mxu0
  %3775 = vmatprep.subr.mxu0 0.0
  %3776 = vmatpush1.msra.mxu0 %v3666
  %3777 = vmatprep.subr.mxu0 0.0
  %3778 = vmatpush1.msra.mxu0 %v3667
  %3779 = vmatprep.subr.mxu0 0.0
  %3780 = vmatpush1.msra.mxu0 %v3668
  %3781 = vmatprep.subr.mxu0 0.0
  %3782 = vmatpush1.msra.mxu0 %v3669
  %3783 = vmatprep.subr.mxu0 0.0
  %3784 = vmatpush1.msra.mxu0 %v3670
  %3785 = vmatprep.subr.mxu0 0.0
  %3786 = vmatpush1.msra.mxu0 %v3671
  %3787 = vmatprep.subr.mxu0 0.0
  %3788 = vmatpush1.msra.mxu0 %v3672
  %3789 = vmatprep.subr.mxu0 0.0
  %3790 = vmatpush1.msra.mxu0 %v3673
  %3791 = vmatprep.subr.mxu0 0.0
  %3792 = vmatpush1.msra.mxu0 %v3674
  %3793 = vmatprep.subr.mxu0 0.0
  %3794 = vmatpush1.msra.mxu0 %v3675
  %3795 = vmatprep.subr.mxu0 0.0
  %3796 = vmatpush1.msra.mxu0 %v3676
  %3797 = vmatprep.subr.mxu0 0.0
  %3798 = vmatpush1.msra.mxu0 %v3677
  %3799 = vmatprep.subr.mxu0 0.0
  %3800 = vmatpush1.msra.mxu0 %v3678
  %3801 = vmatprep.subr.mxu0 0.0
  %3802 = vmatpush1.msra.mxu0 %v3679
  %3803 = vmatprep.subr.mxu0 0.0
  %3804 = vmatpush1.msra.mxu0 %v3680
  %3805 = vmatprep.subr.mxu0 0.0
  %3806 = vmatpush1.msra.mxu0 %v3681
  %3807 = vmatprep.subr.mxu0 0.0
  %3808 = vmatpush1.msra.mxu0 0.0
  %3809 = vmatprep.subr.mxu0 0.0
  %3810 = vmatpush1.msra.mxu0 0.0
  %3811 = vmatprep.subr.mxu0 0.0
  %3812 = vmatpush1.msra.mxu0 0.0
  %3813 = vmatprep.subr.mxu0 0.0
  %3814 = vmatpush1.msra.mxu0 0.0
  %3815 = vmatprep.subr.mxu0 0.0
  %3816 = vmatpush1.msra.mxu0 0.0
  %3817 = vmatprep.subr.mxu0 0.0
  %3818 = vmatpush1.msra.mxu0 0.0
  %3819 = vmatprep.subr.mxu0 0.0
  %3820 = vmatpush1.msra.mxu0 0.0
  %3821 = vmatprep.subr.mxu0 0.0
  %3822 = vmatpush1.msra.mxu0 0.0
  %3823 = vmatprep.subr.mxu0 0.0
  %3824 = vmatpush1.msra.mxu0 0.0
  %3825 = vmatprep.subr.mxu0 0.0
  %3826 = vmatpush1.msra.mxu0 0.0
  %3827 = vmatprep.subr.mxu0 0.0
  %3828 = vmatpush1.msra.mxu0 0.0
  %3829 = vmatprep.subr.mxu0 0.0
  %3830 = vmatpush1.msra.mxu0 0.0
  %3831 = vmatprep.subr.mxu0 0.0
  %3832 = vmatpush1.msra.mxu0 0.0
  %3833 = vmatprep.subr.mxu0 0.0
  %3834 = vmatpush1.msra.mxu0 0.0
  %3835 = vmatprep.subr.mxu0 0.0
  %3836 = vmatpush1.msra.mxu0 0.0
  %3837 = vmatprep.subr.mxu0 0.0
  %3838 = vmatpush1.msra.mxu0 0.0
  %3839 = vmatprep.mubr.f32.mxu0 0.0
  %3840 = vmatmul.mubr.f32.gmra.mrb[0].mxu0 %v3629
  %v3841 = vpop.f32.mrb[0].mxu0
  %v3842 = vadd.f32 %v3757, %v3841
  %v3843 = vpop.f32.mrb[0].mxu0
  %3844 = vmatprep.mubr.f32.mxu0 0.0
  %3845 = vmatmul.mubr.f32.gmra.mrb[0].mxu0 %v3630
  %v3846 = vpop.f32.mrb[0].mxu0
  %v3847 = vadd.f32 %v3762, %v3846
  %v3848 = vpop.f32.mrb[0].mxu0
  %3849 = vmatprep.mubr.f32.mxu0 0.0
  %3850 = vmatmul.mubr.f32.gmra.mrb[0].mxu0 %v3631
  %v3851 = vpop.f32.mrb[0].mxu0
  %v3852 = vadd.f32 %v3767, %v3851
  %v3853 = vpop.f32.mrb[0].mxu0
  %3854 = vmatprep.mubr.f32.mxu0 0.0
  %3855 = vmatmul.mubr.f32.gmra.mrb[0].mxu0 %v3632
  %v3856 = vpop.f32.mrb[0].mxu0
  %v3857 = vadd.f32 %v3772, %v3856
  %v3858 = vpop.f32.mrb[0].mxu0
  %3859 = vdwg.mxu0
  %v3860 = vadd.f32 %v3842, %v3326
  %v3861 = vadd.f32 %v3847, %v3327
  %v3862 = vadd.f32 %v3852, %v3328
  %v3863 = vadd.f32 %v3857, %v3329
  %v3868 = vrot.slane %v3860, 7
  %v3869 = vrot.slane %v3861, 7
  %v3870 = vsel %vm45, %v3868, %v3869
  %v3871 = vrot.slane %v3862, 7
  %v3872 = vsel %vm45, %v3869, %v3871
  %v3873 = vrot.slane %v3863, 7
  %v3874 = vsel %vm45, %v3871, %v3873
  %v3879 = vsel %vm45, 0.0, %v3868
  %v3880 = vsel %vm62, 0.0, %v3879
  %v3881 = vsel %vm63, 0.0, %v3870
  %v3882 = vsel %vm64, 0.0, %v3872
  %v3883 = vsel %vm65, 0.0, %v3874
  %v3884 = vrot.slane %v3860, 1
  %v3885 = vrot.slane %v3861, 1
  %v3886 = vsel %vm70, %v3884, %v3885
  %v3887 = vrot.slane %v3862, 1
  %v3888 = vsel %vm70, %v3885, %v3887
  %v3889 = vrot.slane %v3863, 1
  %v3890 = vsel %vm70, %v3887, %v3889
  %v3895 = vsel %vm70, %v3889, 0.0
  %v3896 = vsel %vm83, 0.0, %v3886
  %v3897 = vsel %vm84, 0.0, %v3888
  %v3898 = vsel %vm85, 0.0, %v3890
  %v3899 = vsel %vm86, 0.0, %v3895
  %s3900 = scalar_lea.vmem %s2, 4224
  %v3901 = vld [vmem:[%s3900] sm:$0xff]
  %v3902 = vld [vmem:[%s3900 + $0x8] sm:$0xff]
  %v3903 = vld [vmem:[%s3900 + $0x10] sm:$0xff]
  %v3904 = vld [vmem:[%s3900 + $0x18] sm:$0xff]
  %v3905 = vld [vmem:[%s3900 + $0x20] sm:$0xff]
  %v3906 = vld [vmem:[%s3900 + $0x28] sm:$0xff]
  %v3907 = vld [vmem:[%s3900 + $0x30] sm:$0xff]
  %v3908 = vld [vmem:[%s3900 + $0x38] sm:$0xff]
  %v3909 = vld [vmem:[%s3900 + $0x40] sm:$0xff]
  %v3910 = vld [vmem:[%s3900 + $0x48] sm:$0xff]
  %v3911 = vld [vmem:[%s3900 + $0x50] sm:$0xff]
  %v3912 = vld [vmem:[%s3900 + $0x58] sm:$0xff]
  %v3913 = vld [vmem:[%s3900 + $0x60] sm:$0xff]
  %v3914 = vld [vmem:[%s3900 + $0x68] sm:$0xff]
  %v3915 = vld [vmem:[%s3900 + $0x70] sm:$0xff]
  %v3916 = vld [vmem:[%s3900 + $0x78] sm:$0xff]
  %v3917 = vld [vmem:[%s3900 + $0x80] sm:$0xff]
  %v3918 = vld [vmem:[%s3900 + $0x88] sm:$0xff]
  %v3919 = vld [vmem:[%s3900 + $0x90] sm:$0xff]
  %v3920 = vld [vmem:[%s3900 + $0x98] sm:$0xff]
  %v3921 = vld [vmem:[%s3900 + $0xa0] sm:$0xff]
  %v3922 = vld [vmem:[%s3900 + $0xa8] sm:$0xff]
  %v3923 = vld [vmem:[%s3900 + $0xb0] sm:$0xff]
  %v3924 = vld [vmem:[%s3900 + $0xb8] sm:$0xff]
  %v3925 = vld [vmem:[%s3900 + $0xc0] sm:$0xff]
  %v3926 = vld [vmem:[%s3900 + $0xc8] sm:$0xff]
  %v3927 = vld [vmem:[%s3900 + $0xd0] sm:$0xff]
  %v3928 = vld [vmem:[%s3900 + $0xd8] sm:$0xff]
  %v3929 = vld [vmem:[%s3900 + $0xe0] sm:$0xff]
  %v3930 = vld [vmem:[%s3900 + $0xe8] sm:$0xff]
  %v3931 = vld [vmem:[%s3900 + $0xf0] sm:$0xff]
  %v3932 = vld [vmem:[%s3900 + $0xf8] sm:$0xff]
  %v3933 = vld [vmem:[%s3900 + $0x100] sm:$0xff]
  %v3934 = vld [vmem:[%s3900 + $0x108] sm:$0xff]
  %v3935 = vld [vmem:[%s3900 + $0x110] sm:$0xff]
  %v3936 = vld [vmem:[%s3900 + $0x118] sm:$0xff]
  %v3937 = vld [vmem:[%s3900 + $0x120] sm:$0xff]
  %v3938 = vld [vmem:[%s3900 + $0x128] sm:$0xff]
  %v3939 = vld [vmem:[%s3900 + $0x130] sm:$0xff]
  %v3940 = vld [vmem:[%s3900 + $0x138] sm:$0xff]
  %v3941 = vld [vmem:[%s3900 + $0x140] sm:$0xff]
  %v3942 = vld [vmem:[%s3900 + $0x148] sm:$0xff]
  %v3943 = vld [vmem:[%s3900 + $0x150] sm:$0xff]
  %v3944 = vld [vmem:[%s3900 + $0x158] sm:$0xff]
  %v3945 = vld [vmem:[%s3900 + $0x160] sm:$0xff]
  %v3946 = vld [vmem:[%s3900 + $0x168] sm:$0xff]
  %v3947 = vld [vmem:[%s3900 + $0x170] sm:$0xff]
  %v3948 = vld [vmem:[%s3900 + $0x178] sm:$0xff]
  %s3949 = scalar_lea.vmem %s3, 11
  %v3950 = vld [vmem:[%s3949] sm:$0x1]
  %v3952 = vlaneseq
  %v3953 = vshrl.u32 %v3952, 7
  %v3954 = vsub.s32 0, %v3953
  %v3955 = vrot.slane %v3950, %v3954
  %3957 = vmatprep.subr.mxu0 0.0
  %3958 = vmatpush1.msra.mxu0 %v3901
  %3959 = vmatprep.subr.mxu0 0.0
  %3960 = vmatpush1.msra.mxu0 %v3902
  %3961 = vmatprep.subr.mxu0 0.0
  %3962 = vmatpush1.msra.mxu0 %v3903
  %3963 = vmatprep.subr.mxu0 0.0
  %3964 = vmatpush1.msra.mxu0 %v3904
  %3965 = vmatprep.subr.mxu0 0.0
  %3966 = vmatpush1.msra.mxu0 %v3905
  %3967 = vmatprep.subr.mxu0 0.0
  %3968 = vmatpush1.msra.mxu0 %v3906
  %3969 = vmatprep.subr.mxu0 0.0
  %3970 = vmatpush1.msra.mxu0 %v3907
  %3971 = vmatprep.subr.mxu0 0.0
  %3972 = vmatpush1.msra.mxu0 %v3908
  %3973 = vmatprep.subr.mxu0 0.0
  %3974 = vmatpush1.msra.mxu0 %v3909
  %3975 = vmatprep.subr.mxu0 0.0
  %3976 = vmatpush1.msra.mxu0 %v3910
  %3977 = vmatprep.subr.mxu0 0.0
  %3978 = vmatpush1.msra.mxu0 %v3911
  %3979 = vmatprep.subr.mxu0 0.0
  %3980 = vmatpush1.msra.mxu0 %v3912
  %3981 = vmatprep.subr.mxu0 0.0
  %3982 = vmatpush1.msra.mxu0 %v3913
  %3983 = vmatprep.subr.mxu0 0.0
  %3984 = vmatpush1.msra.mxu0 %v3914
  %3985 = vmatprep.subr.mxu0 0.0
  %3986 = vmatpush1.msra.mxu0 %v3915
  %3987 = vmatprep.subr.mxu0 0.0
  %3988 = vmatpush1.msra.mxu0 %v3916
  %3989 = vmatprep.subr.mxu0 0.0
  %3990 = vmatpush1.msra.mxu0 %v3917
  %3991 = vmatprep.subr.mxu0 0.0
  %3992 = vmatpush1.msra.mxu0 %v3918
  %3993 = vmatprep.subr.mxu0 0.0
  %3994 = vmatpush1.msra.mxu0 %v3919
  %3995 = vmatprep.subr.mxu0 0.0
  %3996 = vmatpush1.msra.mxu0 %v3920
  %3997 = vmatprep.subr.mxu0 0.0
  %3998 = vmatpush1.msra.mxu0 %v3921
  %3999 = vmatprep.subr.mxu0 0.0
  %4000 = vmatpush1.msra.mxu0 %v3922
  %4001 = vmatprep.subr.mxu0 0.0
  %4002 = vmatpush1.msra.mxu0 %v3923
  %4003 = vmatprep.subr.mxu0 0.0
  %4004 = vmatpush1.msra.mxu0 %v3924
  %4005 = vmatprep.subr.mxu0 0.0
  %4006 = vmatpush1.msra.mxu0 %v3925
  %4007 = vmatprep.subr.mxu0 0.0
  %4008 = vmatpush1.msra.mxu0 %v3926
  %4009 = vmatprep.subr.mxu0 0.0
  %4010 = vmatpush1.msra.mxu0 %v3927
  %4011 = vmatprep.subr.mxu0 0.0
  %4012 = vmatpush1.msra.mxu0 %v3928
  %4013 = vmatprep.subr.mxu0 0.0
  %4014 = vmatpush1.msra.mxu0 %v3929
  %4015 = vmatprep.subr.mxu0 0.0
  %4016 = vmatpush1.msra.mxu0 %v3930
  %4017 = vmatprep.subr.mxu0 0.0
  %4018 = vmatpush1.msra.mxu0 %v3931
  %4019 = vmatprep.subr.mxu0 0.0
  %4020 = vmatpush1.msra.mxu0 %v3932
  %4021 = vmatprep.mubr.f32.mxu0 %v3860
  %4022 = vmatmul.mubr.f32.gmra.mrb[0].mxu0 %v3880
  %v4023 = vpop.f32.mrb[0].mxu0
  %v4024 = vadd.f32 %v3955, %v4023
  %v4025 = vpop.f32.mrb[0].mxu0
  %4026 = vmatprep.mubr.f32.mxu0 %v3861
  %4027 = vmatmul.mubr.f32.gmra.mrb[0].mxu0 %v3881
  %v4028 = vpop.f32.mrb[0].mxu0
  %v4029 = vadd.f32 %v3955, %v4028
  %v4030 = vpop.f32.mrb[0].mxu0
  %4031 = vmatprep.mubr.f32.mxu0 %v3862
  %4032 = vmatmul.mubr.f32.gmra.mrb[0].mxu0 %v3882
  %v4033 = vpop.f32.mrb[0].mxu0
  %v4034 = vadd.f32 %v3955, %v4033
  %v4035 = vpop.f32.mrb[0].mxu0
  %4036 = vmatprep.mubr.f32.mxu0 %v3863
  %4037 = vmatmul.mubr.f32.gmra.mrb[0].mxu0 %v3883
  %v4038 = vpop.f32.mrb[0].mxu0
  %v4039 = vadd.f32 %v3955, %v4038
  %v4040 = vpop.f32.mrb[0].mxu0
  %4041 = vdwg.mxu0
  %4042 = vmatprep.subr.mxu0 0.0
  %4043 = vmatpush1.msra.mxu0 %v3933
  %4044 = vmatprep.subr.mxu0 0.0
  %4045 = vmatpush1.msra.mxu0 %v3934
  %4046 = vmatprep.subr.mxu0 0.0
  %4047 = vmatpush1.msra.mxu0 %v3935
  %4048 = vmatprep.subr.mxu0 0.0
  %4049 = vmatpush1.msra.mxu0 %v3936
  %4050 = vmatprep.subr.mxu0 0.0
  %4051 = vmatpush1.msra.mxu0 %v3937
  %4052 = vmatprep.subr.mxu0 0.0
  %4053 = vmatpush1.msra.mxu0 %v3938
  %4054 = vmatprep.subr.mxu0 0.0
  %4055 = vmatpush1.msra.mxu0 %v3939
  %4056 = vmatprep.subr.mxu0 0.0
  %4057 = vmatpush1.msra.mxu0 %v3940
  %4058 = vmatprep.subr.mxu0 0.0
  %4059 = vmatpush1.msra.mxu0 %v3941
  %4060 = vmatprep.subr.mxu0 0.0
  %4061 = vmatpush1.msra.mxu0 %v3942
  %4062 = vmatprep.subr.mxu0 0.0
  %4063 = vmatpush1.msra.mxu0 %v3943
  %4064 = vmatprep.subr.mxu0 0.0
  %4065 = vmatpush1.msra.mxu0 %v3944
  %4066 = vmatprep.subr.mxu0 0.0
  %4067 = vmatpush1.msra.mxu0 %v3945
  %4068 = vmatprep.subr.mxu0 0.0
  %4069 = vmatpush1.msra.mxu0 %v3946
  %4070 = vmatprep.subr.mxu0 0.0
  %4071 = vmatpush1.msra.mxu0 %v3947
  %4072 = vmatprep.subr.mxu0 0.0
  %4073 = vmatpush1.msra.mxu0 %v3948
  %4074 = vmatprep.subr.mxu0 0.0
  %4075 = vmatpush1.msra.mxu0 0.0
  %4076 = vmatprep.subr.mxu0 0.0
  %4077 = vmatpush1.msra.mxu0 0.0
  %4078 = vmatprep.subr.mxu0 0.0
  %4079 = vmatpush1.msra.mxu0 0.0
  %4080 = vmatprep.subr.mxu0 0.0
  %4081 = vmatpush1.msra.mxu0 0.0
  %4082 = vmatprep.subr.mxu0 0.0
  %4083 = vmatpush1.msra.mxu0 0.0
  %4084 = vmatprep.subr.mxu0 0.0
  %4085 = vmatpush1.msra.mxu0 0.0
  %4086 = vmatprep.subr.mxu0 0.0
  %4087 = vmatpush1.msra.mxu0 0.0
  %4088 = vmatprep.subr.mxu0 0.0
  %4089 = vmatpush1.msra.mxu0 0.0
  %4090 = vmatprep.subr.mxu0 0.0
  %4091 = vmatpush1.msra.mxu0 0.0
  %4092 = vmatprep.subr.mxu0 0.0
  %4093 = vmatpush1.msra.mxu0 0.0
  %4094 = vmatprep.subr.mxu0 0.0
  %4095 = vmatpush1.msra.mxu0 0.0
  %4096 = vmatprep.subr.mxu0 0.0
  %4097 = vmatpush1.msra.mxu0 0.0
  %4098 = vmatprep.subr.mxu0 0.0
  %4099 = vmatpush1.msra.mxu0 0.0
  %4100 = vmatprep.subr.mxu0 0.0
  %4101 = vmatpush1.msra.mxu0 0.0
  %4102 = vmatprep.subr.mxu0 0.0
  %4103 = vmatpush1.msra.mxu0 0.0
  %4104 = vmatprep.subr.mxu0 0.0
  %4105 = vmatpush1.msra.mxu0 0.0
  %4106 = vmatprep.mubr.f32.mxu0 0.0
  %4107 = vmatmul.mubr.f32.gmra.mrb[0].mxu0 %v3896
  %v4108 = vpop.f32.mrb[0].mxu0
  %v4109 = vadd.f32 %v4024, %v4108
  %v4110 = vpop.f32.mrb[0].mxu0
  %4111 = vmatprep.mubr.f32.mxu0 0.0
  %4112 = vmatmul.mubr.f32.gmra.mrb[0].mxu0 %v3897
  %v4113 = vpop.f32.mrb[0].mxu0
  %v4114 = vadd.f32 %v4029, %v4113
  %v4115 = vpop.f32.mrb[0].mxu0
  %4116 = vmatprep.mubr.f32.mxu0 0.0
  %4117 = vmatmul.mubr.f32.gmra.mrb[0].mxu0 %v3898
  %v4118 = vpop.f32.mrb[0].mxu0
  %v4119 = vadd.f32 %v4034, %v4118
  %v4120 = vpop.f32.mrb[0].mxu0
  %4121 = vmatprep.mubr.f32.mxu0 0.0
  %4122 = vmatmul.mubr.f32.gmra.mrb[0].mxu0 %v3899
  %v4123 = vpop.f32.mrb[0].mxu0
  %v4124 = vadd.f32 %v4039, %v4123
  %v4125 = vpop.f32.mrb[0].mxu0
  %4126 = vdwg.mxu0
  %v4127 = vmul.f32 %v32, %v4109
  %v4128 = vmul.f32 %v33, %v4114
  %v4129 = vmul.f32 %v34, %v4119
  %v4130 = vmul.f32 %v35, %v4124
  %v4131 = vsub.f32 1.0, %v32
  %v4132 = vsub.f32 1.0, %v33
  %v4133 = vsub.f32 1.0, %v34
  %v4134 = vsub.f32 1.0, %v35
  %v4135 = vmul.f32 %v4131, %v28
  %v4136 = vmul.f32 %v4132, %v29
  %v4137 = vmul.f32 %v4133, %v30
  %v4138 = vmul.f32 %v4134, %v31
  %v4139 = vadd.f32 %v4127, %v4135
  %v4140 = vadd.f32 %v4128, %v4136
  %v4141 = vadd.f32 %v4129, %v4137
  %v4142 = vadd.f32 %v4130, %v4138
  %4143 = vst [vmem:[%s7] sm:$0xff] %v4109
  %4144 = vst [vmem:[%s7 + $0x8] sm:$0xff] %v4114
  %4145 = vst [vmem:[%s7 + $0x10] sm:$0xff] %v4119
  %4146 = vst [vmem:[%s7 + $0x18] sm:$0xff] %v4124
  %4147 = vst [vmem:[%s8] sm:$0xff] %v4139
  %4148 = vst [vmem:[%s8 + $0x8] sm:$0xff] %v4140
  %4149 = vst [vmem:[%s8 + $0x10] sm:$0xff] %v4141
  %4150 = vst [vmem:[%s8 + $0x18] sm:$0xff] %v4142
  // Predicated region
  $region30: #{forward_pallas.1} parent=0 // pred_check
    _
  $region31: #{forward_pallas.1} parent=0 // pred_check_branch
    %4152 = sbr.rel (0) target = $region33
  $region32: #{forward_pallas.1} parent=0 // pred_region
    _
  $region33: #{forward_pallas.1} parent=0 // pred_fallthru
    _
  // Predicated region
  $region34: #{forward_pallas.1} parent=0 // pred_check
    _
  $region35: #{forward_pallas.1} parent=0 // pred_check_branch
    %4154 = sbr.rel (0) target = $region37
  $region36: #{forward_pallas.1} parent=0 // pred_region
    _
  $region37: #{forward_pallas.1} parent=0 // pred_fallthru
    _
  // Predicated region
  $region38: #{forward_pallas.1} parent=0 // pred_check
    _
  $region39: #{forward_pallas.1} parent=0 // pred_check_branch
    %4156 = sbr.rel (0) target = $region41
  $region40: #{forward_pallas.1} parent=0 // pred_region
    _
  $region41: #{forward_pallas.1} parent=0 // pred_fallthru
    _
  // Predicated region
  $region42: #{forward_pallas.1} parent=0 // pred_check
    _
  $region43: #{forward_pallas.1} parent=0 // pred_check_branch
    %4158 = sbr.rel (0) target = $region45
  $region44: #{forward_pallas.1} parent=0 // pred_region
    _
  $region45: #{forward_pallas.1} parent=0 // pred_fallthru
    _

</llo_original>
